<compile_context>
chip_gen: v6e
topology: v6e:2x2x1
jax: 0.10.0
libtpu: 0.0.40
codegen_flags: <defaults>
</compile_context>

<pallas_src>
import functools

import jax
import jax.numpy as jnp
from jax.experimental import pallas as pl
from jax.experimental.pallas import tpu as pltpu


# ----------------------------------------------------------------------------- kernels

def _matmul_bn_relu_kernel(w_ref, x_ref, g_ref, beta_ref, o_ref, *, groups, eps):
    """Fused  relu(BN(W @ X))  in a single grid step.

    W rows are ordered (group, channel): row = g*C + c, where a "group" is an
    output phase (layers 2-4) or an output pixel (layer 1).  BatchNorm batch
    statistics per channel therefore reduce over all `groups` row-blocks and
    all M lanes: one lane-sum (XLU) + `groups` static sublane-block adds.
    The conv bias is intentionally omitted (cancels exactly with the BN mean).
    bf16 matmul inputs, f32 accumulation / stats, bf16 output store."""
    y = jnp.dot(w_ref[...], x_ref[...], preferred_element_type=jnp.float32)   # (G*C, M) f32
    gc, m = y.shape
    c = gc // groups

    rs = jnp.sum(y, axis=1, keepdims=True)          # (G*C, 1)  per-row sums
    rs2 = jnp.sum(y * y, axis=1, keepdims=True)     # (G*C, 1)  per-row sums of squares
    s = rs[0:c]
    s2 = rs2[0:c]
    for g in range(1, groups):                      # static unroll, tiny sublane adds
        s = s + rs[g * c:(g + 1) * c]
        s2 = s2 + rs2[g * c:(g + 1) * c]

    inv_n = 1.0 / float(groups * m)
    mean = s * inv_n
    var = s2 * inv_n - mean * mean                  # biased batch variance (training mode)
    scale = g_ref[...] * jax.lax.rsqrt(var + eps)   # (C, 1)
    shift = beta_ref[...] - mean * scale            # (C, 1)
    scale_full = jnp.concatenate([scale] * groups, axis=0)   # (G*C, 1)
    shift_full = jnp.concatenate([shift] * groups, axis=0)

    o_ref[...] = jnp.maximum(y * scale_full + shift_full, 0.0).astype(o_ref.dtype)


def _matmul_bias_tanh_kernel(w_ref, x_ref, b_ref, o_ref):
    """o[:, m-tile] = tanh(W @ X[:, m-tile] + bias)   (bf16 in, f32 out)."""
    y = jnp.dot(w_ref[...], x_ref[...], preferred_element_type=jnp.float32)
    o_ref[...] = jnp.tanh(y + b_ref[...])


# ----------------------------------------------------------------------- pallas wrappers

def _pick_tile(m, target):
    """Largest lane-aligned (multiple-of-128) tile <= target that divides m."""
    if m <= target:
        return m
    tm = (target // 128) * 128
    while tm >= 128:
        if m % tm == 0:
            return tm
        tm -= 128
    return m   # m not a multiple of 128: single block (never hit for this network)


def fused_matmul_bn_relu(w_mat, x_mat, gamma, beta, groups, eps=1e-5):
    """w_mat (G*C, K) bf16, x_mat (K, M) bf16 -> relu(BN(W @ X)) as (G*C, M) bf16."""
    gc, _ = w_mat.shape
    _, m = x_mat.shape
    c = gc // groups
    return pl.pallas_call(
        functools.partial(_matmul_bn_relu_kernel, groups=groups, eps=eps),
        out_shape=jax.ShapeDtypeStruct((gc, m), jnp.bfloat16),
        # No grid: whole (small) operands live in VMEM for the single step.
    )(w_mat, x_mat,
      gamma.reshape(c, 1).astype(jnp.float32),
      beta.reshape(c, 1).astype(jnp.float32))


def fused_matmul_bias_tanh(w_mat, x_mat, bias4, tile_m=8192):
    """w_mat (4*C, K) bf16, x_mat (K, M) bf16 -> tanh(W @ X + bias) as (4*C, M) f32."""
    gc, k = w_mat.shape
    _, m = x_mat.shape
    tm = _pick_tile(m, tile_m)
    return pl.pallas_call(
        _matmul_bias_tanh_kernel,
        out_shape=jax.ShapeDtypeStruct((gc, m), jnp.float32),
        grid=(m // tm,),
        in_specs=[
            pl.BlockSpec((gc, k), lambda i: (0, 0)),   # whole weight, constant map
            pl.BlockSpec((k, tm), lambda i: (0, i)),   # lane-dense M tile
            pl.BlockSpec((gc, 1), lambda i: (0, 0)),   # whole bias, constant map
        ],
        out_specs=pl.BlockSpec((gc, tm), lambda i: (0, i)),
        compiler_params=pltpu.CompilerParams(dimension_semantics=("parallel",)),
    )(w_mat, x_mat, bias4)


# ---------------------------------------------------------------- conv-transpose lowering

def _tap_patches(x):
    """x: (C, H, W, B) -> (9*C, H*W*B) bf16: the 9 shifted views (oy, ox) in {0,1,2}^2
    of the once-padded activation, stacked along rows ((oy*3+ox)*C + ci)."""
    C, H, W, B = x.shape
    xp = jnp.pad(x.astype(jnp.bfloat16), ((0, 0), (1, 1), (1, 1), (0, 0)))
    taps = [xp[:, oy:oy + H, ox:ox + W, :] for oy in range(3) for ox in range(3)]
    return jnp.stack(taps, axis=0).reshape(9 * C, H * W * B)


def _merged_weight(w):
    """PyTorch ConvTranspose2d weight (C_in, C_out, 4, 4) -> merged sub-pixel-conv
    matrix (4*C_out, 9*C_in) bf16.

    Output phase (py, px) (output pixel (2y+py, 2x+px)) reads the padded input at
    tap (oy, ox) = (py+dy, px+dx), dy,dx in {0,1}, paired with the original 4x4
    weight at (ky, kx) = (3-py-2*dy, 3-px-2*dx); all other taps are zero."""
    c_in, c_out = w.shape[0], w.shape[1]
    wm = jnp.zeros((4, c_out, 3, 3, c_in), jnp.float32)
    for py in range(2):
        for px in range(2):
            p = py * 2 + px
            for dy in range(2):
                for dx in range(2):
                    wk = w[:, :, 3 - py - 2 * dy, 3 - px - 2 * dx].T     # (C_out, C_in)
                    wm = wm.at[p, :, py + dy, px + dx, :].set(wk)
    return wm.reshape(4 * c_out, 9 * c_in).astype(jnp.bfloat16)


def _interleave_phases(y, C, H, W, B):
    """y (4*C, H*W*B), rows = phase*C + c  ->  (C, 2H, 2W, B) (tiny data movement)."""
    y = y.reshape(2, 2, C, H, W, B)          # (py, px, c, y, x, b)
    y = y.transpose(2, 3, 0, 4, 1, 5)        # (c, y, py, x, px, b)
    return y.reshape(C, 2 * H, 2 * W, B)


def convt_s2_bn_relu(x, w, gamma, beta, eps=1e-5):
    """ConvTranspose2d(k=4, s=2, p=1) + BatchNorm2d(batch stats) + ReLU.
    x: (C_in, H, W, B) -> (C_out, 2H, 2W, B) bf16.  (Conv bias cancels with BN.)"""
    _, H, W, B = x.shape
    c_out = w.shape[1]
    y = fused_matmul_bn_relu(_merged_weight(w), _tap_patches(x), gamma, beta,
                             groups=4, eps=eps)
    return _interleave_phases(y, c_out, H, W, B)


def convt_s2_tanh(x, w, b):
    """Final ConvTranspose2d(k=4, s=2, p=1) + bias + tanh -> (C_out, 2H, 2W, B) f32."""
    _, H, W, B = x.shape
    c_out = w.shape[1]
    bias4 = jnp.tile(b.reshape(c_out, 1).astype(jnp.float32), (4, 1))   # rows = phase*C + c
    y = fused_matmul_bias_tanh(_merged_weight(w), _tap_patches(x), bias4)
    return _interleave_phases(y, c_out, H, W, B)


def convt_first_bn_relu(z, w, gamma, beta, eps=1e-5):
    """ConvTranspose2d(k=4, s=1, p=0) on a 1x1 input + BN + ReLU as ONE matmul:
    out[c, ky, kx, b] = sum_ci W[ci, c, ky, kx] * z[b, ci]; the 16 output pixels are
    stacked along rows ((ky*4+kx)*C_out + c).  Bias cancels with BN."""
    B = z.shape[0]
    z_dim, c_out, k, _ = w.shape
    zT = z.reshape(B, z_dim).T.astype(jnp.bfloat16)                          # (z_dim, B)
    w1 = w.transpose(2, 3, 1, 0).reshape(k * k * c_out, z_dim).astype(jnp.bfloat16)
    y = fused_matmul_bn_relu(w1, zT, gamma, beta, groups=k * k, eps=eps)     # (16*C, B)
    return y.reshape(k, k, c_out, B).transpose(2, 0, 1, 3)                   # (C, 4, 4, B)


# ------------------------------------------------------------------------- Generator2

def init_generator2_params(z_dim, channels, key):
    # (c_in, c_out, kernel, stride, padding) mirroring the nn.Sequential in __init__
    cfg = [
        (z_dim, 12, 4, 1, 0),
        (12, 20, 4, 2, 1),
        (20, 25, 4, 2, 1),
        (25, 32, 4, 2, 1),
        (32, channels, 4, 2, 1),
    ]
    params = []
    for (cin, cout, k, s, p) in cfg:
        key, kw, kb = jax.random.split(key, 3)
        w = jax.random.normal(kw, (cin, cout, k, k), jnp.float32) * 0.05
        b = jax.random.normal(kb, (cout,), jnp.float32) * 0.05
        params.append({"w": w, "b": b,
                       "gamma": jnp.ones((cout,), jnp.float32),     # BatchNorm2d defaults
                       "beta": jnp.zeros((cout,), jnp.float32),
                       "stride": s, "padding": p})
    return params


def generator2_forward(z, params):
    """z: (B, z_dim, 1, 1) NCHW -> (B, channels, 64, 64) NCHW."""
    p1, p2, p3, p4, p5 = params
    # Conv biases of layers 1-4 are deliberately unused: BatchNorm with batch
    # statistics subtracts them exactly.
    x = convt_first_bn_relu(z, p1["w"], p1["gamma"], p1["beta"])   # (12, 4, 4, B)
    x = convt_s2_bn_relu(x, p2["w"], p2["gamma"], p2["beta"])      # (20, 8, 8, B)
    x = convt_s2_bn_relu(x, p3["w"], p3["gamma"], p3["beta"])      # (25,16,16, B)
    x = convt_s2_bn_relu(x, p4["w"], p4["gamma"], p4["beta"])      # (32,32,32, B)
    x = convt_s2_tanh(x, p5["w"], p5["b"])                         # ( 3,64,64, B)
    return x.transpose(3, 0, 1, 2)   # channel-major -> NCHW, only at the very end


# ------------------------------------------------------------------ pure-JAX reference

def _ref_conv_transpose(x, w, b, stride, padding):
    """Reference ConvTranspose2d via zero-dilation + flipped-kernel correlation (NCHW)."""
    k = w.shape[-1]
    if stride > 1:
        B, C, H, W = x.shape
        xd = jnp.zeros((B, C, (H - 1) * stride + 1, (W - 1) * stride + 1), x.dtype)
        xd = xd.at[:, :, ::stride, ::stride].set(x)
    else:
        xd = x
    pad = k - 1 - padding
    xp = jnp.pad(xd, ((0, 0), (0, 0), (pad, pad), (pad, pad)))
    wf = w[:, :, ::-1, ::-1].transpose(1, 0, 2, 3)                    # OIHW, flipped
    y = jax.lax.conv_general_dilated(xp, wf, (1, 1), "VALID",
                                     dimension_numbers=("NCHW", "OIHW", "NCHW"))
    return y + b.reshape(1, -1, 1, 1)


def _ref_forward(z, params, eps=1e-5):
    x = z
    for layer in params[:-1]:
        y = _ref_conv_transpose(x, layer["w"], layer["b"], layer["stride"], layer["padding"])
        mean = y.mean(axis=(0, 2, 3), keepdims=True)
        var = jnp.mean(jnp.square(y - mean), axis=(0, 2, 3), keepdims=True)
        yn = (y - mean) * jax.lax.rsqrt(var + eps)
        yn = yn * layer["gamma"].reshape(1, -1, 1, 1) + layer["beta"].reshape(1, -1, 1, 1)
        x = jnp.maximum(yn, 0.0)
    last = params[-1]
    return jnp.tanh(_ref_conv_transpose(x, last["w"], last["b"],
                                        last["stride"], last["padding"]))


# ----------------------------------------------------------------------------- main

if __name__ == "__main__":
    batch, z_dim, channels = 2, 8, 3

    key = jax.random.PRNGKey(0)
    kz, kp = jax.random.split(key)
    z = jax.random.normal(kz, (batch, z_dim, 1, 1), jnp.float32)   # NCHW latent
    params = init_generator2_params(z_dim, channels, kp)

    fwd = jax.jit(lambda zz: generator2_forward(zz, params))
    out = jax.block_until_ready(fwd(z))

    assert out.shape == (batch, channels, 64, 64), out.shape
    assert bool(jnp.all(jnp.isfinite(out)))
    assert bool(jnp.all(jnp.abs(out) <= 1.0))   # tanh range

    # Cross-check against an independent pure-JAX lowering (f32); the kernel path uses
    # bf16 matmul inputs / inter-layer activations, so allow a generous tolerance
    # while still catching real bugs.
    ref = jax.block_until_ready(jax.jit(lambda zz: _ref_forward(zz, params))(z))
    max_err = float(jnp.max(jnp.abs(out - ref)))
    assert max_err < 0.1, f"mismatch vs reference: max_err={max_err}"

    print("KERNEL_OK")
</pallas_src>

<mosaic_0001>
module attributes {stable_mosaic.version = 11 : i64} {
  func.func @_matmul_bn_relu_kernel(%arg0: memref<192x8xbf16, #tpu.memory_space<vmem>>, %arg1: memref<8x2xbf16, #tpu.memory_space<vmem>>, %arg2: memref<12x1xf32, #tpu.memory_space<vmem>>, %arg3: memref<12x1xf32, #tpu.memory_space<vmem>>, %arg4: memref<192x2xbf16, #tpu.memory_space<vmem>>) attributes {dimension_semantics = [], scalar_prefetch = 0 : i64, scratch_operands = 0 : i64, tpu.core_type = #tpu.core_type<tc>} {
    %c0 = arith.constant 0 : index
    %c0_0 = arith.constant 0 : index
    %0 = vector.load %arg0[%c0, %c0_0] : memref<192x8xbf16, #tpu.memory_space<vmem>>, vector<192x8xbf16>
    %c0_1 = arith.constant 0 : index
    %c0_2 = arith.constant 0 : index
    %1 = vector.load %arg1[%c0_1, %c0_2] : memref<8x2xbf16, #tpu.memory_space<vmem>>, vector<8x2xbf16>
    %cst = arith.constant dense<0.000000e+00> : vector<192x2xf32>
    %2 = tpu.matmul %0, %1, %cst {dimension_numbers = #tpu.dot_dimension_numbers<[1], [0], [0], [1], [0, 0, 1, 1], [], []>} : vector<192x8xbf16>, vector<8x2xbf16>, vector<192x2xf32> -> vector<192x2xf32>
    %cst_3 = arith.constant dense<0.000000e+00> : vector<192xf32>
    %3 = vector.multi_reduction <add>, %2, %cst_3 [1] : vector<192x2xf32> to vector<192xf32>
    %4 = vector.shape_cast %3 : vector<192xf32> to vector<192x1xf32>
    %5 = arith.mulf %2, %2 : vector<192x2xf32>
    %cst_4 = arith.constant dense<0.000000e+00> : vector<192xf32>
    %6 = vector.multi_reduction <add>, %5, %cst_4 [1] : vector<192x2xf32> to vector<192xf32>
    %7 = vector.shape_cast %6 : vector<192xf32> to vector<192x1xf32>
    %8 = vector.extract_strided_slice %4 {offsets = [0, 0], sizes = [12, 1], strides = [1, 1]} : vector<192x1xf32> to vector<12x1xf32>
    %9 = vector.extract_strided_slice %7 {offsets = [0, 0], sizes = [12, 1], strides = [1, 1]} : vector<192x1xf32> to vector<12x1xf32>
    %10 = vector.extract_strided_slice %4 {offsets = [12, 0], sizes = [12, 1], strides = [1, 1]} : vector<192x1xf32> to vector<12x1xf32>
    %11 = arith.addf %8, %10 : vector<12x1xf32>
    %12 = vector.extract_strided_slice %7 {offsets = [12, 0], sizes = [12, 1], strides = [1, 1]} : vector<192x1xf32> to vector<12x1xf32>
    %13 = arith.addf %9, %12 : vector<12x1xf32>
    %14 = vector.extract_strided_slice %4 {offsets = [24, 0], sizes = [12, 1], strides = [1, 1]} : vector<192x1xf32> to vector<12x1xf32>
    %15 = arith.addf %11, %14 : vector<12x1xf32>
    %16 = vector.extract_strided_slice %7 {offsets = [24, 0], sizes = [12, 1], strides = [1, 1]} : vector<192x1xf32> to vector<12x1xf32>
    %17 = arith.addf %13, %16 : vector<12x1xf32>
    %18 = vector.extract_strided_slice %4 {offsets = [36, 0], sizes = [12, 1], strides = [1, 1]} : vector<192x1xf32> to vector<12x1xf32>
    %19 = arith.addf %15, %18 : vector<12x1xf32>
    %20 = vector.extract_strided_slice %7 {offsets = [36, 0], sizes = [12, 1], strides = [1, 1]} : vector<192x1xf32> to vector<12x1xf32>
    %21 = arith.addf %17, %20 : vector<12x1xf32>
    %22 = vector.extract_strided_slice %4 {offsets = [48, 0], sizes = [12, 1], strides = [1, 1]} : vector<192x1xf32> to vector<12x1xf32>
    %23 = arith.addf %19, %22 : vector<12x1xf32>
    %24 = vector.extract_strided_slice %7 {offsets = [48, 0], sizes = [12, 1], strides = [1, 1]} : vector<192x1xf32> to vector<12x1xf32>
    %25 = arith.addf %21, %24 : vector<12x1xf32>
    %26 = vector.extract_strided_slice %4 {offsets = [60, 0], sizes = [12, 1], strides = [1, 1]} : vector<192x1xf32> to vector<12x1xf32>
    %27 = arith.addf %23, %26 : vector<12x1xf32>
    %28 = vector.extract_strided_slice %7 {offsets = [60, 0], sizes = [12, 1], strides = [1, 1]} : vector<192x1xf32> to vector<12x1xf32>
    %29 = arith.addf %25, %28 : vector<12x1xf32>
    %30 = vector.extract_strided_slice %4 {offsets = [72, 0], sizes = [12, 1], strides = [1, 1]} : vector<192x1xf32> to vector<12x1xf32>
    %31 = arith.addf %27, %30 : vector<12x1xf32>
    %32 = vector.extract_strided_slice %7 {offsets = [72, 0], sizes = [12, 1], strides = [1, 1]} : vector<192x1xf32> to vector<12x1xf32>
    %33 = arith.addf %29, %32 : vector<12x1xf32>
    %34 = vector.extract_strided_slice %4 {offsets = [84, 0], sizes = [12, 1], strides = [1, 1]} : vector<192x1xf32> to vector<12x1xf32>
    %35 = arith.addf %31, %34 : vector<12x1xf32>
    %36 = vector.extract_strided_slice %7 {offsets = [84, 0], sizes = [12, 1], strides = [1, 1]} : vector<192x1xf32> to vector<12x1xf32>
    %37 = arith.addf %33, %36 : vector<12x1xf32>
    %38 = vector.extract_strided_slice %4 {offsets = [96, 0], sizes = [12, 1], strides = [1, 1]} : vector<192x1xf32> to vector<12x1xf32>
    %39 = arith.addf %35, %38 : vector<12x1xf32>
    %40 = vector.extract_strided_slice %7 {offsets = [96, 0], sizes = [12, 1], strides = [1, 1]} : vector<192x1xf32> to vector<12x1xf32>
    %41 = arith.addf %37, %40 : vector<12x1xf32>
    %42 = vector.extract_strided_slice %4 {offsets = [108, 0], sizes = [12, 1], strides = [1, 1]} : vector<192x1xf32> to vector<12x1xf32>
    %43 = arith.addf %39, %42 : vector<12x1xf32>
    %44 = vector.extract_strided_slice %7 {offsets = [108, 0], sizes = [12, 1], strides = [1, 1]} : vector<192x1xf32> to vector<12x1xf32>
    %45 = arith.addf %41, %44 : vector<12x1xf32>
    %46 = vector.extract_strided_slice %4 {offsets = [120, 0], sizes = [12, 1], strides = [1, 1]} : vector<192x1xf32> to vector<12x1xf32>
    %47 = arith.addf %43, %46 : vector<12x1xf32>
    %48 = vector.extract_strided_slice %7 {offsets = [120, 0], sizes = [12, 1], strides = [1, 1]} : vector<192x1xf32> to vector<12x1xf32>
    %49 = arith.addf %45, %48 : vector<12x1xf32>
    %50 = vector.extract_strided_slice %4 {offsets = [132, 0], sizes = [12, 1], strides = [1, 1]} : vector<192x1xf32> to vector<12x1xf32>
    %51 = arith.addf %47, %50 : vector<12x1xf32>
    %52 = vector.extract_strided_slice %7 {offsets = [132, 0], sizes = [12, 1], strides = [1, 1]} : vector<192x1xf32> to vector<12x1xf32>
    %53 = arith.addf %49, %52 : vector<12x1xf32>
    %54 = vector.extract_strided_slice %4 {offsets = [144, 0], sizes = [12, 1], strides = [1, 1]} : vector<192x1xf32> to vector<12x1xf32>
    %55 = arith.addf %51, %54 : vector<12x1xf32>
    %56 = vector.extract_strided_slice %7 {offsets = [144, 0], sizes = [12, 1], strides = [1, 1]} : vector<192x1xf32> to vector<12x1xf32>
    %57 = arith.addf %53, %56 : vector<12x1xf32>
    %58 = vector.extract_strided_slice %4 {offsets = [156, 0], sizes = [12, 1], strides = [1, 1]} : vector<192x1xf32> to vector<12x1xf32>
    %59 = arith.addf %55, %58 : vector<12x1xf32>
    %60 = vector.extract_strided_slice %7 {offsets = [156, 0], sizes = [12, 1], strides = [1, 1]} : vector<192x1xf32> to vector<12x1xf32>
    %61 = arith.addf %57, %60 : vector<12x1xf32>
    %62 = vector.extract_strided_slice %4 {offsets = [168, 0], sizes = [12, 1], strides = [1, 1]} : vector<192x1xf32> to vector<12x1xf32>
    %63 = arith.addf %59, %62 : vector<12x1xf32>
    %64 = vector.extract_strided_slice %7 {offsets = [168, 0], sizes = [12, 1], strides = [1, 1]} : vector<192x1xf32> to vector<12x1xf32>
    %65 = arith.addf %61, %64 : vector<12x1xf32>
    %66 = vector.extract_strided_slice %4 {offsets = [180, 0], sizes = [12, 1], strides = [1, 1]} : vector<192x1xf32> to vector<12x1xf32>
    %67 = arith.addf %63, %66 : vector<12x1xf32>
    %68 = vector.extract_strided_slice %7 {offsets = [180, 0], sizes = [12, 1], strides = [1, 1]} : vector<192x1xf32> to vector<12x1xf32>
    %69 = arith.addf %65, %68 : vector<12x1xf32>
    %cst_5 = arith.constant 3.125000e-02 : f32
    %70 = vector.broadcast %cst_5 : f32 to vector<12x1xf32>
    %71 = arith.mulf %67, %70 : vector<12x1xf32>
    %cst_6 = arith.constant 3.125000e-02 : f32
    %72 = vector.broadcast %cst_6 : f32 to vector<12x1xf32>
    %73 = arith.mulf %69, %72 : vector<12x1xf32>
    %74 = arith.mulf %71, %71 : vector<12x1xf32>
    %75 = arith.subf %73, %74 : vector<12x1xf32>
    %c0_7 = arith.constant 0 : index
    %c0_8 = arith.constant 0 : index
    %76 = vector.load %arg2[%c0_7, %c0_8] : memref<12x1xf32, #tpu.memory_space<vmem>>, vector<12x1xf32>
    %cst_9 = arith.constant 9.99999974E-6 : f32
    %77 = vector.broadcast %cst_9 : f32 to vector<12x1xf32>
    %78 = arith.addf %75, %77 : vector<12x1xf32>
    %79 = math.rsqrt %78 : vector<12x1xf32>
    %80 = arith.mulf %76, %79 : vector<12x1xf32>
    %c0_10 = arith.constant 0 : index
    %c0_11 = arith.constant 0 : index
    %81 = vector.load %arg3[%c0_10, %c0_11] : memref<12x1xf32, #tpu.memory_space<vmem>>, vector<12x1xf32>
    %82 = arith.mulf %71, %80 : vector<12x1xf32>
    %83 = arith.subf %81, %82 : vector<12x1xf32>
    %84 = tpu.concatenate %80, %80, %80, %80, %80, %80, %80, %80, %80, %80, %80, %80, %80, %80, %80, %80 in 0 : vector<12x1xf32>, vector<12x1xf32>, vector<12x1xf32>, vector<12x1xf32>, vector<12x1xf32>, vector<12x1xf32>, vector<12x1xf32>, vector<12x1xf32>, vector<12x1xf32>, vector<12x1xf32>, vector<12x1xf32>, vector<12x1xf32>, vector<12x1xf32>, vector<12x1xf32>, vector<12x1xf32>, vector<12x1xf32> -> vector<192x1xf32>
    %85 = tpu.concatenate %83, %83, %83, %83, %83, %83, %83, %83, %83, %83, %83, %83, %83, %83, %83, %83 in 0 : vector<12x1xf32>, vector<12x1xf32>, vector<12x1xf32>, vector<12x1xf32>, vector<12x1xf32>, vector<12x1xf32>, vector<12x1xf32>, vector<12x1xf32>, vector<12x1xf32>, vector<12x1xf32>, vector<12x1xf32>, vector<12x1xf32>, vector<12x1xf32>, vector<12x1xf32>, vector<12x1xf32>, vector<12x1xf32> -> vector<192x1xf32>
    %86 = vector.broadcast %84 : vector<192x1xf32> to vector<192x2xf32>
    %87 = arith.mulf %2, %86 : vector<192x2xf32>
    %88 = vector.broadcast %85 : vector<192x1xf32> to vector<192x2xf32>
    %89 = arith.addf %87, %88 : vector<192x2xf32>
    %cst_12 = arith.constant 0.000000e+00 : f32
    %90 = vector.broadcast %cst_12 : f32 to vector<192x2xf32>
    %91 = arith.maximumf %89, %90 : vector<192x2xf32>
    %92 = arith.truncf %91 : vector<192x2xf32> to vector<192x2xbf16>
    %c0_13 = arith.constant 0 : index
    %c0_14 = arith.constant 0 : index
    %93 = vector.load %arg4[%c0_13, %c0_14] : memref<192x2xbf16, #tpu.memory_space<vmem>>, vector<192x2xbf16>
    tpu.vector_store %arg4[%c0_13, %c0_14], %92 {strides = array<i32>} : memref<192x2xbf16, #tpu.memory_space<vmem>>, vector<192x2xbf16>,
    return
  }
}

module attributes {stable_mosaic.version = 11 : i64} {
  func.func @_matmul_bn_relu_kernel(%arg0: memref<80x108xbf16, #tpu.memory_space<vmem>>, %arg1: memref<108x32xbf16, #tpu.memory_space<vmem>>, %arg2: memref<20x1xf32, #tpu.memory_space<vmem>>, %arg3: memref<20x1xf32, #tpu.memory_space<vmem>>, %arg4: memref<80x32xbf16, #tpu.memory_space<vmem>>) attributes {dimension_semantics = [], scalar_prefetch = 0 : i64, scratch_operands = 0 : i64, tpu.core_type = #tpu.core_type<tc>} {
    %c0 = arith.constant 0 : index
    %c0_0 = arith.constant 0 : index
    %0 = vector.load %arg0[%c0, %c0_0] : memref<80x108xbf16, #tpu.memory_space<vmem>>, vector<80x108xbf16>
    %c0_1 = arith.constant 0 : index
    %c0_2 = arith.constant 0 : index
    %1 = vector.load %arg1[%c0_1, %c0_2] : memref<108x32xbf16, #tpu.memory_space<vmem>>, vector<108x32xbf16>
    %cst = arith.constant dense<0.000000e+00> : vector<80x32xf32>
    %2 = tpu.matmul %0, %1, %cst {dimension_numbers = #tpu.dot_dimension_numbers<[1], [0], [0], [1], [0, 0, 1, 1], [], []>} : vector<80x108xbf16>, vector<108x32xbf16>, vector<80x32xf32> -> vector<80x32xf32>
    %cst_3 = arith.constant dense<0.000000e+00> : vector<80xf32>
    %3 = vector.multi_reduction <add>, %2, %cst_3 [1] : vector<80x32xf32> to vector<80xf32>
    %4 = vector.shape_cast %3 : vector<80xf32> to vector<80x1xf32>
    %5 = arith.mulf %2, %2 : vector<80x32xf32>
    %cst_4 = arith.constant dense<0.000000e+00> : vector<80xf32>
    %6 = vector.multi_reduction <add>, %5, %cst_4 [1] : vector<80x32xf32> to vector<80xf32>
    %7 = vector.shape_cast %6 : vector<80xf32> to vector<80x1xf32>
    %8 = vector.extract_strided_slice %4 {offsets = [0, 0], sizes = [20, 1], strides = [1, 1]} : vector<80x1xf32> to vector<20x1xf32>
    %9 = vector.extract_strided_slice %7 {offsets = [0, 0], sizes = [20, 1], strides = [1, 1]} : vector<80x1xf32> to vector<20x1xf32>
    %10 = vector.extract_strided_slice %4 {offsets = [20, 0], sizes = [20, 1], strides = [1, 1]} : vector<80x1xf32> to vector<20x1xf32>
    %11 = arith.addf %8, %10 : vector<20x1xf32>
    %12 = vector.extract_strided_slice %7 {offsets = [20, 0], sizes = [20, 1], strides = [1, 1]} : vector<80x1xf32> to vector<20x1xf32>
    %13 = arith.addf %9, %12 : vector<20x1xf32>
    %14 = vector.extract_strided_slice %4 {offsets = [40, 0], sizes = [20, 1], strides = [1, 1]} : vector<80x1xf32> to vector<20x1xf32>
    %15 = arith.addf %11, %14 : vector<20x1xf32>
    %16 = vector.extract_strided_slice %7 {offsets = [40, 0], sizes = [20, 1], strides = [1, 1]} : vector<80x1xf32> to vector<20x1xf32>
    %17 = arith.addf %13, %16 : vector<20x1xf32>
    %18 = vector.extract_strided_slice %4 {offsets = [60, 0], sizes = [20, 1], strides = [1, 1]} : vector<80x1xf32> to vector<20x1xf32>
    %19 = arith.addf %15, %18 : vector<20x1xf32>
    %20 = vector.extract_strided_slice %7 {offsets = [60, 0], sizes = [20, 1], strides = [1, 1]} : vector<80x1xf32> to vector<20x1xf32>
    %21 = arith.addf %17, %20 : vector<20x1xf32>
    %cst_5 = arith.constant 7.812500e-03 : f32
    %22 = vector.broadcast %cst_5 : f32 to vector<20x1xf32>
    %23 = arith.mulf %19, %22 : vector<20x1xf32>
    %cst_6 = arith.constant 7.812500e-03 : f32
    %24 = vector.broadcast %cst_6 : f32 to vector<20x1xf32>
    %25 = arith.mulf %21, %24 : vector<20x1xf32>
    %26 = arith.mulf %23, %23 : vector<20x1xf32>
    %27 = arith.subf %25, %26 : vector<20x1xf32>
    %c0_7 = arith.constant 0 : index
    %c0_8 = arith.constant 0 : index
    %28 = vector.load %arg2[%c0_7, %c0_8] : memref<20x1xf32, #tpu.memory_space<vmem>>, vector<20x1xf32>
    %cst_9 = arith.constant 9.99999974E-6 : f32
    %29 = vector.broadcast %cst_9 : f32 to vector<20x1xf32>
    %30 = arith.addf %27, %29 : vector<20x1xf32>
    %31 = math.rsqrt %30 : vector<20x1xf32>
    %32 = arith.mulf %28, %31 : vector<20x1xf32>
    %c0_10 = arith.constant 0 : index
    %c0_11 = arith.constant 0 : index
    %33 = vector.load %arg3[%c0_10, %c0_11] : memref<20x1xf32, #tpu.memory_space<vmem>>, vector<20x1xf32>
    %34 = arith.mulf %23, %32 : vector<20x1xf32>
    %35 = arith.subf %33, %34 : vector<20x1xf32>
    %36 = tpu.concatenate %32, %32, %32, %32 in 0 : vector<20x1xf32>, vector<20x1xf32>, vector<20x1xf32>, vector<20x1xf32> -> vector<80x1xf32>
    %37 = tpu.concatenate %35, %35, %35, %35 in 0 : vector<20x1xf32>, vector<20x1xf32>, vector<20x1xf32>, vector<20x1xf32> -> vector<80x1xf32>
    %38 = vector.broadcast %36 : vector<80x1xf32> to vector<80x32xf32>
    %39 = arith.mulf %2, %38 : vector<80x32xf32>
    %40 = vector.broadcast %37 : vector<80x1xf32> to vector<80x32xf32>
    %41 = arith.addf %39, %40 : vector<80x32xf32>
    %cst_12 = arith.constant 0.000000e+00 : f32
    %42 = vector.broadcast %cst_12 : f32 to vector<80x32xf32>
    %43 = arith.maximumf %41, %42 : vector<80x32xf32>
    %44 = arith.truncf %43 : vector<80x32xf32> to vector<80x32xbf16>
    %c0_13 = arith.constant 0 : index
    %c0_14 = arith.constant 0 : index
    %45 = vector.load %arg4[%c0_13, %c0_14] : memref<80x32xbf16, #tpu.memory_space<vmem>>, vector<80x32xbf16>
    tpu.vector_store %arg4[%c0_13, %c0_14], %44 {strides = array<i32>} : memref<80x32xbf16, #tpu.memory_space<vmem>>, vector<80x32xbf16>,
    return
  }
}

module attributes {stable_mosaic.version = 11 : i64} {
  func.func @_matmul_bn_relu_kernel(%arg0: memref<100x180xbf16, #tpu.memory_space<vmem>>, %arg1: memref<180x128xbf16, #tpu.memory_space<vmem>>, %arg2: memref<25x1xf32, #tpu.memory_space<vmem>>, %arg3: memref<25x1xf32, #tpu.memory_space<vmem>>, %arg4: memref<100x128xbf16, #tpu.memory_space<vmem>>) attributes {dimension_semantics = [], scalar_prefetch = 0 : i64, scratch_operands = 0 : i64, tpu.core_type = #tpu.core_type<tc>} {
    %c0 = arith.constant 0 : index
    %c0_0 = arith.constant 0 : index
    %0 = vector.load %arg0[%c0, %c0_0] : memref<100x180xbf16, #tpu.memory_space<vmem>>, vector<100x180xbf16>
    %c0_1 = arith.constant 0 : index
    %c0_2 = arith.constant 0 : index
    %1 = vector.load %arg1[%c0_1, %c0_2] : memref<180x128xbf16, #tpu.memory_space<vmem>>, vector<180x128xbf16>
    %cst = arith.constant dense<0.000000e+00> : vector<100x128xf32>
    %2 = tpu.matmul %0, %1, %cst {dimension_numbers = #tpu.dot_dimension_numbers<[1], [0], [0], [1], [0, 0, 1, 1], [], []>} : vector<100x180xbf16>, vector<180x128xbf16>, vector<100x128xf32> -> vector<100x128xf32>
    %cst_3 = arith.constant dense<0.000000e+00> : vector<100xf32>
    %3 = vector.multi_reduction <add>, %2, %cst_3 [1] : vector<100x128xf32> to vector<100xf32>
    %4 = vector.shape_cast %3 : vector<100xf32> to vector<100x1xf32>
    %5 = arith.mulf %2, %2 : vector<100x128xf32>
    %cst_4 = arith.constant dense<0.000000e+00> : vector<100xf32>
    %6 = vector.multi_reduction <add>, %5, %cst_4 [1] : vector<100x128xf32> to vector<100xf32>
    %7 = vector.shape_cast %6 : vector<100xf32> to vector<100x1xf32>
    %8 = vector.extract_strided_slice %4 {offsets = [0, 0], sizes = [25, 1], strides = [1, 1]} : vector<100x1xf32> to vector<25x1xf32>
    %9 = vector.extract_strided_slice %7 {offsets = [0, 0], sizes = [25, 1], strides = [1, 1]} : vector<100x1xf32> to vector<25x1xf32>
    %10 = vector.extract_strided_slice %4 {offsets = [25, 0], sizes = [25, 1], strides = [1, 1]} : vector<100x1xf32> to vector<25x1xf32>
    %11 = arith.addf %8, %10 : vector<25x1xf32>
    %12 = vector.extract_strided_slice %7 {offsets = [25, 0], sizes = [25, 1], strides = [1, 1]} : vector<100x1xf32> to vector<25x1xf32>
    %13 = arith.addf %9, %12 : vector<25x1xf32>
    %14 = vector.extract_strided_slice %4 {offsets = [50, 0], sizes = [25, 1], strides = [1, 1]} : vector<100x1xf32> to vector<25x1xf32>
    %15 = arith.addf %11, %14 : vector<25x1xf32>
    %16 = vector.extract_strided_slice %7 {offsets = [50, 0], sizes = [25, 1], strides = [1, 1]} : vector<100x1xf32> to vector<25x1xf32>
    %17 = arith.addf %13, %16 : vector<25x1xf32>
    %18 = vector.extract_strided_slice %4 {offsets = [75, 0], sizes = [25, 1], strides = [1, 1]} : vector<100x1xf32> to vector<25x1xf32>
    %19 = arith.addf %15, %18 : vector<25x1xf32>
    %20 = vector.extract_strided_slice %7 {offsets = [75, 0], sizes = [25, 1], strides = [1, 1]} : vector<100x1xf32> to vector<25x1xf32>
    %21 = arith.addf %17, %20 : vector<25x1xf32>
    %cst_5 = arith.constant 0.001953125 : f32
    %22 = vector.broadcast %cst_5 : f32 to vector<25x1xf32>
    %23 = arith.mulf %19, %22 : vector<25x1xf32>
    %cst_6 = arith.constant 0.001953125 : f32
    %24 = vector.broadcast %cst_6 : f32 to vector<25x1xf32>
    %25 = arith.mulf %21, %24 : vector<25x1xf32>
    %26 = arith.mulf %23, %23 : vector<25x1xf32>
    %27 = arith.subf %25, %26 : vector<25x1xf32>
    %c0_7 = arith.constant 0 : index
    %c0_8 = arith.constant 0 : index
    %28 = vector.load %arg2[%c0_7, %c0_8] : memref<25x1xf32, #tpu.memory_space<vmem>>, vector<25x1xf32>
    %cst_9 = arith.constant 9.99999974E-6 : f32
    %29 = vector.broadcast %cst_9 : f32 to vector<25x1xf32>
    %30 = arith.addf %27, %29 : vector<25x1xf32>
    %31 = math.rsqrt %30 : vector<25x1xf32>
    %32 = arith.mulf %28, %31 : vector<25x1xf32>
    %c0_10 = arith.constant 0 : index
    %c0_11 = arith.constant 0 : index
    %33 = vector.load %arg3[%c0_10, %c0_11] : memref<25x1xf32, #tpu.memory_space<vmem>>, vector<25x1xf32>
    %34 = arith.mulf %23, %32 : vector<25x1xf32>
    %35 = arith.subf %33, %34 : vector<25x1xf32>
    %36 = tpu.concatenate %32, %32, %32, %32 in 0 : vector<25x1xf32>, vector<25x1xf32>, vector<25x1xf32>, vector<25x1xf32> -> vector<100x1xf32>
    %37 = tpu.concatenate %35, %35, %35, %35 in 0 : vector<25x1xf32>, vector<25x1xf32>, vector<25x1xf32>, vector<25x1xf32> -> vector<100x1xf32>
    %38 = vector.broadcast %36 : vector<100x1xf32> to vector<100x128xf32>
    %39 = arith.mulf %2, %38 : vector<100x128xf32>
    %40 = vector.broadcast %37 : vector<100x1xf32> to vector<100x128xf32>
    %41 = arith.addf %39, %40 : vector<100x128xf32>
    %cst_12 = arith.constant 0.000000e+00 : f32
    %42 = vector.broadcast %cst_12 : f32 to vector<100x128xf32>
    %43 = arith.maximumf %41, %42 : vector<100x128xf32>
    %44 = arith.truncf %43 : vector<100x128xf32> to vector<100x128xbf16>
    %c0_13 = arith.constant 0 : index
    %c0_14 = arith.constant 0 : index
    %45 = vector.load %arg4[%c0_13, %c0_14] : memref<100x128xbf16, #tpu.memory_space<vmem>>, vector<100x128xbf16>
    tpu.vector_store %arg4[%c0_13, %c0_14], %44 {strides = array<i32>} : memref<100x128xbf16, #tpu.memory_space<vmem>>, vector<100x128xbf16>,
    return
  }
}

module attributes {stable_mosaic.version = 11 : i64} {
  func.func @_matmul_bn_relu_kernel(%arg0: memref<128x225xbf16, #tpu.memory_space<vmem>>, %arg1: memref<225x512xbf16, #tpu.memory_space<vmem>>, %arg2: memref<32x1xf32, #tpu.memory_space<vmem>>, %arg3: memref<32x1xf32, #tpu.memory_space<vmem>>, %arg4: memref<128x512xbf16, #tpu.memory_space<vmem>>) attributes {dimension_semantics = [], scalar_prefetch = 0 : i64, scratch_operands = 0 : i64, tpu.core_type = #tpu.core_type<tc>} {
    %c0 = arith.constant 0 : index
    %c0_0 = arith.constant 0 : index
    %0 = vector.load %arg0[%c0, %c0_0] : memref<128x225xbf16, #tpu.memory_space<vmem>>, vector<128x225xbf16>
    %c0_1 = arith.constant 0 : index
    %c0_2 = arith.constant 0 : index
    %1 = vector.load %arg1[%c0_1, %c0_2] : memref<225x512xbf16, #tpu.memory_space<vmem>>, vector<225x512xbf16>
    %cst = arith.constant dense<0.000000e+00> : vector<128x512xf32>
    %2 = tpu.matmul %0, %1, %cst {dimension_numbers = #tpu.dot_dimension_numbers<[1], [0], [0], [1], [0, 0, 1, 1], [], []>} : vector<128x225xbf16>, vector<225x512xbf16>, vector<128x512xf32> -> vector<128x512xf32>
    %cst_3 = arith.constant dense<0.000000e+00> : vector<128xf32>
    %3 = vector.multi_reduction <add>, %2, %cst_3 [1] : vector<128x512xf32> to vector<128xf32>
    %4 = vector.shape_cast %3 : vector<128xf32> to vector<128x1xf32>
    %5 = arith.mulf %2, %2 : vector<128x512xf32>
    %cst_4 = arith.constant dense<0.000000e+00> : vector<128xf32>
    %6 = vector.multi_reduction <add>, %5, %cst_4 [1] : vector<128x512xf32> to vector<128xf32>
    %7 = vector.shape_cast %6 : vector<128xf32> to vector<128x1xf32>
    %8 = vector.extract_strided_slice %4 {offsets = [0, 0], sizes = [32, 1], strides = [1, 1]} : vector<128x1xf32> to vector<32x1xf32>
    %9 = vector.extract_strided_slice %7 {offsets = [0, 0], sizes = [32, 1], strides = [1, 1]} : vector<128x1xf32> to vector<32x1xf32>
    %10 = vector.extract_strided_slice %4 {offsets = [32, 0], sizes = [32, 1], strides = [1, 1]} : vector<128x1xf32> to vector<32x1xf32>
    %11 = arith.addf %8, %10 : vector<32x1xf32>
    %12 = vector.extract_strided_slice %7 {offsets = [32, 0], sizes = [32, 1], strides = [1, 1]} : vector<128x1xf32> to vector<32x1xf32>
    %13 = arith.addf %9, %12 : vector<32x1xf32>
    %14 = vector.extract_strided_slice %4 {offsets = [64, 0], sizes = [32, 1], strides = [1, 1]} : vector<128x1xf32> to vector<32x1xf32>
    %15 = arith.addf %11, %14 : vector<32x1xf32>
    %16 = vector.extract_strided_slice %7 {offsets = [64, 0], sizes = [32, 1], strides = [1, 1]} : vector<128x1xf32> to vector<32x1xf32>
    %17 = arith.addf %13, %16 : vector<32x1xf32>
    %18 = vector.extract_strided_slice %4 {offsets = [96, 0], sizes = [32, 1], strides = [1, 1]} : vector<128x1xf32> to vector<32x1xf32>
    %19 = arith.addf %15, %18 : vector<32x1xf32>
    %20 = vector.extract_strided_slice %7 {offsets = [96, 0], sizes = [32, 1], strides = [1, 1]} : vector<128x1xf32> to vector<32x1xf32>
    %21 = arith.addf %17, %20 : vector<32x1xf32>
    %cst_5 = arith.constant 4.8828125E-4 : f32
    %22 = vector.broadcast %cst_5 : f32 to vector<32x1xf32>
    %23 = arith.mulf %19, %22 : vector<32x1xf32>
    %cst_6 = arith.constant 4.8828125E-4 : f32
    %24 = vector.broadcast %cst_6 : f32 to vector<32x1xf32>
    %25 = arith.mulf %21, %24 : vector<32x1xf32>
    %26 = arith.mulf %23, %23 : vector<32x1xf32>
    %27 = arith.subf %25, %26 : vector<32x1xf32>
    %c0_7 = arith.constant 0 : index
    %c0_8 = arith.constant 0 : index
    %28 = vector.load %arg2[%c0_7, %c0_8] : memref<32x1xf32, #tpu.memory_space<vmem>>, vector<32x1xf32>
    %cst_9 = arith.constant 9.99999974E-6 : f32
    %29 = vector.broadcast %cst_9 : f32 to vector<32x1xf32>
    %30 = arith.addf %27, %29 : vector<32x1xf32>
    %31 = math.rsqrt %30 : vector<32x1xf32>
    %32 = arith.mulf %28, %31 : vector<32x1xf32>
    %c0_10 = arith.constant 0 : index
    %c0_11 = arith.constant 0 : index
    %33 = vector.load %arg3[%c0_10, %c0_11] : memref<32x1xf32, #tpu.memory_space<vmem>>, vector<32x1xf32>
    %34 = arith.mulf %23, %32 : vector<32x1xf32>
    %35 = arith.subf %33, %34 : vector<32x1xf32>
    %36 = tpu.concatenate %32, %32, %32, %32 in 0 : vector<32x1xf32>, vector<32x1xf32>, vector<32x1xf32>, vector<32x1xf32> -> vector<128x1xf32>
    %37 = tpu.concatenate %35, %35, %35, %35 in 0 : vector<32x1xf32>, vector<32x1xf32>, vector<32x1xf32>, vector<32x1xf32> -> vector<128x1xf32>
    %38 = vector.broadcast %36 : vector<128x1xf32> to vector<128x512xf32>
    %39 = arith.mulf %2, %38 : vector<128x512xf32>
    %40 = vector.broadcast %37 : vector<128x1xf32> to vector<128x512xf32>
    %41 = arith.addf %39, %40 : vector<128x512xf32>
    %cst_12 = arith.constant 0.000000e+00 : f32
    %42 = vector.broadcast %cst_12 : f32 to vector<128x512xf32>
    %43 = arith.maximumf %41, %42 : vector<128x512xf32>
    %44 = arith.truncf %43 : vector<128x512xf32> to vector<128x512xbf16>
    %c0_13 = arith.constant 0 : index
    %c0_14 = arith.constant 0 : index
    %45 = vector.load %arg4[%c0_13, %c0_14] : memref<128x512xbf16, #tpu.memory_space<vmem>>, vector<128x512xbf16>
    tpu.vector_store %arg4[%c0_13, %c0_14], %44 {strides = array<i32>} : memref<128x512xbf16, #tpu.memory_space<vmem>>, vector<128x512xbf16>,
    return
  }
}

module attributes {stable_mosaic.version = 11 : i64} {
  func.func @_matmul_bias_tanh_kernel(%arg0: i32, %arg1: memref<12x288xbf16, #tpu.memory_space<vmem>>, %arg2: memref<288x2048xbf16, #tpu.memory_space<vmem>>, %arg3: memref<12x1xf32, #tpu.memory_space<vmem>>, %arg4: memref<12x2048xf32, #tpu.memory_space<vmem>>) attributes {dimension_semantics = [#tpu.dimension_semantics<parallel>], iteration_bounds = array<i64: 1>, scalar_prefetch = 0 : i64, scratch_operands = 0 : i64, tpu.core_type = #tpu.core_type<tc>, window_params = [{pipeline_mode = #tpu.pipeline_mode<synchronous>, transform_indices = @transform_0, window_bounds = array<i64: 12, 288>}, {transform_indices = @transform_1, window_bounds = array<i64: 288, 2048>}, {pipeline_mode = #tpu.pipeline_mode<synchronous>, transform_indices = @transform_2, window_bounds = array<i64: 12, 1>}, {transform_indices = @transform_3, window_bounds = array<i64: 12, 2048>}]} {
    %c0 = arith.constant 0 : index
    %c0_0 = arith.constant 0 : index
    %0 = vector.load %arg1[%c0, %c0_0] : memref<12x288xbf16, #tpu.memory_space<vmem>>, vector<12x288xbf16>
    %c0_1 = arith.constant 0 : index
    %c0_2 = arith.constant 0 : index
    %1 = vector.load %arg2[%c0_1, %c0_2] : memref<288x2048xbf16, #tpu.memory_space<vmem>>, vector<288x2048xbf16>
    %cst = arith.constant dense<0.000000e+00> : vector<12x2048xf32>
    %2 = tpu.matmul %0, %1, %cst {dimension_numbers = #tpu.dot_dimension_numbers<[1], [0], [0], [1], [0, 0, 1, 1], [], []>} : vector<12x288xbf16>, vector<288x2048xbf16>, vector<12x2048xf32> -> vector<12x2048xf32>
    %c0_3 = arith.constant 0 : index
    %c0_4 = arith.constant 0 : index
    %3 = vector.load %arg3[%c0_3, %c0_4] : memref<12x1xf32, #tpu.memory_space<vmem>>, vector<12x1xf32>
    %4 = vector.broadcast %3 : vector<12x1xf32> to vector<12x2048xf32>
    %5 = arith.addf %2, %4 : vector<12x2048xf32>
    %6 = math.tanh %5 : vector<12x2048xf32>
    %c0_5 = arith.constant 0 : index
    %c0_6 = arith.constant 0 : index
    %7 = vector.load %arg4[%c0_5, %c0_6] : memref<12x2048xf32, #tpu.memory_space<vmem>>, vector<12x2048xf32>
    tpu.vector_store %arg4[%c0_5, %c0_6], %6 {strides = array<i32>} : memref<12x2048xf32, #tpu.memory_space<vmem>>, vector<12x2048xf32>,
    return
  }
  func.func @transform_0(%arg0: i32) -> (i32, i32) {
    %c0_i32 = arith.constant 0 : i32
    %c0_i32_0 = arith.constant 0 : i32
    %c0_i32_1 = arith.constant 0 : i32
    return %c0_i32, %c0_i32_0 : i32, i32
  }
  func.func @transform_1(%arg0: i32) -> (i32, i32) {
    %c0_i32 = arith.constant 0 : i32
    %c0_i32_0 = arith.constant 0 : i32
    return %c0_i32, %arg0 : i32, i32
  }
  func.func @transform_2(%arg0: i32) -> (i32, i32) {
    %c0_i32 = arith.constant 0 : i32
    %c0_i32_0 = arith.constant 0 : i32
    %c0_i32_1 = arith.constant 0 : i32
    return %c0_i32, %c0_i32_0 : i32, i32
  }
  func.func @transform_3(%arg0: i32) -> (i32, i32) {
    %c0_i32 = arith.constant 0 : i32
    %c0_i32_0 = arith.constant 0 : i32
    return %c0_i32, %arg0 : i32, i32
  }
}

</mosaic_0001>

<llo_original>
// kernel: _lambda_.5
$region0: #{_lambda_.5}
  #allocation0 [shape = 'u32[]', space=smem, size = 0x4, offset = 0x4, fixed_abs, tag = 'smem constant byte address 0x4 - core index']
  #allocation1 [shape = 'u32[144,128]{1,0:T(1,128)}', space=vmem, size = 0x12000, scoped, tag = 'internal scratch']
  %s0 = inlined_call_operand.hbm [shape: bf16[192,8], index: 0, kind: input, shape index: {}]
  %s1 = inlined_call_operand.vmem [shape: bf16[8,2], index: 1, kind: input, shape index: {}]
  %s2 = inlined_call_operand.vmem [shape: f32[12,1], index: 2, kind: input, shape index: {}]
  %s3 = inlined_call_operand.vmem [shape: f32[12,1], index: 3, kind: input, shape index: {}]
  %s4 = inlined_call_operand.vmem [shape: bf16[192,2], index: 4, kind: output, shape index: {}]
  %s5 = sld [smem:[#allocation0]]
  $region30: #{_lambda_.5} parent=0
    _
  %s7 = ssub.s32 1, %s5
  %s8 = scalar_select 0, %s7, %s5
  $region1: #{_lambda_.5} parent=0
    #allocation2 [shape = 'u8[49152]{0}', space=vmem, size = 0xc000, scoped, tag = 'input window, operand 0, single buffered']
    #allocation3 [shape = 's32[1]{0}', space=sflag, size = 0x4, scoped, tag = 'scoped memory for _lambda_.5']
    %9 = vsyncpa [#allocation3], 0
    // Predicated region
    $region2: #{_lambda_.5} parent=1 // pred_check
      _
    $region3: #{_lambda_.5} parent=1 // pred_check_branch
      %11 = sbr.rel (0) target = $region5
    $region4: #{_lambda_.5} parent=1 // pred_region
      %s13 = ssub.s32 1536, 1536
      %14 = vsyncadd [#allocation3], %s13
      %s15 = sshll.u32 [#allocation2], 4
      %s16 = int_to_ptr.vmem [resolvable:$true] %s15
      %21 = dma.hbm_to_vmem [thread:$0]  %s0, 1536, %s16, [#allocation3], 64, 64, 4
    $region5: #{_lambda_.5} parent=1 // pred_fallthru
      _
    // Predicated region
    $region6: #{_lambda_.5} parent=1 // pred_check
      _
    $region7: #{_lambda_.5} parent=1 // pred_check_branch
      %23 = sbr.rel (0) target = $region9
    $region8: #{_lambda_.5} parent=1 // pred_region
      _
    $region9: #{_lambda_.5} parent=1 // pred_fallthru
      _
    // Predicated region
    $region10: #{_lambda_.5} parent=1 // pred_check
      _
    $region11: #{_lambda_.5} parent=1 // pred_check_branch
      %25 = sbr.rel (0) target = $region13
    $region12: #{_lambda_.5} parent=1 // pred_region
      _
    $region13: #{_lambda_.5} parent=1 // pred_fallthru
      _
    // Predicated region
    $region14: #{_lambda_.5} parent=1 // pred_check
      _
    $region15: #{_lambda_.5} parent=1 // pred_check_branch
      %27 = sbr.rel (0) target = $region17
    $region16: #{_lambda_.5} parent=1 // pred_region
      _
    $region17: #{_lambda_.5} parent=1 // pred_fallthru
      _
    // Predicated region
    $region18: #{_lambda_.5} parent=1 // pred_check
      _
    $region19: #{_lambda_.5} parent=1 // pred_check_branch
      %29 = sbr.rel (0) target = $region21
    $region20: #{_lambda_.5} parent=1 // pred_region
      %30 = dma.done [#allocation3], 1536
    $region21: #{_lambda_.5} parent=1 // pred_fallthru
      _
    %v32 = vld [vmem:[#allocation2] sm:$0xf]
    %v33 = vld [vmem:[#allocation2 + $0x4] sm:$0xf]
    %v34 = vld [vmem:[#allocation2 + $0x8] sm:$0xf]
    %v35 = vld [vmem:[#allocation2 + $0xc] sm:$0xf]
    %v36 = vld [vmem:[#allocation2 + $0x10] sm:$0xf]
    %v37 = vld [vmem:[#allocation2 + $0x14] sm:$0xf]
    %v38 = vld [vmem:[#allocation2 + $0x18] sm:$0xf]
    %v39 = vld [vmem:[#allocation2 + $0x1c] sm:$0xf]
    %v40 = vld [vmem:[#allocation2 + $0x20] sm:$0xf]
    %v41 = vld [vmem:[#allocation2 + $0x24] sm:$0xf]
    %v42 = vld [vmem:[#allocation2 + $0x28] sm:$0xf]
    %v43 = vld [vmem:[#allocation2 + $0x2c] sm:$0xf]
    %v44 = vld [vmem:[#allocation2 + $0x30] sm:$0xf]
    %v45 = vld [vmem:[#allocation2 + $0x34] sm:$0xf]
    %v46 = vld [vmem:[#allocation2 + $0x38] sm:$0xf]
    %v47 = vld [vmem:[#allocation2 + $0x3c] sm:$0xf]
    %v48 = vld [vmem:[#allocation2 + $0x40] sm:$0xf]
    %v49 = vld [vmem:[#allocation2 + $0x44] sm:$0xf]
    %v50 = vld [vmem:[#allocation2 + $0x48] sm:$0xf]
    %v51 = vld [vmem:[#allocation2 + $0x4c] sm:$0xf]
    %v52 = vld [vmem:[#allocation2 + $0x50] sm:$0xf]
    %v53 = vld [vmem:[#allocation2 + $0x54] sm:$0xf]
    %v54 = vld [vmem:[#allocation2 + $0x58] sm:$0xf]
    %v55 = vld [vmem:[#allocation2 + $0x5c] sm:$0xf]
    %v56 = vld [vmem:[%s1] sm:$0xf]
    %v81 = vunpack.c.l.b16 %v32
    %v82 = vunpack.c.l.b16 %v33
    %v83 = vunpack.c.l.b16 %v34
    %v84 = vunpack.c.l.b16 %v35
    %v85 = vunpack.c.l.b16 %v36
    %v86 = vunpack.c.l.b16 %v37
    %v87 = vunpack.c.l.b16 %v38
    %v88 = vunpack.c.l.b16 %v39
    %v89 = vunpack.c.l.b16 %v40
    %v90 = vunpack.c.l.b16 %v41
    %v91 = vunpack.c.l.b16 %v42
    %v92 = vunpack.c.l.b16 %v43
    %v93 = vunpack.c.l.b16 %v44
    %v94 = vunpack.c.l.b16 %v45
    %v95 = vunpack.c.l.b16 %v46
    %v96 = vunpack.c.l.b16 %v47
    %v97 = vunpack.c.l.b16 %v48
    %v98 = vunpack.c.l.b16 %v49
    %v99 = vunpack.c.l.b16 %v50
    %v100 = vunpack.c.l.b16 %v51
    %v101 = vunpack.c.l.b16 %v52
    %v102 = vunpack.c.l.b16 %v53
    %v103 = vunpack.c.l.b16 %v54
    %v104 = vunpack.c.l.b16 %v55
    %v105 = vpack.c.b16 %v82, %v81
    %v106 = vpack.c.b16 %v84, %v83
    %v107 = vpack.c.b16 %v86, %v85
    %v108 = vpack.c.b16 %v88, %v87
    %v109 = vpack.c.b16 %v90, %v89
    %v110 = vpack.c.b16 %v92, %v91
    %v111 = vpack.c.b16 %v94, %v93
    %v112 = vpack.c.b16 %v96, %v95
    %v113 = vpack.c.b16 %v98, %v97
    %v114 = vpack.c.b16 %v100, %v99
    %v115 = vpack.c.b16 %v102, %v101
    %v116 = vpack.c.b16 %v104, %v103
    %vm117 = vcmask 64512
    %v119 = vsel %vm117, %v105, 0
    %v122 = vsel %vm117, %v106, 0
    %v125 = vsel %vm117, %v107, 0
    %v128 = vsel %vm117, %v108, 0
    %v131 = vsel %vm117, %v109, 0
    %v134 = vsel %vm117, %v110, 0
    %v137 = vsel %vm117, %v111, 0
    %v140 = vsel %vm117, %v112, 0
    %v143 = vsel %vm117, %v113, 0
    %v146 = vsel %vm117, %v114, 0
    %v149 = vsel %vm117, %v115, 0
    %v152 = vsel %vm117, %v116, 0
    %vm154 = vcmask 1043456
    %v156 = vsel %vm154, %v56, 0
    %158 = vmatprep.subr.bf16.mxu0 0
    %159 = vmatpush1.bf16.msra.mxu0 0
    %160 = vmatprep.subr.bf16.mxu0 0
    %161 = vmatpush1.bf16.msra.mxu0 0
    %162 = vmatprep.subr.bf16.mxu0 0
    %163 = vmatpush1.bf16.msra.mxu0 0
    %164 = vmatprep.subr.bf16.mxu0 0
    %165 = vmatpush1.bf16.msra.mxu0 0
    %166 = vmatprep.subr.bf16.mxu0 0
    %167 = vmatpush1.bf16.msra.mxu0 0
    %168 = vmatprep.subr.bf16.mxu0 0
    %169 = vmatpush1.bf16.msra.mxu0 0
    %170 = vmatprep.subr.bf16.mxu0 0
    %171 = vmatpush1.bf16.msra.mxu0 0
    %172 = vmatprep.subr.bf16.mxu0 0
    %173 = vmatpush1.bf16.msra.mxu0 %v156
    %174 = vmatprep.subr.bf16.mxu0 0
    %175 = vmatpush2.bf16.msra.mxu0 0
    %176 = vmatprep.subr.bf16.mxu0 0
    %177 = vmatpush2.bf16.msra.mxu0 0
    %178 = vmatprep.subr.bf16.mxu0 0
    %179 = vmatpush2.bf16.msra.mxu0 0
    %180 = vmatprep.subr.bf16.mxu0 0
    %181 = vmatpush2.bf16.msra.mxu0 0
    %182 = vmatprep.subr.bf16.mxu0 0
    %183 = vmatpush2.bf16.msra.mxu0 0
    %184 = vmatprep.subr.bf16.mxu0 0
    %185 = vmatpush2.bf16.msra.mxu0 0
    %186 = vmatprep.subr.bf16.mxu0 0
    %187 = vmatpush2.bf16.msra.mxu0 0
    %188 = vmatprep.subr.bf16.mxu0 0
    %189 = vmatpush2.bf16.msra.mxu0 0
    %190 = vmatprep.mubr.bf16.mxu0 0
    %191 = vmatmul.mubr.bf16.gmra.mxu0 %v119
    %v192 = vpop.f32.mrf.mxu0
    %v193 = vadd.f32 0.0, %v192
    %v194 = vpop.f32.mrf.mxu0
    %v195 = vpop.f32.mrf.mxu0
    %v196 = vadd.f32 0.0, %v195
    %v197 = vpop.f32.mrf.mxu0
    %198 = vmatprep.mubr.bf16.mxu0 0
    %199 = vmatmul.mubr.bf16.gmra.mxu0 %v122
    %v200 = vpop.f32.mrf.mxu0
    %v201 = vadd.f32 0.0, %v200
    %v202 = vpop.f32.mrf.mxu0
    %v203 = vpop.f32.mrf.mxu0
    %v204 = vadd.f32 0.0, %v203
    %v205 = vpop.f32.mrf.mxu0
    %206 = vmatprep.mubr.bf16.mxu0 0
    %207 = vmatmul.mubr.bf16.gmra.mxu0 %v125
    %v208 = vpop.f32.mrf.mxu0
    %v209 = vadd.f32 0.0, %v208
    %v210 = vpop.f32.mrf.mxu0
    %v211 = vpop.f32.mrf.mxu0
    %v212 = vadd.f32 0.0, %v211
    %v213 = vpop.f32.mrf.mxu0
    %214 = vmatprep.mubr.bf16.mxu0 0
    %215 = vmatmul.mubr.bf16.gmra.mxu0 %v128
    %v216 = vpop.f32.mrf.mxu0
    %v217 = vadd.f32 0.0, %v216
    %v218 = vpop.f32.mrf.mxu0
    %v219 = vpop.f32.mrf.mxu0
    %v220 = vadd.f32 0.0, %v219
    %v221 = vpop.f32.mrf.mxu0
    %222 = vmatprep.mubr.bf16.mxu0 0
    %223 = vmatmul.mubr.bf16.gmra.mxu0 %v131
    %v224 = vpop.f32.mrf.mxu0
    %v225 = vadd.f32 0.0, %v224
    %v226 = vpop.f32.mrf.mxu0
    %v227 = vpop.f32.mrf.mxu0
    %v228 = vadd.f32 0.0, %v227
    %v229 = vpop.f32.mrf.mxu0
    %230 = vmatprep.mubr.bf16.mxu0 0
    %231 = vmatmul.mubr.bf16.gmra.mxu0 %v134
    %v232 = vpop.f32.mrf.mxu0
    %v233 = vadd.f32 0.0, %v232
    %v234 = vpop.f32.mrf.mxu0
    %v235 = vpop.f32.mrf.mxu0
    %v236 = vadd.f32 0.0, %v235
    %v237 = vpop.f32.mrf.mxu0
    %238 = vmatprep.mubr.bf16.mxu0 0
    %239 = vmatmul.mubr.bf16.gmra.mxu0 %v137
    %v240 = vpop.f32.mrf.mxu0
    %v241 = vadd.f32 0.0, %v240
    %v242 = vpop.f32.mrf.mxu0
    %v243 = vpop.f32.mrf.mxu0
    %v244 = vadd.f32 0.0, %v243
    %v245 = vpop.f32.mrf.mxu0
    %246 = vmatprep.mubr.bf16.mxu0 0
    %247 = vmatmul.mubr.bf16.gmra.mxu0 %v140
    %v248 = vpop.f32.mrf.mxu0
    %v249 = vadd.f32 0.0, %v248
    %v250 = vpop.f32.mrf.mxu0
    %v251 = vpop.f32.mrf.mxu0
    %v252 = vadd.f32 0.0, %v251
    %v253 = vpop.f32.mrf.mxu0
    %254 = vmatprep.mubr.bf16.mxu0 0
    %255 = vmatmul.mubr.bf16.gmra.mxu0 %v143
    %v256 = vpop.f32.mrf.mxu0
    %v257 = vadd.f32 0.0, %v256
    %v258 = vpop.f32.mrf.mxu0
    %v259 = vpop.f32.mrf.mxu0
    %v260 = vadd.f32 0.0, %v259
    %v261 = vpop.f32.mrf.mxu0
    %262 = vmatprep.mubr.bf16.mxu0 0
    %263 = vmatmul.mubr.bf16.gmra.mxu0 %v146
    %v264 = vpop.f32.mrf.mxu0
    %v265 = vadd.f32 0.0, %v264
    %v266 = vpop.f32.mrf.mxu0
    %v267 = vpop.f32.mrf.mxu0
    %v268 = vadd.f32 0.0, %v267
    %v269 = vpop.f32.mrf.mxu0
    %270 = vmatprep.mubr.bf16.mxu0 0
    %271 = vmatmul.mubr.bf16.gmra.mxu0 %v149
    %v272 = vpop.f32.mrf.mxu0
    %v273 = vadd.f32 0.0, %v272
    %v274 = vpop.f32.mrf.mxu0
    %v275 = vpop.f32.mrf.mxu0
    %v276 = vadd.f32 0.0, %v275
    %v277 = vpop.f32.mrf.mxu0
    %278 = vmatprep.mubr.bf16.mxu0 0
    %279 = vmatmul.mubr.bf16.gmra.mxu0 %v152
    %v280 = vpop.f32.mrf.mxu0
    %v281 = vadd.f32 0.0, %v280
    %v282 = vpop.f32.mrf.mxu0
    %v283 = vpop.f32.mrf.mxu0
    %v284 = vadd.f32 0.0, %v283
    %v285 = vpop.f32.mrf.mxu0
    %286 = vdwg.mxu0
    %vm287 = vcmask 15360
    %v288 = vsel %vm287, %v193, 0.0
    %289 = vadd.xlane.f32.xlu0 %v288
    %v290 = vpop.xlane.xlu0 %289
    %v291 = vsel %vm287, %v196, 0.0
    %292 = vadd.xlane.f32.xlu0 %v291
    %v293 = vpop.xlane.xlu0 %292
    %v294 = vsel %vm287, %v201, 0.0
    %295 = vadd.xlane.f32.xlu0 %v294
    %v296 = vpop.xlane.xlu0 %295
    %v297 = vsel %vm287, %v204, 0.0
    %298 = vadd.xlane.f32.xlu0 %v297
    %v299 = vpop.xlane.xlu0 %298
    %v300 = vsel %vm287, %v209, 0.0
    %301 = vadd.xlane.f32.xlu0 %v300
    %v302 = vpop.xlane.xlu0 %301
    %v303 = vsel %vm287, %v212, 0.0
    %304 = vadd.xlane.f32.xlu0 %v303
    %v305 = vpop.xlane.xlu0 %304
    %v306 = vsel %vm287, %v217, 0.0
    %307 = vadd.xlane.f32.xlu0 %v306
    %v308 = vpop.xlane.xlu0 %307
    %v309 = vsel %vm287, %v220, 0.0
    %310 = vadd.xlane.f32.xlu0 %v309
    %v311 = vpop.xlane.xlu0 %310
    %v312 = vsel %vm287, %v225, 0.0
    %313 = vadd.xlane.f32.xlu0 %v312
    %v314 = vpop.xlane.xlu0 %313
    %v315 = vsel %vm287, %v228, 0.0
    %316 = vadd.xlane.f32.xlu0 %v315
    %v317 = vpop.xlane.xlu0 %316
    %v318 = vsel %vm287, %v233, 0.0
    %319 = vadd.xlane.f32.xlu0 %v318
    %v320 = vpop.xlane.xlu0 %319
    %v321 = vsel %vm287, %v236, 0.0
    %322 = vadd.xlane.f32.xlu0 %v321
    %v323 = vpop.xlane.xlu0 %322
    %v324 = vsel %vm287, %v241, 0.0
    %325 = vadd.xlane.f32.xlu0 %v324
    %v326 = vpop.xlane.xlu0 %325
    %v327 = vsel %vm287, %v244, 0.0
    %328 = vadd.xlane.f32.xlu0 %v327
    %v329 = vpop.xlane.xlu0 %328
    %v330 = vsel %vm287, %v249, 0.0
    %331 = vadd.xlane.f32.xlu0 %v330
    %v332 = vpop.xlane.xlu0 %331
    %v333 = vsel %vm287, %v252, 0.0
    %334 = vadd.xlane.f32.xlu0 %v333
    %v335 = vpop.xlane.xlu0 %334
    %v336 = vsel %vm287, %v257, 0.0
    %337 = vadd.xlane.f32.xlu0 %v336
    %v338 = vpop.xlane.xlu0 %337
    %v339 = vsel %vm287, %v260, 0.0
    %340 = vadd.xlane.f32.xlu0 %v339
    %v341 = vpop.xlane.xlu0 %340
    %v342 = vsel %vm287, %v265, 0.0
    %343 = vadd.xlane.f32.xlu0 %v342
    %v344 = vpop.xlane.xlu0 %343
    %v345 = vsel %vm287, %v268, 0.0
    %346 = vadd.xlane.f32.xlu0 %v345
    %v347 = vpop.xlane.xlu0 %346
    %v348 = vsel %vm287, %v273, 0.0
    %349 = vadd.xlane.f32.xlu0 %v348
    %v350 = vpop.xlane.xlu0 %349
    %v351 = vsel %vm287, %v276, 0.0
    %352 = vadd.xlane.f32.xlu0 %v351
    %v353 = vpop.xlane.xlu0 %352
    %v354 = vsel %vm287, %v281, 0.0
    %355 = vadd.xlane.f32.xlu0 %v354
    %v356 = vpop.xlane.xlu0 %355
    %v357 = vsel %vm287, %v284, 0.0
    %358 = vadd.xlane.f32.xlu0 %v357
    %v359 = vpop.xlane.xlu0 %358
    %v360 = vmul.f32 %v193, %v193
    %v361 = vmul.f32 %v196, %v196
    %v362 = vmul.f32 %v201, %v201
    %v363 = vmul.f32 %v204, %v204
    %v364 = vmul.f32 %v209, %v209
    %v365 = vmul.f32 %v212, %v212
    %v366 = vmul.f32 %v217, %v217
    %v367 = vmul.f32 %v220, %v220
    %v368 = vmul.f32 %v225, %v225
    %v369 = vmul.f32 %v228, %v228
    %v370 = vmul.f32 %v233, %v233
    %v371 = vmul.f32 %v236, %v236
    %v372 = vmul.f32 %v241, %v241
    %v373 = vmul.f32 %v244, %v244
    %v374 = vmul.f32 %v249, %v249
    %v375 = vmul.f32 %v252, %v252
    %v376 = vmul.f32 %v257, %v257
    %v377 = vmul.f32 %v260, %v260
    %v378 = vmul.f32 %v265, %v265
    %v379 = vmul.f32 %v268, %v268
    %v380 = vmul.f32 %v273, %v273
    %v381 = vmul.f32 %v276, %v276
    %v382 = vmul.f32 %v281, %v281
    %v383 = vmul.f32 %v284, %v284
    %v384 = vsel %vm287, %v360, 0.0
    %385 = vadd.xlane.f32.xlu0 %v384
    %v386 = vpop.xlane.xlu0 %385
    %v387 = vsel %vm287, %v361, 0.0
    %388 = vadd.xlane.f32.xlu0 %v387
    %v389 = vpop.xlane.xlu0 %388
    %v390 = vsel %vm287, %v362, 0.0
    %391 = vadd.xlane.f32.xlu0 %v390
    %v392 = vpop.xlane.xlu0 %391
    %v393 = vsel %vm287, %v363, 0.0
    %394 = vadd.xlane.f32.xlu0 %v393
    %v395 = vpop.xlane.xlu0 %394
    %v396 = vsel %vm287, %v364, 0.0
    %397 = vadd.xlane.f32.xlu0 %v396
    %v398 = vpop.xlane.xlu0 %397
    %v399 = vsel %vm287, %v365, 0.0
    %400 = vadd.xlane.f32.xlu0 %v399
    %v401 = vpop.xlane.xlu0 %400
    %v402 = vsel %vm287, %v366, 0.0
    %403 = vadd.xlane.f32.xlu0 %v402
    %v404 = vpop.xlane.xlu0 %403
    %v405 = vsel %vm287, %v367, 0.0
    %406 = vadd.xlane.f32.xlu0 %v405
    %v407 = vpop.xlane.xlu0 %406
    %v408 = vsel %vm287, %v368, 0.0
    %409 = vadd.xlane.f32.xlu0 %v408
    %v410 = vpop.xlane.xlu0 %409
    %v411 = vsel %vm287, %v369, 0.0
    %412 = vadd.xlane.f32.xlu0 %v411
    %v413 = vpop.xlane.xlu0 %412
    %v414 = vsel %vm287, %v370, 0.0
    %415 = vadd.xlane.f32.xlu0 %v414
    %v416 = vpop.xlane.xlu0 %415
    %v417 = vsel %vm287, %v371, 0.0
    %418 = vadd.xlane.f32.xlu0 %v417
    %v419 = vpop.xlane.xlu0 %418
    %v420 = vsel %vm287, %v372, 0.0
    %421 = vadd.xlane.f32.xlu0 %v420
    %v422 = vpop.xlane.xlu0 %421
    %v423 = vsel %vm287, %v373, 0.0
    %424 = vadd.xlane.f32.xlu0 %v423
    %v425 = vpop.xlane.xlu0 %424
    %v426 = vsel %vm287, %v374, 0.0
    %427 = vadd.xlane.f32.xlu0 %v426
    %v428 = vpop.xlane.xlu0 %427
    %v429 = vsel %vm287, %v375, 0.0
    %430 = vadd.xlane.f32.xlu0 %v429
    %v431 = vpop.xlane.xlu0 %430
    %v432 = vsel %vm287, %v376, 0.0
    %433 = vadd.xlane.f32.xlu0 %v432
    %v434 = vpop.xlane.xlu0 %433
    %v435 = vsel %vm287, %v377, 0.0
    %436 = vadd.xlane.f32.xlu0 %v435
    %v437 = vpop.xlane.xlu0 %436
    %v438 = vsel %vm287, %v378, 0.0
    %439 = vadd.xlane.f32.xlu0 %v438
    %v440 = vpop.xlane.xlu0 %439
    %v441 = vsel %vm287, %v379, 0.0
    %442 = vadd.xlane.f32.xlu0 %v441
    %v443 = vpop.xlane.xlu0 %442
    %v444 = vsel %vm287, %v380, 0.0
    %445 = vadd.xlane.f32.xlu0 %v444
    %v446 = vpop.xlane.xlu0 %445
    %v447 = vsel %vm287, %v381, 0.0
    %448 = vadd.xlane.f32.xlu0 %v447
    %v449 = vpop.xlane.xlu0 %448
    %v450 = vsel %vm287, %v382, 0.0
    %451 = vadd.xlane.f32.xlu0 %v450
    %v452 = vpop.xlane.xlu0 %451
    %v453 = vsel %vm287, %v383, 0.0
    %454 = vadd.xlane.f32.xlu0 %v453
    %v455 = vpop.xlane.xlu0 %454
    %v458 = vrot.slane %v293, 4
    %v459 = vrot.slane %v296, 4
    %v460 = vsel %vm154, %v458, %v459
    %v463 = vadd.f32 %v290, %v460
    %v464 = vadd.f32 %v293, %v459
    %v467 = vrot.slane %v389, 4
    %v468 = vrot.slane %v392, 4
    %v469 = vsel %vm154, %v467, %v468
    %v472 = vadd.f32 %v386, %v469
    %v473 = vadd.f32 %v389, %v468
    %v474 = vadd.f32 %v463, %v299
    %v475 = vadd.f32 %v464, %v302
    %v476 = vadd.f32 %v472, %v395
    %v477 = vadd.f32 %v473, %v398
    %v480 = vrot.slane %v302, 4
    %v481 = vrot.slane %v305, 4
    %v482 = vsel %vm154, %v480, %v481
    %v485 = vadd.f32 %v474, %v482
    %v486 = vadd.f32 %v475, %v481
    %v489 = vrot.slane %v398, 4
    %v490 = vrot.slane %v401, 4
    %v491 = vsel %vm154, %v489, %v490
    %v494 = vadd.f32 %v476, %v491
    %v495 = vadd.f32 %v477, %v490
    %v496 = vadd.f32 %v485, %v308
    %v497 = vadd.f32 %v486, %v311
    %v498 = vadd.f32 %v494, %v404
    %v499 = vadd.f32 %v495, %v407
    %v502 = vrot.slane %v311, 4
    %v503 = vrot.slane %v314, 4
    %v504 = vsel %vm154, %v502, %v503
    %v507 = vadd.f32 %v496, %v504
    %v508 = vadd.f32 %v497, %v503
    %v511 = vrot.slane %v407, 4
    %v512 = vrot.slane %v410, 4
    %v513 = vsel %vm154, %v511, %v512
    %v516 = vadd.f32 %v498, %v513
    %v517 = vadd.f32 %v499, %v512
    %v518 = vadd.f32 %v507, %v317
    %v519 = vadd.f32 %v508, %v320
    %v520 = vadd.f32 %v516, %v413
    %v521 = vadd.f32 %v517, %v416
    %v524 = vrot.slane %v320, 4
    %v525 = vrot.slane %v323, 4
    %v526 = vsel %vm154, %v524, %v525
    %v529 = vadd.f32 %v518, %v526
    %v530 = vadd.f32 %v519, %v525
    %v533 = vrot.slane %v416, 4
    %v534 = vrot.slane %v419, 4
    %v535 = vsel %vm154, %v533, %v534
    %v538 = vadd.f32 %v520, %v535
    %v539 = vadd.f32 %v521, %v534
    %v540 = vadd.f32 %v529, %v326
    %v541 = vadd.f32 %v530, %v329
    %v542 = vadd.f32 %v538, %v422
    %v543 = vadd.f32 %v539, %v425
    %v546 = vrot.slane %v329, 4
    %v547 = vrot.slane %v332, 4
    %v548 = vsel %vm154, %v546, %v547
    %v551 = vadd.f32 %v540, %v548
    %v552 = vadd.f32 %v541, %v547
    %v555 = vrot.slane %v425, 4
    %v556 = vrot.slane %v428, 4
    %v557 = vsel %vm154, %v555, %v556
    %v560 = vadd.f32 %v542, %v557
    %v561 = vadd.f32 %v543, %v556
    %v562 = vadd.f32 %v551, %v335
    %v563 = vadd.f32 %v552, %v338
    %v564 = vadd.f32 %v560, %v431
    %v565 = vadd.f32 %v561, %v434
    %v568 = vrot.slane %v338, 4
    %v569 = vrot.slane %v341, 4
    %v570 = vsel %vm154, %v568, %v569
    %v573 = vadd.f32 %v562, %v570
    %v574 = vadd.f32 %v563, %v569
    %v577 = vrot.slane %v434, 4
    %v578 = vrot.slane %v437, 4
    %v579 = vsel %vm154, %v577, %v578
    %v582 = vadd.f32 %v564, %v579
    %v583 = vadd.f32 %v565, %v578
    %v584 = vadd.f32 %v573, %v344
    %v585 = vadd.f32 %v574, %v347
    %v586 = vadd.f32 %v582, %v440
    %v587 = vadd.f32 %v583, %v443
    %v590 = vrot.slane %v347, 4
    %v591 = vrot.slane %v350, 4
    %v592 = vsel %vm154, %v590, %v591
    %v595 = vadd.f32 %v584, %v592
    %v596 = vadd.f32 %v585, %v591
    %v599 = vrot.slane %v443, 4
    %v600 = vrot.slane %v446, 4
    %v601 = vsel %vm154, %v599, %v600
    %v604 = vadd.f32 %v586, %v601
    %v605 = vadd.f32 %v587, %v600
    %v606 = vadd.f32 %v595, %v353
    %v607 = vadd.f32 %v596, %v356
    %v608 = vadd.f32 %v604, %v449
    %v609 = vadd.f32 %v605, %v452
    %v612 = vrot.slane %v356, 4
    %v613 = vrot.slane %v359, 4
    %v614 = vsel %vm154, %v612, %v613
    %v617 = vadd.f32 %v606, %v614
    %v618 = vadd.f32 %v607, %v613
    %v621 = vrot.slane %v452, 4
    %v622 = vrot.slane %v455, 4
    %v623 = vsel %vm154, %v621, %v622
    %v626 = vadd.f32 %v608, %v623
    %v627 = vadd.f32 %v609, %v622
    %v628 = vmul.f32 %v617, 0.03125
    %v629 = vmul.f32 %v618, 0.03125
    %v630 = vmul.f32 %v626, 0.03125
    %v631 = vmul.f32 %v627, 0.03125
    %v632 = vmul.f32 %v628, %v628
    %v633 = vmul.f32 %v629, %v629
    %v634 = vsub.f32 %v630, %v632
    %v635 = vsub.f32 %v631, %v633
    %v636 = vld [vmem:[%s2] sm:$0xff]
    %v637 = vld [vmem:[%s2 + $0x8] sm:$0xf]
    %v638 = vadd.f32 %v634, 1e-05
    %v639 = vadd.f32 %v635, 1e-05
    %v640 = vrsqrt.pop %v638
    %v641 = vrsqrt.pop %v639
    %v642 = vmul.f32 %v636, %v640
    %v643 = vmul.f32 %v637, %v641
    %v644 = vld [vmem:[%s3] sm:$0xff]
    %v645 = vld [vmem:[%s3 + $0x8] sm:$0xf]
    %v646 = vmul.f32 %v628, %v642
    %v647 = vmul.f32 %v629, %v643
    %v648 = vsub.f32 %v644, %v646
    %v649 = vsub.f32 %v645, %v647
    %v652 = vrot.slane %v642, 4
    %v653 = vrot.slane %v643, 4
    %v654 = vsel %vm154, %v652, %v653
    %v656 = vsel %vm154, %v643, %v652
    %v659 = vrot.slane %v648, 4
    %v660 = vrot.slane %v649, 4
    %v661 = vsel %vm154, %v659, %v660
    %v663 = vsel %vm154, %v649, %v659
    %664 = vset.pattern.permute.xlu0 0
    %665 = vperm.xlu0 %664, %v642
    %v666 = vpop.permute.xlu0 %665
    %669 = vset.pattern.permute.xlu0 0
    %670 = vperm.xlu0 %669, %v656
    %v671 = vpop.permute.xlu0 %670
    %673 = vset.pattern.permute.xlu0 0
    %674 = vperm.xlu0 %673, %v654
    %v675 = vpop.permute.xlu0 %674
    %v677 = vmul.f32 %v193, %v666
    %v678 = vmul.f32 %v196, %v671
    %v679 = vmul.f32 %v201, %v675
    %v680 = vmul.f32 %v204, %v666
    %v681 = vmul.f32 %v209, %v671
    %v682 = vmul.f32 %v212, %v675
    %v683 = vmul.f32 %v217, %v666
    %v684 = vmul.f32 %v220, %v671
    %v685 = vmul.f32 %v225, %v675
    %v686 = vmul.f32 %v228, %v666
    %v687 = vmul.f32 %v233, %v671
    %v688 = vmul.f32 %v236, %v675
    %v689 = vmul.f32 %v241, %v666
    %v690 = vmul.f32 %v244, %v671
    %v691 = vmul.f32 %v249, %v675
    %v692 = vmul.f32 %v252, %v666
    %v693 = vmul.f32 %v257, %v671
    %v694 = vmul.f32 %v260, %v675
    %v695 = vmul.f32 %v265, %v666
    %v696 = vmul.f32 %v268, %v671
    %v697 = vmul.f32 %v273, %v675
    %v698 = vmul.f32 %v276, %v666
    %v699 = vmul.f32 %v281, %v671
    %v700 = vmul.f32 %v284, %v675
    %701 = vset.pattern.permute.xlu0 0
    %702 = vperm.xlu0 %701, %v648
    %v703 = vpop.permute.xlu0 %702
    %706 = vset.pattern.permute.xlu0 0
    %707 = vperm.xlu0 %706, %v663
    %v708 = vpop.permute.xlu0 %707
    %710 = vset.pattern.permute.xlu0 0
    %711 = vperm.xlu0 %710, %v661
    %v712 = vpop.permute.xlu0 %711
    %v714 = vadd.f32 %v677, %v703
    %v715 = vadd.f32 %v678, %v708
    %v716 = vadd.f32 %v679, %v712
    %v717 = vadd.f32 %v680, %v703
    %v718 = vadd.f32 %v681, %v708
    %v719 = vadd.f32 %v682, %v712
    %v720 = vadd.f32 %v683, %v703
    %v721 = vadd.f32 %v684, %v708
    %v722 = vadd.f32 %v685, %v712
    %v723 = vadd.f32 %v686, %v703
    %v724 = vadd.f32 %v687, %v708
    %v725 = vadd.f32 %v688, %v712
    %v726 = vadd.f32 %v689, %v703
    %v727 = vadd.f32 %v690, %v708
    %v728 = vadd.f32 %v691, %v712
    %v729 = vadd.f32 %v692, %v703
    %v730 = vadd.f32 %v693, %v708
    %v731 = vadd.f32 %v694, %v712
    %v732 = vadd.f32 %v695, %v703
    %v733 = vadd.f32 %v696, %v708
    %v734 = vadd.f32 %v697, %v712
    %v735 = vadd.f32 %v698, %v703
    %v736 = vadd.f32 %v699, %v708
    %v737 = vadd.f32 %v700, %v712
    %v738 = vmax.f32 %v714, 0.0
    %v739 = vmax.f32 %v715, 0.0
    %v740 = vmax.f32 %v716, 0.0
    %v741 = vmax.f32 %v717, 0.0
    %v742 = vmax.f32 %v718, 0.0
    %v743 = vmax.f32 %v719, 0.0
    %v744 = vmax.f32 %v720, 0.0
    %v745 = vmax.f32 %v721, 0.0
    %v746 = vmax.f32 %v722, 0.0
    %v747 = vmax.f32 %v723, 0.0
    %v748 = vmax.f32 %v724, 0.0
    %v749 = vmax.f32 %v725, 0.0
    %v750 = vmax.f32 %v726, 0.0
    %v751 = vmax.f32 %v727, 0.0
    %v752 = vmax.f32 %v728, 0.0
    %v753 = vmax.f32 %v729, 0.0
    %v754 = vmax.f32 %v730, 0.0
    %v755 = vmax.f32 %v731, 0.0
    %v756 = vmax.f32 %v732, 0.0
    %v757 = vmax.f32 %v733, 0.0
    %v758 = vmax.f32 %v734, 0.0
    %v759 = vmax.f32 %v735, 0.0
    %v760 = vmax.f32 %v736, 0.0
    %v761 = vmax.f32 %v737, 0.0
    %v762 = vpack.c.bf16 %v739, %v738
    %v763 = vpack.c.bf16 %v741, %v740
    %v764 = vpack.c.bf16 %v743, %v742
    %v765 = vpack.c.bf16 %v745, %v744
    %v766 = vpack.c.bf16 %v747, %v746
    %v767 = vpack.c.bf16 %v749, %v748
    %v768 = vpack.c.bf16 %v751, %v750
    %v769 = vpack.c.bf16 %v753, %v752
    %v770 = vpack.c.bf16 %v755, %v754
    %v771 = vpack.c.bf16 %v757, %v756
    %v772 = vpack.c.bf16 %v759, %v758
    %v773 = vpack.c.bf16 %v761, %v760
    %v786 = vunpack.c.l.b16 %v762
    %v787 = vunpack.c.h.b16 %v762
    %v788 = vunpack.c.l.b16 %v763
    %v789 = vunpack.c.h.b16 %v763
    %v790 = vunpack.c.l.b16 %v764
    %v791 = vunpack.c.h.b16 %v764
    %v792 = vunpack.c.l.b16 %v765
    %v793 = vunpack.c.h.b16 %v765
    %v794 = vunpack.c.l.b16 %v766
    %v795 = vunpack.c.h.b16 %v766
    %v796 = vunpack.c.l.b16 %v767
    %v797 = vunpack.c.h.b16 %v767
    %v798 = vunpack.c.l.b16 %v768
    %v799 = vunpack.c.h.b16 %v768
    %v800 = vunpack.c.l.b16 %v769
    %v801 = vunpack.c.h.b16 %v769
    %v802 = vunpack.c.l.b16 %v770
    %v803 = vunpack.c.h.b16 %v770
    %v804 = vunpack.c.l.b16 %v771
    %v805 = vunpack.c.h.b16 %v771
    %v806 = vunpack.c.l.b16 %v772
    %v807 = vunpack.c.h.b16 %v772
    %v808 = vunpack.c.l.b16 %v773
    %v809 = vunpack.c.h.b16 %v773
    %v810 = vpack.c.b16 %v786, %v786
    %v811 = vpack.c.b16 %v787, %v787
    %v812 = vpack.c.b16 %v788, %v788
    %v813 = vpack.c.b16 %v789, %v789
    %v814 = vpack.c.b16 %v790, %v790
    %v815 = vpack.c.b16 %v791, %v791
    %v816 = vpack.c.b16 %v792, %v792
    %v817 = vpack.c.b16 %v793, %v793
    %v818 = vpack.c.b16 %v794, %v794
    %v819 = vpack.c.b16 %v795, %v795
    %v820 = vpack.c.b16 %v796, %v796
    %v821 = vpack.c.b16 %v797, %v797
    %v822 = vpack.c.b16 %v798, %v798
    %v823 = vpack.c.b16 %v799, %v799
    %v824 = vpack.c.b16 %v800, %v800
    %v825 = vpack.c.b16 %v801, %v801
    %v826 = vpack.c.b16 %v802, %v802
    %v827 = vpack.c.b16 %v803, %v803
    %v828 = vpack.c.b16 %v804, %v804
    %v829 = vpack.c.b16 %v805, %v805
    %v830 = vpack.c.b16 %v806, %v806
    %v831 = vpack.c.b16 %v807, %v807
    %v832 = vpack.c.b16 %v808, %v808
    %v833 = vpack.c.b16 %v809, %v809
    %vm858 = vcmask 11264
    %859 = vst.msk [vmem:[%s4] sm:$0xf] %vm858, %v810
    %860 = vst.msk [vmem:[%s4 + $0x4] sm:$0xf] %vm858, %v811
    %861 = vst.msk [vmem:[%s4 + $0x8] sm:$0xf] %vm858, %v812
    %862 = vst.msk [vmem:[%s4 + $0xc] sm:$0xf] %vm858, %v813
    %863 = vst.msk [vmem:[%s4 + $0x10] sm:$0xf] %vm858, %v814
    %864 = vst.msk [vmem:[%s4 + $0x14] sm:$0xf] %vm858, %v815
    %865 = vst.msk [vmem:[%s4 + $0x18] sm:$0xf] %vm858, %v816
    %866 = vst.msk [vmem:[%s4 + $0x1c] sm:$0xf] %vm858, %v817
    %867 = vst.msk [vmem:[%s4 + $0x20] sm:$0xf] %vm858, %v818
    %868 = vst.msk [vmem:[%s4 + $0x24] sm:$0xf] %vm858, %v819
    %869 = vst.msk [vmem:[%s4 + $0x28] sm:$0xf] %vm858, %v820
    %870 = vst.msk [vmem:[%s4 + $0x2c] sm:$0xf] %vm858, %v821
    %871 = vst.msk [vmem:[%s4 + $0x30] sm:$0xf] %vm858, %v822
    %872 = vst.msk [vmem:[%s4 + $0x34] sm:$0xf] %vm858, %v823
    %873 = vst.msk [vmem:[%s4 + $0x38] sm:$0xf] %vm858, %v824
    %874 = vst.msk [vmem:[%s4 + $0x3c] sm:$0xf] %vm858, %v825
    %875 = vst.msk [vmem:[%s4 + $0x40] sm:$0xf] %vm858, %v826
    %876 = vst.msk [vmem:[%s4 + $0x44] sm:$0xf] %vm858, %v827
    %877 = vst.msk [vmem:[%s4 + $0x48] sm:$0xf] %vm858, %v828
    %878 = vst.msk [vmem:[%s4 + $0x4c] sm:$0xf] %vm858, %v829
    %879 = vst.msk [vmem:[%s4 + $0x50] sm:$0xf] %vm858, %v830
    %880 = vst.msk [vmem:[%s4 + $0x54] sm:$0xf] %vm858, %v831
    %881 = vst.msk [vmem:[%s4 + $0x58] sm:$0xf] %vm858, %v832
    %882 = vst.msk [vmem:[%s4 + $0x5c] sm:$0xf] %vm858, %v833
    // Predicated region
    $region22: #{_lambda_.5} parent=1 // pred_check
      _
    $region23: #{_lambda_.5} parent=1 // pred_check_branch
      %884 = sbr.rel (0) target = $region25
    $region24: #{_lambda_.5} parent=1 // pred_region
      _
    $region25: #{_lambda_.5} parent=1 // pred_fallthru
      _
    // Predicated region
    $region26: #{_lambda_.5} parent=1 // pred_check
      _
    $region27: #{_lambda_.5} parent=1 // pred_check_branch
      %886 = sbr.rel (0) target = $region29
    $region28: #{_lambda_.5} parent=1 // pred_region
      _
    $region29: #{_lambda_.5} parent=1 // pred_fallthru
      _
    %887 = vsyncpa [#allocation3], 1

// kernel: _lambda_.6
$region0: #{_lambda_.6}
  #allocation0 [shape = 'u32[]', space=smem, size = 0x4, offset = 0x4, fixed_abs, tag = 'smem constant byte address 0x4 - core index']
  #allocation1 [shape = 'u32[144,128]{1,0:T(1,128)}', space=vmem, size = 0x12000, scoped, tag = 'internal scratch']
  %s0 = inlined_call_operand.hbm [shape: bf16[80,108], index: 0, kind: input, shape index: {}]
  %s1 = inlined_call_operand.vmem [shape: bf16[108,32], index: 1, kind: input, shape index: {}]
  %s2 = inlined_call_operand.vmem [shape: f32[20,1], index: 2, kind: input, shape index: {}]
  %s3 = inlined_call_operand.vmem [shape: f32[20,1], index: 3, kind: input, shape index: {}]
  %s4 = inlined_call_operand.vmem [shape: bf16[80,32], index: 4, kind: output, shape index: {}]
  %s5 = sld [smem:[#allocation0]]
  $region30: #{_lambda_.6} parent=0
    _
  %s7 = ssub.s32 1, %s5
  %s8 = scalar_select 0, %s7, %s5
  $region1: #{_lambda_.6} parent=0
    #allocation2 [shape = 'u8[20480]{0}', space=vmem, size = 0x5000, scoped, tag = 'input window, operand 0, single buffered']
    #allocation3 [shape = 's32[1]{0}', space=sflag, size = 0x4, scoped, tag = 'scoped memory for _lambda_.6']
    %9 = vsyncpa [#allocation3], 0
    // Predicated region
    $region2: #{_lambda_.6} parent=1 // pred_check
      _
    $region3: #{_lambda_.6} parent=1 // pred_check_branch
      %11 = sbr.rel (0) target = $region5
    $region4: #{_lambda_.6} parent=1 // pred_region
      %s13 = ssub.s32 640, 640
      %14 = vsyncadd [#allocation3], %s13
      %s15 = sshll.u32 [#allocation2], 4
      %s16 = int_to_ptr.vmem [resolvable:$true] %s15
      %21 = dma.hbm_to_vmem [thread:$0]  %s0, 640, %s16, [#allocation3], 64, 64, 4
    $region5: #{_lambda_.6} parent=1 // pred_fallthru
      _
    // Predicated region
    $region6: #{_lambda_.6} parent=1 // pred_check
      _
    $region7: #{_lambda_.6} parent=1 // pred_check_branch
      %23 = sbr.rel (0) target = $region9
    $region8: #{_lambda_.6} parent=1 // pred_region
      _
    $region9: #{_lambda_.6} parent=1 // pred_fallthru
      _
    // Predicated region
    $region10: #{_lambda_.6} parent=1 // pred_check
      _
    $region11: #{_lambda_.6} parent=1 // pred_check_branch
      %25 = sbr.rel (0) target = $region13
    $region12: #{_lambda_.6} parent=1 // pred_region
      _
    $region13: #{_lambda_.6} parent=1 // pred_fallthru
      _
    // Predicated region
    $region14: #{_lambda_.6} parent=1 // pred_check
      _
    $region15: #{_lambda_.6} parent=1 // pred_check_branch
      %27 = sbr.rel (0) target = $region17
    $region16: #{_lambda_.6} parent=1 // pred_region
      _
    $region17: #{_lambda_.6} parent=1 // pred_fallthru
      _
    // Predicated region
    $region18: #{_lambda_.6} parent=1 // pred_check
      _
    $region19: #{_lambda_.6} parent=1 // pred_check_branch
      %29 = sbr.rel (0) target = $region21
    $region20: #{_lambda_.6} parent=1 // pred_region
      %30 = dma.done [#allocation3], 640
    $region21: #{_lambda_.6} parent=1 // pred_fallthru
      _
    %v32 = vld [vmem:[#allocation2] sm:$0xf]
    %v33 = vld [vmem:[#allocation2 + $0x4] sm:$0xf]
    %v34 = vld [vmem:[#allocation2 + $0x8] sm:$0xf]
    %v35 = vld [vmem:[#allocation2 + $0xc] sm:$0xf]
    %v36 = vld [vmem:[#allocation2 + $0x10] sm:$0xf]
    %v37 = vld [vmem:[#allocation2 + $0x14] sm:$0xf]
    %v38 = vld [vmem:[#allocation2 + $0x18] sm:$0xf]
    %v39 = vld [vmem:[#allocation2 + $0x1c] sm:$0xf]
    %v40 = vld [vmem:[#allocation2 + $0x20] sm:$0xf]
    %v41 = vld [vmem:[#allocation2 + $0x24] sm:$0xf]
    %v42 = vld [vmem:[%s1] sm:$0xf]
    %v43 = vld [vmem:[%s1 + $0x4] sm:$0xf]
    %v44 = vld [vmem:[%s1 + $0x8] sm:$0xf]
    %v45 = vld [vmem:[%s1 + $0xc] sm:$0xf]
    %v46 = vld [vmem:[%s1 + $0x10] sm:$0xf]
    %v47 = vld [vmem:[%s1 + $0x14] sm:$0xf]
    %v48 = vld [vmem:[%s1 + $0x18] sm:$0xf]
    %v49 = vld [vmem:[%s1 + $0x1c] sm:$0xf]
    %v50 = vld [vmem:[%s1 + $0x20] sm:$0xf]
    %v51 = vld [vmem:[%s1 + $0x24] sm:$0xf]
    %v52 = vld [vmem:[%s1 + $0x28] sm:$0xf]
    %v53 = vld [vmem:[%s1 + $0x2c] sm:$0xf]
    %v54 = vld [vmem:[%s1 + $0x30] sm:$0xf]
    %v55 = vld [vmem:[%s1 + $0x34] sm:$0x3]
    %v66 = vunpack.c.l.b16 %v32
    %v67 = vunpack.c.l.b16 %v33
    %v68 = vunpack.c.l.b16 %v34
    %v69 = vunpack.c.l.b16 %v35
    %v70 = vunpack.c.l.b16 %v36
    %v71 = vunpack.c.l.b16 %v37
    %v72 = vunpack.c.l.b16 %v38
    %v73 = vunpack.c.l.b16 %v39
    %v74 = vunpack.c.l.b16 %v40
    %v75 = vunpack.c.l.b16 %v41
    %v76 = vpack.c.b16 %v67, %v66
    %v77 = vpack.c.b16 %v69, %v68
    %v78 = vpack.c.b16 %v71, %v70
    %v79 = vpack.c.b16 %v73, %v72
    %v80 = vpack.c.b16 %v75, %v74
    %v95 = vunpack.c.l.b16 %v42
    %v96 = vunpack.c.l.b16 %v43
    %v97 = vunpack.c.l.b16 %v44
    %v98 = vunpack.c.l.b16 %v45
    %v99 = vunpack.c.l.b16 %v46
    %v100 = vunpack.c.l.b16 %v47
    %v101 = vunpack.c.l.b16 %v48
    %v102 = vunpack.c.l.b16 %v49
    %v103 = vunpack.c.l.b16 %v50
    %v104 = vunpack.c.l.b16 %v51
    %v105 = vunpack.c.l.b16 %v52
    %v106 = vunpack.c.l.b16 %v53
    %v107 = vunpack.c.l.b16 %v54
    %v108 = vunpack.c.l.b16 %v55
    %v109 = vpack.c.b16 %v96, %v95
    %v110 = vpack.c.b16 %v98, %v97
    %v111 = vpack.c.b16 %v100, %v99
    %v112 = vpack.c.b16 %v102, %v101
    %v113 = vpack.c.b16 %v104, %v103
    %v114 = vpack.c.b16 %v106, %v105
    %v115 = vpack.c.b16 %v108, %v107
    %vm122 = vcmask 883712
    %v124 = vsel %vm122, %v76, 0
    %v127 = vsel %vm122, %v77, 0
    %v130 = vsel %vm122, %v78, 0
    %v133 = vsel %vm122, %v79, 0
    %v136 = vsel %vm122, %v80, 0
    %vm138 = vcmask 1045504
    %v140 = vsel %vm138, %v115, 0
    %142 = vmatprep.subr.bf16.mxu0 0
    %143 = vmatpush1.bf16.msra.mxu0 0
    %144 = vmatprep.subr.bf16.mxu0 0
    %145 = vmatpush1.bf16.msra.mxu0 %v140
    %146 = vmatprep.subr.bf16.mxu0 0
    %147 = vmatpush1.bf16.msra.mxu0 %v114
    %148 = vmatprep.subr.bf16.mxu0 0
    %149 = vmatpush1.bf16.msra.mxu0 %v113
    %150 = vmatprep.subr.bf16.mxu0 0
    %151 = vmatpush1.bf16.msra.mxu0 %v112
    %152 = vmatprep.subr.bf16.mxu0 0
    %153 = vmatpush1.bf16.msra.mxu0 %v111
    %154 = vmatprep.subr.bf16.mxu0 0
    %155 = vmatpush1.bf16.msra.mxu0 %v110
    %156 = vmatprep.subr.bf16.mxu0 0
    %157 = vmatpush1.bf16.msra.mxu0 %v109
    %158 = vmatprep.subr.bf16.mxu0 0
    %159 = vmatpush2.bf16.msra.mxu0 0
    %160 = vmatprep.subr.bf16.mxu0 0
    %161 = vmatpush2.bf16.msra.mxu0 0
    %162 = vmatprep.subr.bf16.mxu0 0
    %163 = vmatpush2.bf16.msra.mxu0 0
    %164 = vmatprep.subr.bf16.mxu0 0
    %165 = vmatpush2.bf16.msra.mxu0 0
    %166 = vmatprep.subr.bf16.mxu0 0
    %167 = vmatpush2.bf16.msra.mxu0 0
    %168 = vmatprep.subr.bf16.mxu0 0
    %169 = vmatpush2.bf16.msra.mxu0 0
    %170 = vmatprep.subr.bf16.mxu0 0
    %171 = vmatpush2.bf16.msra.mxu0 0
    %172 = vmatprep.subr.bf16.mxu0 0
    %173 = vmatpush2.bf16.msra.mxu0 0
    %174 = vmatprep.mubr.bf16.mxu0 0
    %175 = vmatmul.mubr.bf16.gmra.mxu0 %v124
    %v176 = vpop.f32.mrf.mxu0
    %v177 = vadd.f32 0.0, %v176
    %v178 = vpop.f32.mrf.mxu0
    %v179 = vpop.f32.mrf.mxu0
    %v180 = vadd.f32 0.0, %v179
    %v181 = vpop.f32.mrf.mxu0
    %182 = vmatprep.mubr.bf16.mxu0 0
    %183 = vmatmul.mubr.bf16.gmra.mxu0 %v127
    %v184 = vpop.f32.mrf.mxu0
    %v185 = vadd.f32 0.0, %v184
    %v186 = vpop.f32.mrf.mxu0
    %v187 = vpop.f32.mrf.mxu0
    %v188 = vadd.f32 0.0, %v187
    %v189 = vpop.f32.mrf.mxu0
    %190 = vmatprep.mubr.bf16.mxu0 0
    %191 = vmatmul.mubr.bf16.gmra.mxu0 %v130
    %v192 = vpop.f32.mrf.mxu0
    %v193 = vadd.f32 0.0, %v192
    %v194 = vpop.f32.mrf.mxu0
    %v195 = vpop.f32.mrf.mxu0
    %v196 = vadd.f32 0.0, %v195
    %v197 = vpop.f32.mrf.mxu0
    %198 = vmatprep.mubr.bf16.mxu0 0
    %199 = vmatmul.mubr.bf16.gmra.mxu0 %v133
    %v200 = vpop.f32.mrf.mxu0
    %v201 = vadd.f32 0.0, %v200
    %v202 = vpop.f32.mrf.mxu0
    %v203 = vpop.f32.mrf.mxu0
    %v204 = vadd.f32 0.0, %v203
    %v205 = vpop.f32.mrf.mxu0
    %206 = vmatprep.mubr.bf16.mxu0 0
    %207 = vmatmul.mubr.bf16.gmra.mxu0 %v136
    %v208 = vpop.f32.mrf.mxu0
    %v209 = vadd.f32 0.0, %v208
    %v210 = vpop.f32.mrf.mxu0
    %v211 = vpop.f32.mrf.mxu0
    %v212 = vadd.f32 0.0, %v211
    %v213 = vpop.f32.mrf.mxu0
    %214 = vdwg.mxu0
    %vm215 = vcmask 261120
    %v216 = vsel %vm215, %v177, 0.0
    %217 = vadd.xlane.f32.xlu0 %v216
    %v218 = vpop.xlane.xlu0 %217
    %v219 = vsel %vm215, %v180, 0.0
    %220 = vadd.xlane.f32.xlu0 %v219
    %v221 = vpop.xlane.xlu0 %220
    %v222 = vsel %vm215, %v185, 0.0
    %223 = vadd.xlane.f32.xlu0 %v222
    %v224 = vpop.xlane.xlu0 %223
    %v225 = vsel %vm215, %v188, 0.0
    %226 = vadd.xlane.f32.xlu0 %v225
    %v227 = vpop.xlane.xlu0 %226
    %v228 = vsel %vm215, %v193, 0.0
    %229 = vadd.xlane.f32.xlu0 %v228
    %v230 = vpop.xlane.xlu0 %229
    %v231 = vsel %vm215, %v196, 0.0
    %232 = vadd.xlane.f32.xlu0 %v231
    %v233 = vpop.xlane.xlu0 %232
    %v234 = vsel %vm215, %v201, 0.0
    %235 = vadd.xlane.f32.xlu0 %v234
    %v236 = vpop.xlane.xlu0 %235
    %v237 = vsel %vm215, %v204, 0.0
    %238 = vadd.xlane.f32.xlu0 %v237
    %v239 = vpop.xlane.xlu0 %238
    %v240 = vsel %vm215, %v209, 0.0
    %241 = vadd.xlane.f32.xlu0 %v240
    %v242 = vpop.xlane.xlu0 %241
    %v243 = vsel %vm215, %v212, 0.0
    %244 = vadd.xlane.f32.xlu0 %v243
    %v245 = vpop.xlane.xlu0 %244
    %v246 = vmul.f32 %v177, %v177
    %v247 = vmul.f32 %v180, %v180
    %v248 = vmul.f32 %v185, %v185
    %v249 = vmul.f32 %v188, %v188
    %v250 = vmul.f32 %v193, %v193
    %v251 = vmul.f32 %v196, %v196
    %v252 = vmul.f32 %v201, %v201
    %v253 = vmul.f32 %v204, %v204
    %v254 = vmul.f32 %v209, %v209
    %v255 = vmul.f32 %v212, %v212
    %v256 = vsel %vm215, %v246, 0.0
    %257 = vadd.xlane.f32.xlu0 %v256
    %v258 = vpop.xlane.xlu0 %257
    %v259 = vsel %vm215, %v247, 0.0
    %260 = vadd.xlane.f32.xlu0 %v259
    %v261 = vpop.xlane.xlu0 %260
    %v262 = vsel %vm215, %v248, 0.0
    %263 = vadd.xlane.f32.xlu0 %v262
    %v264 = vpop.xlane.xlu0 %263
    %v265 = vsel %vm215, %v249, 0.0
    %266 = vadd.xlane.f32.xlu0 %v265
    %v267 = vpop.xlane.xlu0 %266
    %v268 = vsel %vm215, %v250, 0.0
    %269 = vadd.xlane.f32.xlu0 %v268
    %v270 = vpop.xlane.xlu0 %269
    %v271 = vsel %vm215, %v251, 0.0
    %272 = vadd.xlane.f32.xlu0 %v271
    %v273 = vpop.xlane.xlu0 %272
    %v274 = vsel %vm215, %v252, 0.0
    %275 = vadd.xlane.f32.xlu0 %v274
    %v276 = vpop.xlane.xlu0 %275
    %v277 = vsel %vm215, %v253, 0.0
    %278 = vadd.xlane.f32.xlu0 %v277
    %v279 = vpop.xlane.xlu0 %278
    %v280 = vsel %vm215, %v254, 0.0
    %281 = vadd.xlane.f32.xlu0 %v280
    %v282 = vpop.xlane.xlu0 %281
    %v283 = vsel %vm215, %v255, 0.0
    %284 = vadd.xlane.f32.xlu0 %v283
    %v285 = vpop.xlane.xlu0 %284
    %vm289 = vcmask 1043456
    %v290 = vrot.slane %v224, 4
    %v291 = vrot.slane %v227, 4
    %v292 = vsel %vm289, %v290, %v291
    %v293 = vrot.slane %v230, 4
    %v294 = vsel %vm289, %v291, %v293
    %v298 = vadd.f32 %v218, %v292
    %v299 = vadd.f32 %v221, %v294
    %v300 = vadd.f32 %v224, %v293
    %v304 = vrot.slane %v264, 4
    %v305 = vrot.slane %v267, 4
    %v306 = vsel %vm289, %v304, %v305
    %v307 = vrot.slane %v270, 4
    %v308 = vsel %vm289, %v305, %v307
    %v312 = vadd.f32 %v258, %v306
    %v313 = vadd.f32 %v261, %v308
    %v314 = vadd.f32 %v264, %v307
    %v315 = vadd.f32 %v298, %v233
    %v316 = vadd.f32 %v299, %v236
    %v317 = vadd.f32 %v300, %v239
    %v318 = vadd.f32 %v312, %v273
    %v319 = vadd.f32 %v313, %v276
    %v320 = vadd.f32 %v314, %v279
    %v324 = vrot.slane %v239, 4
    %v325 = vrot.slane %v242, 4
    %v326 = vsel %vm289, %v324, %v325
    %v327 = vrot.slane %v245, 4
    %v328 = vsel %vm289, %v325, %v327
    %v332 = vadd.f32 %v315, %v326
    %v333 = vadd.f32 %v316, %v328
    %v334 = vadd.f32 %v317, %v327
    %v338 = vrot.slane %v279, 4
    %v339 = vrot.slane %v282, 4
    %v340 = vsel %vm289, %v338, %v339
    %v341 = vrot.slane %v285, 4
    %v342 = vsel %vm289, %v339, %v341
    %v346 = vadd.f32 %v318, %v340
    %v347 = vadd.f32 %v319, %v342
    %v348 = vadd.f32 %v320, %v341
    %v349 = vmul.f32 %v332, 0.0078125
    %v350 = vmul.f32 %v333, 0.0078125
    %v351 = vmul.f32 %v334, 0.0078125
    %v352 = vmul.f32 %v346, 0.0078125
    %v353 = vmul.f32 %v347, 0.0078125
    %v354 = vmul.f32 %v348, 0.0078125
    %v355 = vmul.f32 %v349, %v349
    %v356 = vmul.f32 %v350, %v350
    %v357 = vmul.f32 %v351, %v351
    %v358 = vsub.f32 %v352, %v355
    %v359 = vsub.f32 %v353, %v356
    %v360 = vsub.f32 %v354, %v357
    %v361 = vld [vmem:[%s2] sm:$0xff]
    %v362 = vld [vmem:[%s2 + $0x8] sm:$0xff]
    %v363 = vld [vmem:[%s2 + $0x10] sm:$0xf]
    %v364 = vadd.f32 %v358, 1e-05
    %v365 = vadd.f32 %v359, 1e-05
    %v366 = vadd.f32 %v360, 1e-05
    %v367 = vrsqrt.pop %v364
    %v368 = vrsqrt.pop %v365
    %v369 = vrsqrt.pop %v366
    %v370 = vmul.f32 %v361, %v367
    %v371 = vmul.f32 %v362, %v368
    %v372 = vmul.f32 %v363, %v369
    %v373 = vld [vmem:[%s3] sm:$0xff]
    %v374 = vld [vmem:[%s3 + $0x8] sm:$0xff]
    %v375 = vld [vmem:[%s3 + $0x10] sm:$0xf]
    %v376 = vmul.f32 %v349, %v370
    %v377 = vmul.f32 %v350, %v371
    %v378 = vmul.f32 %v351, %v372
    %v379 = vsub.f32 %v373, %v376
    %v380 = vsub.f32 %v374, %v377
    %v381 = vsub.f32 %v375, %v378
    %v385 = vrot.slane %v370, 4
    %v386 = vrot.slane %v371, 4
    %v387 = vsel %vm289, %v385, %v386
    %v388 = vrot.slane %v372, 4
    %v389 = vsel %vm289, %v386, %v388
    %v391 = vsel %vm289, %v372, %v385
    %v395 = vrot.slane %v379, 4
    %v396 = vrot.slane %v380, 4
    %v397 = vsel %vm289, %v395, %v396
    %v398 = vrot.slane %v381, 4
    %v399 = vsel %vm289, %v396, %v398
    %v401 = vsel %vm289, %v381, %v395
    %402 = vset.pattern.permute.xlu0 0
    %403 = vperm.xlu0 %402, %v370
    %v404 = vpop.permute.xlu0 %403
    %406 = vset.pattern.permute.xlu0 0
    %407 = vperm.xlu0 %406, %v371
    %v408 = vpop.permute.xlu0 %407
    %411 = vset.pattern.permute.xlu0 0
    %412 = vperm.xlu0 %411, %v391
    %v413 = vpop.permute.xlu0 %412
    %415 = vset.pattern.permute.xlu0 0
    %416 = vperm.xlu0 %415, %v387
    %v417 = vpop.permute.xlu0 %416
    %419 = vset.pattern.permute.xlu0 0
    %420 = vperm.xlu0 %419, %v389
    %v421 = vpop.permute.xlu0 %420
    %v423 = vmul.f32 %v177, %v404
    %v424 = vmul.f32 %v180, %v408
    %v425 = vmul.f32 %v185, %v413
    %v426 = vmul.f32 %v188, %v417
    %v427 = vmul.f32 %v193, %v421
    %v428 = vmul.f32 %v196, %v404
    %v429 = vmul.f32 %v201, %v408
    %v430 = vmul.f32 %v204, %v413
    %v431 = vmul.f32 %v209, %v417
    %v432 = vmul.f32 %v212, %v421
    %433 = vset.pattern.permute.xlu0 0
    %434 = vperm.xlu0 %433, %v379
    %v435 = vpop.permute.xlu0 %434
    %437 = vset.pattern.permute.xlu0 0
    %438 = vperm.xlu0 %437, %v380
    %v439 = vpop.permute.xlu0 %438
    %442 = vset.pattern.permute.xlu0 0
    %443 = vperm.xlu0 %442, %v401
    %v444 = vpop.permute.xlu0 %443
    %446 = vset.pattern.permute.xlu0 0
    %447 = vperm.xlu0 %446, %v397
    %v448 = vpop.permute.xlu0 %447
    %450 = vset.pattern.permute.xlu0 0
    %451 = vperm.xlu0 %450, %v399
    %v452 = vpop.permute.xlu0 %451
    %v454 = vadd.f32 %v423, %v435
    %v455 = vadd.f32 %v424, %v439
    %v456 = vadd.f32 %v425, %v444
    %v457 = vadd.f32 %v426, %v448
    %v458 = vadd.f32 %v427, %v452
    %v459 = vadd.f32 %v428, %v435
    %v460 = vadd.f32 %v429, %v439
    %v461 = vadd.f32 %v430, %v444
    %v462 = vadd.f32 %v431, %v448
    %v463 = vadd.f32 %v432, %v452
    %v464 = vmax.f32 %v454, 0.0
    %v465 = vmax.f32 %v455, 0.0
    %v466 = vmax.f32 %v456, 0.0
    %v467 = vmax.f32 %v457, 0.0
    %v468 = vmax.f32 %v458, 0.0
    %v469 = vmax.f32 %v459, 0.0
    %v470 = vmax.f32 %v460, 0.0
    %v471 = vmax.f32 %v461, 0.0
    %v472 = vmax.f32 %v462, 0.0
    %v473 = vmax.f32 %v463, 0.0
    %v474 = vpack.c.bf16 %v465, %v464
    %v475 = vpack.c.bf16 %v467, %v466
    %v476 = vpack.c.bf16 %v469, %v468
    %v477 = vpack.c.bf16 %v471, %v470
    %v478 = vpack.c.bf16 %v473, %v472
    %v484 = vunpack.c.l.b16 %v474
    %v485 = vunpack.c.h.b16 %v474
    %v486 = vunpack.c.l.b16 %v475
    %v487 = vunpack.c.h.b16 %v475
    %v488 = vunpack.c.l.b16 %v476
    %v489 = vunpack.c.h.b16 %v476
    %v490 = vunpack.c.l.b16 %v477
    %v491 = vunpack.c.h.b16 %v477
    %v492 = vunpack.c.l.b16 %v478
    %v493 = vunpack.c.h.b16 %v478
    %v494 = vpack.c.b16 %v484, %v484
    %v495 = vpack.c.b16 %v485, %v485
    %v496 = vpack.c.b16 %v486, %v486
    %v497 = vpack.c.b16 %v487, %v487
    %v498 = vpack.c.b16 %v488, %v488
    %v499 = vpack.c.b16 %v489, %v489
    %v500 = vpack.c.b16 %v490, %v490
    %v501 = vpack.c.b16 %v491, %v491
    %v502 = vpack.c.b16 %v492, %v492
    %v503 = vpack.c.b16 %v493, %v493
    %vm514 = vcmask 257024
    %515 = vst.msk [vmem:[%s4] sm:$0xf] %vm514, %v494
    %516 = vst.msk [vmem:[%s4 + $0x4] sm:$0xf] %vm514, %v495
    %517 = vst.msk [vmem:[%s4 + $0x8] sm:$0xf] %vm514, %v496
    %518 = vst.msk [vmem:[%s4 + $0xc] sm:$0xf] %vm514, %v497
    %519 = vst.msk [vmem:[%s4 + $0x10] sm:$0xf] %vm514, %v498
    %520 = vst.msk [vmem:[%s4 + $0x14] sm:$0xf] %vm514, %v499
    %521 = vst.msk [vmem:[%s4 + $0x18] sm:$0xf] %vm514, %v500
    %522 = vst.msk [vmem:[%s4 + $0x1c] sm:$0xf] %vm514, %v501
    %523 = vst.msk [vmem:[%s4 + $0x20] sm:$0xf] %vm514, %v502
    %524 = vst.msk [vmem:[%s4 + $0x24] sm:$0xf] %vm514, %v503
    // Predicated region
    $region22: #{_lambda_.6} parent=1 // pred_check
      _
    $region23: #{_lambda_.6} parent=1 // pred_check_branch
      %526 = sbr.rel (0) target = $region25
    $region24: #{_lambda_.6} parent=1 // pred_region
      _
    $region25: #{_lambda_.6} parent=1 // pred_fallthru
      _
    // Predicated region
    $region26: #{_lambda_.6} parent=1 // pred_check
      _
    $region27: #{_lambda_.6} parent=1 // pred_check_branch
      %528 = sbr.rel (0) target = $region29
    $region28: #{_lambda_.6} parent=1 // pred_region
      _
    $region29: #{_lambda_.6} parent=1 // pred_fallthru
      _
    %529 = vsyncpa [#allocation3], 1

// kernel: _lambda_.7
$region0: #{_lambda_.7}
  #allocation0 [shape = 'u32[]', space=smem, size = 0x4, offset = 0x4, fixed_abs, tag = 'smem constant byte address 0x4 - core index']
  #allocation1 [shape = 'u32[144,128]{1,0:T(1,128)}', space=vmem, size = 0x12000, scoped, tag = 'internal scratch']
  %s0 = inlined_call_operand.hbm [shape: bf16[100,180], index: 0, kind: input, shape index: {}]
  %s1 = inlined_call_operand.vmem [shape: bf16[180,128], index: 1, kind: input, shape index: {}]
  %s2 = inlined_call_operand.vmem [shape: f32[25,1], index: 2, kind: input, shape index: {}]
  %s3 = inlined_call_operand.vmem [shape: f32[25,1], index: 3, kind: input, shape index: {}]
  %s4 = inlined_call_operand.vmem [shape: bf16[100,128], index: 4, kind: output, shape index: {}]
  %s5 = sld [smem:[#allocation0]]
  $region30: #{_lambda_.7} parent=0
    _
  %s7 = ssub.s32 1, %s5
  %s8 = scalar_select 0, %s7, %s5
  $region1: #{_lambda_.7} parent=0
    #allocation2 [shape = 'u8[53248]{0}', space=vmem, size = 0xd000, scoped, tag = 'input window, operand 0, single buffered']
    #allocation3 [shape = 's32[1]{0}', space=sflag, size = 0x4, scoped, tag = 'scoped memory for _lambda_.7']
    %9 = vsyncpa [#allocation3], 0
    // Predicated region
    $region2: #{_lambda_.7} parent=1 // pred_check
      _
    $region3: #{_lambda_.7} parent=1 // pred_check_branch
      %11 = sbr.rel (0) target = $region5
    $region4: #{_lambda_.7} parent=1 // pred_region
      %s13 = ssub.s32 1664, 1664
      %14 = vsyncadd [#allocation3], %s13
      %s15 = sshll.u32 [#allocation2], 4
      %s16 = int_to_ptr.vmem [resolvable:$true] %s15
      %21 = dma.hbm_to_vmem [thread:$0]  %s0, 1664, %s16, [#allocation3], 128, 128, 8
    $region5: #{_lambda_.7} parent=1 // pred_fallthru
      _
    // Predicated region
    $region6: #{_lambda_.7} parent=1 // pred_check
      _
    $region7: #{_lambda_.7} parent=1 // pred_check_branch
      %23 = sbr.rel (0) target = $region9
    $region8: #{_lambda_.7} parent=1 // pred_region
      _
    $region9: #{_lambda_.7} parent=1 // pred_fallthru
      _
    // Predicated region
    $region10: #{_lambda_.7} parent=1 // pred_check
      _
    $region11: #{_lambda_.7} parent=1 // pred_check_branch
      %25 = sbr.rel (0) target = $region13
    $region12: #{_lambda_.7} parent=1 // pred_region
      _
    $region13: #{_lambda_.7} parent=1 // pred_fallthru
      _
    // Predicated region
    $region14: #{_lambda_.7} parent=1 // pred_check
      _
    $region15: #{_lambda_.7} parent=1 // pred_check_branch
      %27 = sbr.rel (0) target = $region17
    $region16: #{_lambda_.7} parent=1 // pred_region
      _
    $region17: #{_lambda_.7} parent=1 // pred_fallthru
      _
    // Predicated region
    $region18: #{_lambda_.7} parent=1 // pred_check
      _
    $region19: #{_lambda_.7} parent=1 // pred_check_branch
      %29 = sbr.rel (0) target = $region21
    $region20: #{_lambda_.7} parent=1 // pred_region
      %30 = dma.done [#allocation3], 1664
    $region21: #{_lambda_.7} parent=1 // pred_fallthru
      _
    %v32 = vld [vmem:[#allocation2] sm:$0xff]
    %v33 = vld [vmem:[#allocation2 + $0x8] sm:$0xff]
    %v34 = vld [vmem:[#allocation2 + $0x10] sm:$0xff]
    %v35 = vld [vmem:[#allocation2 + $0x18] sm:$0xff]
    %v36 = vld [vmem:[#allocation2 + $0x20] sm:$0xff]
    %v37 = vld [vmem:[#allocation2 + $0x28] sm:$0xff]
    %v38 = vld [vmem:[#allocation2 + $0x30] sm:$0xff]
    %v39 = vld [vmem:[#allocation2 + $0x38] sm:$0xff]
    %v40 = vld [vmem:[#allocation2 + $0x40] sm:$0xff]
    %v41 = vld [vmem:[#allocation2 + $0x48] sm:$0xff]
    %v42 = vld [vmem:[#allocation2 + $0x50] sm:$0xff]
    %v43 = vld [vmem:[#allocation2 + $0x58] sm:$0xff]
    %v44 = vld [vmem:[#allocation2 + $0x60] sm:$0x33]
    %v45 = vld [vmem:[%s1] sm:$0xf]
    %v46 = vld [vmem:[%s1 + $0x4] sm:$0xf]
    %v47 = vld [vmem:[%s1 + $0x8] sm:$0xf]
    %v48 = vld [vmem:[%s1 + $0xc] sm:$0xf]
    %v49 = vld [vmem:[%s1 + $0x10] sm:$0xf]
    %v50 = vld [vmem:[%s1 + $0x14] sm:$0xf]
    %v51 = vld [vmem:[%s1 + $0x18] sm:$0xf]
    %v52 = vld [vmem:[%s1 + $0x1c] sm:$0xf]
    %v53 = vld [vmem:[%s1 + $0x20] sm:$0xf]
    %v54 = vld [vmem:[%s1 + $0x24] sm:$0xf]
    %v55 = vld [vmem:[%s1 + $0x28] sm:$0xf]
    %v56 = vld [vmem:[%s1 + $0x2c] sm:$0xf]
    %v57 = vld [vmem:[%s1 + $0x30] sm:$0xf]
    %v58 = vld [vmem:[%s1 + $0x34] sm:$0xf]
    %v59 = vld [vmem:[%s1 + $0x38] sm:$0xf]
    %v60 = vld [vmem:[%s1 + $0x3c] sm:$0xf]
    %v61 = vld [vmem:[%s1 + $0x40] sm:$0xf]
    %v62 = vld [vmem:[%s1 + $0x44] sm:$0xf]
    %v63 = vld [vmem:[%s1 + $0x48] sm:$0xf]
    %v64 = vld [vmem:[%s1 + $0x4c] sm:$0xf]
    %v65 = vld [vmem:[%s1 + $0x50] sm:$0xf]
    %v66 = vld [vmem:[%s1 + $0x54] sm:$0xf]
    %v67 = vld [vmem:[%s1 + $0x58] sm:$0x3]
    %v81 = vunpack.c.l.b16 %v32
    %v82 = vunpack.c.h.b16 %v32
    %v83 = vunpack.c.l.b16 %v33
    %v84 = vunpack.c.h.b16 %v33
    %v85 = vunpack.c.l.b16 %v34
    %v86 = vunpack.c.h.b16 %v34
    %v87 = vunpack.c.l.b16 %v35
    %v88 = vunpack.c.h.b16 %v35
    %v89 = vunpack.c.l.b16 %v36
    %v90 = vunpack.c.h.b16 %v36
    %v91 = vunpack.c.l.b16 %v37
    %v92 = vunpack.c.h.b16 %v37
    %v93 = vunpack.c.l.b16 %v38
    %v94 = vunpack.c.h.b16 %v38
    %v95 = vunpack.c.l.b16 %v39
    %v96 = vunpack.c.h.b16 %v39
    %v97 = vunpack.c.l.b16 %v40
    %v98 = vunpack.c.h.b16 %v40
    %v99 = vunpack.c.l.b16 %v41
    %v100 = vunpack.c.h.b16 %v41
    %v101 = vunpack.c.l.b16 %v42
    %v102 = vunpack.c.h.b16 %v42
    %v103 = vunpack.c.l.b16 %v43
    %v104 = vunpack.c.h.b16 %v43
    %v105 = vunpack.c.l.b16 %v44
    %v106 = vunpack.c.h.b16 %v44
    %v107 = vpack.c.b16 %v83, %v81
    %v108 = vpack.c.b16 %v84, %v82
    %v109 = vpack.c.b16 %v87, %v85
    %v110 = vpack.c.b16 %v88, %v86
    %v111 = vpack.c.b16 %v91, %v89
    %v112 = vpack.c.b16 %v92, %v90
    %v113 = vpack.c.b16 %v95, %v93
    %v114 = vpack.c.b16 %v96, %v94
    %v115 = vpack.c.b16 %v99, %v97
    %v116 = vpack.c.b16 %v100, %v98
    %v117 = vpack.c.b16 %v103, %v101
    %v118 = vpack.c.b16 %v104, %v102
    %v119 = vpack.c.b16 %v105, %v105
    %v120 = vpack.c.b16 %v106, %v106
    %v151 = vunpack.c.l.b16 %v45
    %v152 = vunpack.c.l.b16 %v46
    %v153 = vunpack.c.l.b16 %v47
    %v154 = vunpack.c.l.b16 %v48
    %v155 = vunpack.c.l.b16 %v49
    %v156 = vunpack.c.l.b16 %v50
    %v157 = vunpack.c.l.b16 %v51
    %v158 = vunpack.c.l.b16 %v52
    %v159 = vunpack.c.l.b16 %v53
    %v160 = vunpack.c.l.b16 %v54
    %v161 = vunpack.c.l.b16 %v55
    %v162 = vunpack.c.l.b16 %v56
    %v163 = vunpack.c.l.b16 %v57
    %v164 = vunpack.c.l.b16 %v58
    %v165 = vunpack.c.l.b16 %v59
    %v166 = vunpack.c.l.b16 %v60
    %v167 = vunpack.c.l.b16 %v61
    %v168 = vunpack.c.l.b16 %v62
    %v169 = vunpack.c.l.b16 %v63
    %v170 = vunpack.c.l.b16 %v64
    %v171 = vunpack.c.l.b16 %v65
    %v172 = vunpack.c.l.b16 %v66
    %v173 = vunpack.c.l.b16 %v67
    %v174 = vpack.c.b16 %v152, %v151
    %v175 = vpack.c.b16 %v154, %v153
    %v176 = vpack.c.b16 %v156, %v155
    %v177 = vpack.c.b16 %v158, %v157
    %v178 = vpack.c.b16 %v160, %v159
    %v179 = vpack.c.b16 %v162, %v161
    %v180 = vpack.c.b16 %v164, %v163
    %v181 = vpack.c.b16 %v166, %v165
    %v182 = vpack.c.b16 %v168, %v167
    %v183 = vpack.c.b16 %v170, %v169
    %v184 = vpack.c.b16 %v172, %v171
    %v185 = vpack.c.b16 %v173, %v173
    %vm197 = vcmask 424960
    %v199 = vsel %vm197, %v108, 0
    %v202 = vsel %vm197, %v110, 0
    %v205 = vsel %vm197, %v112, 0
    %v208 = vsel %vm197, %v114, 0
    %v211 = vsel %vm197, %v116, 0
    %v214 = vsel %vm197, %v118, 0
    %v217 = vsel %vm197, %v120, 0
    %vm219 = vcmask 1041408
    %v221 = vsel %vm219, %v185, 0
    %223 = vmatprep.subr.bf16.mxu0 0
    %224 = vmatpush1.bf16.msra.mxu0 %v181
    %225 = vmatprep.subr.bf16.mxu0 0
    %226 = vmatpush1.bf16.msra.mxu0 %v180
    %227 = vmatprep.subr.bf16.mxu0 0
    %228 = vmatpush1.bf16.msra.mxu0 %v179
    %229 = vmatprep.subr.bf16.mxu0 0
    %230 = vmatpush1.bf16.msra.mxu0 %v178
    %231 = vmatprep.subr.bf16.mxu0 0
    %232 = vmatpush1.bf16.msra.mxu0 %v177
    %233 = vmatprep.subr.bf16.mxu0 0
    %234 = vmatpush1.bf16.msra.mxu0 %v176
    %235 = vmatprep.subr.bf16.mxu0 0
    %236 = vmatpush1.bf16.msra.mxu0 %v175
    %237 = vmatprep.subr.bf16.mxu0 0
    %238 = vmatpush1.bf16.msra.mxu0 %v174
    %239 = vmatprep.subr.bf16.mxu0 0
    %240 = vmatpush2.bf16.msra.mxu0 0
    %241 = vmatprep.subr.bf16.mxu0 0
    %242 = vmatpush2.bf16.msra.mxu0 0
    %243 = vmatprep.subr.bf16.mxu0 0
    %244 = vmatpush2.bf16.msra.mxu0 0
    %245 = vmatprep.subr.bf16.mxu0 0
    %246 = vmatpush2.bf16.msra.mxu0 0
    %247 = vmatprep.subr.bf16.mxu0 0
    %248 = vmatpush2.bf16.msra.mxu0 %v221
    %249 = vmatprep.subr.bf16.mxu0 0
    %250 = vmatpush2.bf16.msra.mxu0 %v184
    %251 = vmatprep.subr.bf16.mxu0 0
    %252 = vmatpush2.bf16.msra.mxu0 %v183
    %253 = vmatprep.subr.bf16.mxu0 0
    %254 = vmatpush2.bf16.msra.mxu0 %v182
    %255 = vmatprep.mubr.bf16.mxu0 %v199
    %256 = vmatmul.mubr.bf16.gmra.mxu0 %v107
    %v257 = vpop.f32.mrf.mxu0
    %v258 = vadd.f32 0.0, %v257
    %v259 = vpop.f32.mrf.mxu0
    %v260 = vpop.f32.mrf.mxu0
    %v261 = vadd.f32 0.0, %v260
    %v262 = vpop.f32.mrf.mxu0
    %263 = vmatprep.mubr.bf16.mxu0 %v202
    %264 = vmatmul.mubr.bf16.gmra.mxu0 %v109
    %v265 = vpop.f32.mrf.mxu0
    %v266 = vadd.f32 0.0, %v265
    %v267 = vpop.f32.mrf.mxu0
    %v268 = vpop.f32.mrf.mxu0
    %v269 = vadd.f32 0.0, %v268
    %v270 = vpop.f32.mrf.mxu0
    %271 = vmatprep.mubr.bf16.mxu0 %v205
    %272 = vmatmul.mubr.bf16.gmra.mxu0 %v111
    %v273 = vpop.f32.mrf.mxu0
    %v274 = vadd.f32 0.0, %v273
    %v275 = vpop.f32.mrf.mxu0
    %v276 = vpop.f32.mrf.mxu0
    %v277 = vadd.f32 0.0, %v276
    %v278 = vpop.f32.mrf.mxu0
    %279 = vmatprep.mubr.bf16.mxu0 %v208
    %280 = vmatmul.mubr.bf16.gmra.mxu0 %v113
    %v281 = vpop.f32.mrf.mxu0
    %v282 = vadd.f32 0.0, %v281
    %v283 = vpop.f32.mrf.mxu0
    %v284 = vpop.f32.mrf.mxu0
    %v285 = vadd.f32 0.0, %v284
    %v286 = vpop.f32.mrf.mxu0
    %287 = vmatprep.mubr.bf16.mxu0 %v211
    %288 = vmatmul.mubr.bf16.gmra.mxu0 %v115
    %v289 = vpop.f32.mrf.mxu0
    %v290 = vadd.f32 0.0, %v289
    %v291 = vpop.f32.mrf.mxu0
    %v292 = vpop.f32.mrf.mxu0
    %v293 = vadd.f32 0.0, %v292
    %v294 = vpop.f32.mrf.mxu0
    %295 = vmatprep.mubr.bf16.mxu0 %v214
    %296 = vmatmul.mubr.bf16.gmra.mxu0 %v117
    %v297 = vpop.f32.mrf.mxu0
    %v298 = vadd.f32 0.0, %v297
    %v299 = vpop.f32.mrf.mxu0
    %v300 = vpop.f32.mrf.mxu0
    %v301 = vadd.f32 0.0, %v300
    %v302 = vpop.f32.mrf.mxu0
    %303 = vmatprep.mubr.bf16.mxu0 %v217
    %304 = vmatmul.mubr.bf16.gmra.mxu0 %v119
    %v305 = vpop.f32.mrf.mxu0
    %v306 = vadd.f32 0.0, %v305
    %v307 = vpop.f32.mrf.mxu0
    %v308 = vpop.f32.mrf.mxu0
    %v309 = vpop.f32.mrf.mxu0
    %310 = vdwg.mxu0
    %311 = vadd.xlane.f32.xlu0 %v258
    %v312 = vpop.xlane.xlu0 %311
    %313 = vadd.xlane.f32.xlu0 %v261
    %v314 = vpop.xlane.xlu0 %313
    %315 = vadd.xlane.f32.xlu0 %v266
    %v316 = vpop.xlane.xlu0 %315
    %317 = vadd.xlane.f32.xlu0 %v269
    %v318 = vpop.xlane.xlu0 %317
    %319 = vadd.xlane.f32.xlu0 %v274
    %v320 = vpop.xlane.xlu0 %319
    %321 = vadd.xlane.f32.xlu0 %v277
    %v322 = vpop.xlane.xlu0 %321
    %323 = vadd.xlane.f32.xlu0 %v282
    %v324 = vpop.xlane.xlu0 %323
    %325 = vadd.xlane.f32.xlu0 %v285
    %v326 = vpop.xlane.xlu0 %325
    %327 = vadd.xlane.f32.xlu0 %v290
    %v328 = vpop.xlane.xlu0 %327
    %329 = vadd.xlane.f32.xlu0 %v293
    %v330 = vpop.xlane.xlu0 %329
    %331 = vadd.xlane.f32.xlu0 %v298
    %v332 = vpop.xlane.xlu0 %331
    %333 = vadd.xlane.f32.xlu0 %v301
    %v334 = vpop.xlane.xlu0 %333
    %vm335 = vcmask 1043456
    %v336 = vsel %vm335, %v306, 0.0
    %337 = vadd.xlane.f32.xlu0 %v336
    %v338 = vpop.xlane.xlu0 %337
    %v339 = vmul.f32 %v258, %v258
    %v340 = vmul.f32 %v261, %v261
    %v341 = vmul.f32 %v266, %v266
    %v342 = vmul.f32 %v269, %v269
    %v343 = vmul.f32 %v274, %v274
    %v344 = vmul.f32 %v277, %v277
    %v345 = vmul.f32 %v282, %v282
    %v346 = vmul.f32 %v285, %v285
    %v347 = vmul.f32 %v290, %v290
    %v348 = vmul.f32 %v293, %v293
    %v349 = vmul.f32 %v298, %v298
    %v350 = vmul.f32 %v301, %v301
    %v351 = vmul.f32 %v306, %v306
    %352 = vadd.xlane.f32.xlu0 %v339
    %v353 = vpop.xlane.xlu0 %352
    %354 = vadd.xlane.f32.xlu0 %v340
    %v355 = vpop.xlane.xlu0 %354
    %356 = vadd.xlane.f32.xlu0 %v341
    %v357 = vpop.xlane.xlu0 %356
    %358 = vadd.xlane.f32.xlu0 %v342
    %v359 = vpop.xlane.xlu0 %358
    %360 = vadd.xlane.f32.xlu0 %v343
    %v361 = vpop.xlane.xlu0 %360
    %362 = vadd.xlane.f32.xlu0 %v344
    %v363 = vpop.xlane.xlu0 %362
    %364 = vadd.xlane.f32.xlu0 %v345
    %v365 = vpop.xlane.xlu0 %364
    %366 = vadd.xlane.f32.xlu0 %v346
    %v367 = vpop.xlane.xlu0 %366
    %368 = vadd.xlane.f32.xlu0 %v347
    %v369 = vpop.xlane.xlu0 %368
    %370 = vadd.xlane.f32.xlu0 %v348
    %v371 = vpop.xlane.xlu0 %370
    %372 = vadd.xlane.f32.xlu0 %v349
    %v373 = vpop.xlane.xlu0 %372
    %374 = vadd.xlane.f32.xlu0 %v350
    %v375 = vpop.xlane.xlu0 %374
    %v376 = vsel %vm335, %v351, 0.0
    %377 = vadd.xlane.f32.xlu0 %v376
    %v378 = vpop.xlane.xlu0 %377
    %vm383 = vcmask 1046528
    %v384 = vrot.slane %v318, 1
    %v385 = vrot.slane %v320, 1
    %v386 = vsel %vm383, %v384, %v385
    %v387 = vrot.slane %v322, 1
    %v388 = vsel %vm383, %v385, %v387
    %v389 = vrot.slane %v324, 1
    %v390 = vsel %vm383, %v387, %v389
    %v395 = vadd.f32 %v312, %v386
    %v396 = vadd.f32 %v314, %v388
    %v397 = vadd.f32 %v316, %v390
    %v398 = vadd.f32 %v318, %v389
    %v403 = vrot.slane %v359, 1
    %v404 = vrot.slane %v361, 1
    %v405 = vsel %vm383, %v403, %v404
    %v406 = vrot.slane %v363, 1
    %v407 = vsel %vm383, %v404, %v406
    %v408 = vrot.slane %v365, 1
    %v409 = vsel %vm383, %v406, %v408
    %v414 = vadd.f32 %v353, %v405
    %v415 = vadd.f32 %v355, %v407
    %v416 = vadd.f32 %v357, %v409
    %v417 = vadd.f32 %v359, %v408
    %vm421 = vcmask 1045504
    %v422 = vrot.slane %v324, 2
    %v423 = vrot.slane %v326, 2
    %v424 = vsel %vm421, %v422, %v423
    %v425 = vrot.slane %v328, 2
    %v426 = vsel %vm421, %v423, %v425
    %v427 = vrot.slane %v330, 2
    %v428 = vsel %vm421, %v425, %v427
    %v433 = vadd.f32 %v395, %v424
    %v434 = vadd.f32 %v396, %v426
    %v435 = vadd.f32 %v397, %v428
    %v436 = vadd.f32 %v398, %v427
    %v440 = vrot.slane %v365, 2
    %v441 = vrot.slane %v367, 2
    %v442 = vsel %vm421, %v440, %v441
    %v443 = vrot.slane %v369, 2
    %v444 = vsel %vm421, %v441, %v443
    %v445 = vrot.slane %v371, 2
    %v446 = vsel %vm421, %v443, %v445
    %v451 = vadd.f32 %v414, %v442
    %v452 = vadd.f32 %v415, %v444
    %v453 = vadd.f32 %v416, %v446
    %v454 = vadd.f32 %v417, %v445
    %vm458 = vcmask 1044480
    %v459 = vrot.slane %v330, 3
    %v460 = vrot.slane %v332, 3
    %v461 = vsel %vm458, %v459, %v460
    %v462 = vrot.slane %v334, 3
    %v463 = vsel %vm458, %v460, %v462
    %v464 = vrot.slane %v338, 3
    %v465 = vsel %vm458, %v462, %v464
    %v470 = vadd.f32 %v433, %v461
    %v471 = vadd.f32 %v434, %v463
    %v472 = vadd.f32 %v435, %v465
    %v473 = vadd.f32 %v436, %v464
    %v477 = vrot.slane %v371, 3
    %v478 = vrot.slane %v373, 3
    %v479 = vsel %vm458, %v477, %v478
    %v480 = vrot.slane %v375, 3
    %v481 = vsel %vm458, %v478, %v480
    %v482 = vrot.slane %v378, 3
    %v483 = vsel %vm458, %v480, %v482
    %v488 = vadd.f32 %v451, %v479
    %v489 = vadd.f32 %v452, %v481
    %v490 = vadd.f32 %v453, %v483
    %v491 = vadd.f32 %v454, %v482
    %v492 = vmul.f32 %v470, 0.001953125
    %v493 = vmul.f32 %v471, 0.001953125
    %v494 = vmul.f32 %v472, 0.001953125
    %v495 = vmul.f32 %v473, 0.001953125
    %v496 = vmul.f32 %v488, 0.001953125
    %v497 = vmul.f32 %v489, 0.001953125
    %v498 = vmul.f32 %v490, 0.001953125
    %v499 = vmul.f32 %v491, 0.001953125
    %v500 = vmul.f32 %v492, %v492
    %v501 = vmul.f32 %v493, %v493
    %v502 = vmul.f32 %v494, %v494
    %v503 = vmul.f32 %v495, %v495
    %v504 = vsub.f32 %v496, %v500
    %v505 = vsub.f32 %v497, %v501
    %v506 = vsub.f32 %v498, %v502
    %v507 = vsub.f32 %v499, %v503
    %v508 = vld [vmem:[%s2] sm:$0xff]
    %v509 = vld [vmem:[%s2 + $0x8] sm:$0xff]
    %v510 = vld [vmem:[%s2 + $0x10] sm:$0xff]
    %v511 = vld [vmem:[%s2 + $0x18] sm:$0x1]
    %v512 = vadd.f32 %v504, 1e-05
    %v513 = vadd.f32 %v505, 1e-05
    %v514 = vadd.f32 %v506, 1e-05
    %v515 = vadd.f32 %v507, 1e-05
    %v516 = vrsqrt.pop %v512
    %v517 = vrsqrt.pop %v513
    %v518 = vrsqrt.pop %v514
    %v519 = vrsqrt.pop %v515
    %v520 = vmul.f32 %v508, %v516
    %v521 = vmul.f32 %v509, %v517
    %v522 = vmul.f32 %v510, %v518
    %v523 = vmul.f32 %v511, %v519
    %v524 = vld [vmem:[%s3] sm:$0xff]
    %v525 = vld [vmem:[%s3 + $0x8] sm:$0xff]
    %v526 = vld [vmem:[%s3 + $0x10] sm:$0xff]
    %v527 = vld [vmem:[%s3 + $0x18] sm:$0x1]
    %v528 = vmul.f32 %v492, %v520
    %v529 = vmul.f32 %v493, %v521
    %v530 = vmul.f32 %v494, %v522
    %v531 = vmul.f32 %v495, %v523
    %v532 = vsub.f32 %v524, %v528
    %v533 = vsub.f32 %v525, %v529
    %v534 = vsub.f32 %v526, %v530
    %v535 = vsub.f32 %v527, %v531
    %vm540 = vcmask 1040384
    %v541 = vrot.slane %v520, 7
    %v542 = vrot.slane %v521, 7
    %v543 = vsel %vm540, %v541, %v542
    %v544 = vrot.slane %v522, 7
    %v545 = vsel %vm540, %v542, %v544
    %v546 = vrot.slane %v523, 7
    %v547 = vsel %vm540, %v544, %v546
    %v550 = vrot.slane %v520, 6
    %v551 = vrot.slane %v521, 6
    %v552 = vsel %vm219, %v550, %v551
    %v553 = vrot.slane %v522, 6
    %v554 = vsel %vm219, %v551, %v553
    %v555 = vrot.slane %v523, 6
    %v556 = vsel %vm219, %v553, %v555
    %vm559 = vcmask 1042432
    %v560 = vrot.slane %v520, 5
    %v561 = vrot.slane %v521, 5
    %v562 = vsel %vm559, %v560, %v561
    %v563 = vrot.slane %v522, 5
    %v564 = vsel %vm559, %v561, %v563
    %v565 = vrot.slane %v523, 5
    %v566 = vsel %vm559, %v563, %v565
    %v568 = vsel %vm540, %v523, %v541
    %v569 = vsel %vm219, %v547, %v550
    %v570 = vsel %vm559, %v556, %v560
    %v575 = vrot.slane %v532, 7
    %v576 = vrot.slane %v533, 7
    %v577 = vsel %vm540, %v575, %v576
    %v578 = vrot.slane %v534, 7
    %v579 = vsel %vm540, %v576, %v578
    %v580 = vrot.slane %v535, 7
    %v581 = vsel %vm540, %v578, %v580
    %v584 = vrot.slane %v532, 6
    %v585 = vrot.slane %v533, 6
    %v586 = vsel %vm219, %v584, %v585
    %v587 = vrot.slane %v534, 6
    %v588 = vsel %vm219, %v585, %v587
    %v589 = vrot.slane %v535, 6
    %v590 = vsel %vm219, %v587, %v589
    %v593 = vrot.slane %v532, 5
    %v594 = vrot.slane %v533, 5
    %v595 = vsel %vm559, %v593, %v594
    %v596 = vrot.slane %v534, 5
    %v597 = vsel %vm559, %v594, %v596
    %v598 = vrot.slane %v535, 5
    %v599 = vsel %vm559, %v596, %v598
    %v601 = vsel %vm540, %v535, %v575
    %v602 = vsel %vm219, %v581, %v584
    %v603 = vsel %vm559, %v590, %v593
    %604 = vset.pattern.permute.xlu0 0
    %605 = vperm.xlu0 %604, %v520
    %v606 = vpop.permute.xlu0 %605
    %608 = vset.pattern.permute.xlu0 0
    %609 = vperm.xlu0 %608, %v521
    %v610 = vpop.permute.xlu0 %609
    %612 = vset.pattern.permute.xlu0 0
    %613 = vperm.xlu0 %612, %v522
    %v614 = vpop.permute.xlu0 %613
    %617 = vset.pattern.permute.xlu0 0
    %618 = vperm.xlu0 %617, %v568
    %v619 = vpop.permute.xlu0 %618
    %621 = vset.pattern.permute.xlu0 0
    %622 = vperm.xlu0 %621, %v543
    %v623 = vpop.permute.xlu0 %622
    %625 = vset.pattern.permute.xlu0 0
    %626 = vperm.xlu0 %625, %v545
    %v627 = vpop.permute.xlu0 %626
    %630 = vset.pattern.permute.xlu0 0
    %631 = vperm.xlu0 %630, %v569
    %v632 = vpop.permute.xlu0 %631
    %634 = vset.pattern.permute.xlu0 0
    %635 = vperm.xlu0 %634, %v552
    %v636 = vpop.permute.xlu0 %635
    %638 = vset.pattern.permute.xlu0 0
    %639 = vperm.xlu0 %638, %v554
    %v640 = vpop.permute.xlu0 %639
    %643 = vset.pattern.permute.xlu0 0
    %644 = vperm.xlu0 %643, %v570
    %v645 = vpop.permute.xlu0 %644
    %647 = vset.pattern.permute.xlu0 0
    %648 = vperm.xlu0 %647, %v562
    %v649 = vpop.permute.xlu0 %648
    %651 = vset.pattern.permute.xlu0 0
    %652 = vperm.xlu0 %651, %v564
    %v653 = vpop.permute.xlu0 %652
    %655 = vset.pattern.permute.xlu0 0
    %656 = vperm.xlu0 %655, %v566
    %v657 = vpop.permute.xlu0 %656
    %v659 = vmul.f32 %v258, %v606
    %v660 = vmul.f32 %v261, %v610
    %v661 = vmul.f32 %v266, %v614
    %v662 = vmul.f32 %v269, %v619
    %v663 = vmul.f32 %v274, %v623
    %v664 = vmul.f32 %v277, %v627
    %v665 = vmul.f32 %v282, %v632
    %v666 = vmul.f32 %v285, %v636
    %v667 = vmul.f32 %v290, %v640
    %v668 = vmul.f32 %v293, %v645
    %v669 = vmul.f32 %v298, %v649
    %v670 = vmul.f32 %v301, %v653
    %v671 = vmul.f32 %v306, %v657
    %672 = vset.pattern.permute.xlu0 0
    %673 = vperm.xlu0 %672, %v532
    %v674 = vpop.permute.xlu0 %673
    %676 = vset.pattern.permute.xlu0 0
    %677 = vperm.xlu0 %676, %v533
    %v678 = vpop.permute.xlu0 %677
    %680 = vset.pattern.permute.xlu0 0
    %681 = vperm.xlu0 %680, %v534
    %v682 = vpop.permute.xlu0 %681
    %685 = vset.pattern.permute.xlu0 0
    %686 = vperm.xlu0 %685, %v601
    %v687 = vpop.permute.xlu0 %686
    %689 = vset.pattern.permute.xlu0 0
    %690 = vperm.xlu0 %689, %v577
    %v691 = vpop.permute.xlu0 %690
    %693 = vset.pattern.permute.xlu0 0
    %694 = vperm.xlu0 %693, %v579
    %v695 = vpop.permute.xlu0 %694
    %698 = vset.pattern.permute.xlu0 0
    %699 = vperm.xlu0 %698, %v602
    %v700 = vpop.permute.xlu0 %699
    %702 = vset.pattern.permute.xlu0 0
    %703 = vperm.xlu0 %702, %v586
    %v704 = vpop.permute.xlu0 %703
    %706 = vset.pattern.permute.xlu0 0
    %707 = vperm.xlu0 %706, %v588
    %v708 = vpop.permute.xlu0 %707
    %711 = vset.pattern.permute.xlu0 0
    %712 = vperm.xlu0 %711, %v603
    %v713 = vpop.permute.xlu0 %712
    %715 = vset.pattern.permute.xlu0 0
    %716 = vperm.xlu0 %715, %v595
    %v717 = vpop.permute.xlu0 %716
    %719 = vset.pattern.permute.xlu0 0
    %720 = vperm.xlu0 %719, %v597
    %v721 = vpop.permute.xlu0 %720
    %723 = vset.pattern.permute.xlu0 0
    %724 = vperm.xlu0 %723, %v599
    %v725 = vpop.permute.xlu0 %724
    %v727 = vadd.f32 %v659, %v674
    %v728 = vadd.f32 %v660, %v678
    %v729 = vadd.f32 %v661, %v682
    %v730 = vadd.f32 %v662, %v687
    %v731 = vadd.f32 %v663, %v691
    %v732 = vadd.f32 %v664, %v695
    %v733 = vadd.f32 %v665, %v700
    %v734 = vadd.f32 %v666, %v704
    %v735 = vadd.f32 %v667, %v708
    %v736 = vadd.f32 %v668, %v713
    %v737 = vadd.f32 %v669, %v717
    %v738 = vadd.f32 %v670, %v721
    %v739 = vadd.f32 %v671, %v725
    %v740 = vmax.f32 %v727, 0.0
    %v741 = vmax.f32 %v728, 0.0
    %v742 = vmax.f32 %v729, 0.0
    %v743 = vmax.f32 %v730, 0.0
    %v744 = vmax.f32 %v731, 0.0
    %v745 = vmax.f32 %v732, 0.0
    %v746 = vmax.f32 %v733, 0.0
    %v747 = vmax.f32 %v734, 0.0
    %v748 = vmax.f32 %v735, 0.0
    %v749 = vmax.f32 %v736, 0.0
    %v750 = vmax.f32 %v737, 0.0
    %v751 = vmax.f32 %v738, 0.0
    %v752 = vmax.f32 %v739, 0.0
    %v753 = vpack.c.bf16 %v741, %v740
    %v754 = vpack.c.bf16 %v743, %v742
    %v755 = vpack.c.bf16 %v745, %v744
    %v756 = vpack.c.bf16 %v747, %v746
    %v757 = vpack.c.bf16 %v749, %v748
    %v758 = vpack.c.bf16 %v751, %v750
    %v759 = vpack.c.bf16 %v752, %v752
    %v767 = vunpack.c.l.b16 %v753
    %v768 = vunpack.c.h.b16 %v753
    %v769 = vunpack.c.l.b16 %v754
    %v770 = vunpack.c.h.b16 %v754
    %v771 = vunpack.c.l.b16 %v755
    %v772 = vunpack.c.h.b16 %v755
    %v773 = vunpack.c.l.b16 %v756
    %v774 = vunpack.c.h.b16 %v756
    %v775 = vunpack.c.l.b16 %v757
    %v776 = vunpack.c.h.b16 %v757
    %v777 = vunpack.c.l.b16 %v758
    %v778 = vunpack.c.h.b16 %v758
    %v779 = vunpack.c.l.b16 %v759
    %v780 = vpack.c.b16 %v767, %v767
    %v781 = vpack.c.b16 %v768, %v768
    %v782 = vpack.c.b16 %v769, %v769
    %v783 = vpack.c.b16 %v770, %v770
    %v784 = vpack.c.b16 %v771, %v771
    %v785 = vpack.c.b16 %v772, %v772
    %v786 = vpack.c.b16 %v773, %v773
    %v787 = vpack.c.b16 %v774, %v774
    %v788 = vpack.c.b16 %v775, %v775
    %v789 = vpack.c.b16 %v776, %v776
    %v790 = vpack.c.b16 %v777, %v777
    %v791 = vpack.c.b16 %v778, %v778
    %v792 = vpack.c.b16 %v779, %v779
    %806 = vst [vmem:[%s4] sm:$0xf] %v780
    %807 = vst [vmem:[%s4 + $0x4] sm:$0xf] %v781
    %808 = vst [vmem:[%s4 + $0x8] sm:$0xf] %v782
    %809 = vst [vmem:[%s4 + $0xc] sm:$0xf] %v783
    %810 = vst [vmem:[%s4 + $0x10] sm:$0xf] %v784
    %811 = vst [vmem:[%s4 + $0x14] sm:$0xf] %v785
    %812 = vst [vmem:[%s4 + $0x18] sm:$0xf] %v786
    %813 = vst [vmem:[%s4 + $0x1c] sm:$0xf] %v787
    %814 = vst [vmem:[%s4 + $0x20] sm:$0xf] %v788
    %815 = vst [vmem:[%s4 + $0x24] sm:$0xf] %v789
    %816 = vst [vmem:[%s4 + $0x28] sm:$0xf] %v790
    %817 = vst [vmem:[%s4 + $0x2c] sm:$0xf] %v791
    %818 = vst [vmem:[%s4 + $0x30] sm:$0x3] %v792
    // Predicated region
    $region22: #{_lambda_.7} parent=1 // pred_check
      _
    $region23: #{_lambda_.7} parent=1 // pred_check_branch
      %820 = sbr.rel (0) target = $region25
    $region24: #{_lambda_.7} parent=1 // pred_region
      _
    $region25: #{_lambda_.7} parent=1 // pred_fallthru
      _
    // Predicated region
    $region26: #{_lambda_.7} parent=1 // pred_check
      _
    $region27: #{_lambda_.7} parent=1 // pred_check_branch
      %822 = sbr.rel (0) target = $region29
    $region28: #{_lambda_.7} parent=1 // pred_region
      _
    $region29: #{_lambda_.7} parent=1 // pred_fallthru
      _
    %823 = vsyncpa [#allocation3], 1

// kernel: _lambda_.8
$region0: #{_lambda_.8}
  #allocation0 [shape = 'u32[]', space=smem, size = 0x4, offset = 0x4, fixed_abs, tag = 'smem constant byte address 0x4 - core index']
  #allocation1 [shape = 'u32[144,128]{1,0:T(1,128)}', space=vmem, size = 0x12000, scoped, tag = 'internal scratch']
  %s0 = inlined_call_operand.vmem [shape: bf16[128,225], index: 0, kind: input, shape index: {}]
  %s1 = inlined_call_operand.vmem [shape: bf16[225,512], index: 1, kind: input, shape index: {}]
  %s2 = inlined_call_operand.vmem [shape: f32[32,1], index: 2, kind: input, shape index: {}]
  %s3 = inlined_call_operand.vmem [shape: f32[32,1], index: 3, kind: input, shape index: {}]
  %s4 = inlined_call_operand.vmem [shape: bf16[128,512], index: 4, kind: output, shape index: {}]
  %s5 = sld [smem:[#allocation0]]
  $region26: #{_lambda_.8} parent=0
    _
  %s7 = ssub.s32 1, %s5
  %s8 = scalar_select 0, %s7, %s5
  // Predicated region
  $region2: #{_lambda_.8} parent=0 // pred_check
    _
  $region3: #{_lambda_.8} parent=0 // pred_check_branch
    %10 = sbr.rel (0) target = $region5
  $region4: #{_lambda_.8} parent=0 // pred_region
    _
  $region5: #{_lambda_.8} parent=0 // pred_fallthru
    _
  // Predicated region
  $region6: #{_lambda_.8} parent=0 // pred_check
    _
  $region7: #{_lambda_.8} parent=0 // pred_check_branch
    %12 = sbr.rel (0) target = $region9
  $region8: #{_lambda_.8} parent=0 // pred_region
    _
  $region9: #{_lambda_.8} parent=0 // pred_fallthru
    _
  // Predicated region
  $region10: #{_lambda_.8} parent=0 // pred_check
    _
  $region11: #{_lambda_.8} parent=0 // pred_check_branch
    %14 = sbr.rel (0) target = $region13
  $region12: #{_lambda_.8} parent=0 // pred_region
    _
  $region13: #{_lambda_.8} parent=0 // pred_fallthru
    _
  // Predicated region
  $region14: #{_lambda_.8} parent=0 // pred_check
    _
  $region15: #{_lambda_.8} parent=0 // pred_check_branch
    %16 = sbr.rel (0) target = $region17
  $region16: #{_lambda_.8} parent=0 // pred_region
    _
  $region17: #{_lambda_.8} parent=0 // pred_fallthru
    _
  %v18 = vld [vmem:[%s0] sm:$0xff]
  %v19 = vld [vmem:[%s0 + $0x8] sm:$0xff]
  %v20 = vld [vmem:[%s0 + $0x10] sm:$0xff]
  %v21 = vld [vmem:[%s0 + $0x18] sm:$0xff]
  %v22 = vld [vmem:[%s0 + $0x20] sm:$0xff]
  %v23 = vld [vmem:[%s0 + $0x28] sm:$0xff]
  %v24 = vld [vmem:[%s0 + $0x30] sm:$0xff]
  %v25 = vld [vmem:[%s0 + $0x38] sm:$0xff]
  %v26 = vld [vmem:[%s0 + $0x40] sm:$0xff]
  %v27 = vld [vmem:[%s0 + $0x48] sm:$0xff]
  %v28 = vld [vmem:[%s0 + $0x50] sm:$0xff]
  %v29 = vld [vmem:[%s0 + $0x58] sm:$0xff]
  %v30 = vld [vmem:[%s0 + $0x60] sm:$0xff]
  %v31 = vld [vmem:[%s0 + $0x68] sm:$0xff]
  %v32 = vld [vmem:[%s0 + $0x70] sm:$0xff]
  %v33 = vld [vmem:[%s0 + $0x78] sm:$0xff]
  %v34 = vld [vmem:[%s1] sm:$0xff]
  %v35 = vld [vmem:[%s1 + $0x8] sm:$0xff]
  %v36 = vld [vmem:[%s1 + $0x10] sm:$0xff]
  %v37 = vld [vmem:[%s1 + $0x18] sm:$0xff]
  %v38 = vld [vmem:[%s1 + $0x20] sm:$0xff]
  %v39 = vld [vmem:[%s1 + $0x28] sm:$0xff]
  %v40 = vld [vmem:[%s1 + $0x30] sm:$0xff]
  %v41 = vld [vmem:[%s1 + $0x38] sm:$0xff]
  %v42 = vld [vmem:[%s1 + $0x40] sm:$0xff]
  %v43 = vld [vmem:[%s1 + $0x48] sm:$0xff]
  %v44 = vld [vmem:[%s1 + $0x50] sm:$0xff]
  %v45 = vld [vmem:[%s1 + $0x58] sm:$0xff]
  %v46 = vld [vmem:[%s1 + $0x60] sm:$0xff]
  %v47 = vld [vmem:[%s1 + $0x68] sm:$0xff]
  %v48 = vld [vmem:[%s1 + $0x70] sm:$0xff]
  %v49 = vld [vmem:[%s1 + $0x78] sm:$0xff]
  %v50 = vld [vmem:[%s1 + $0x80] sm:$0xff]
  %v51 = vld [vmem:[%s1 + $0x88] sm:$0xff]
  %v52 = vld [vmem:[%s1 + $0x90] sm:$0xff]
  %v53 = vld [vmem:[%s1 + $0x98] sm:$0xff]
  %v54 = vld [vmem:[%s1 + $0xa0] sm:$0xff]
  %v55 = vld [vmem:[%s1 + $0xa8] sm:$0xff]
  %v56 = vld [vmem:[%s1 + $0xb0] sm:$0xff]
  %v57 = vld [vmem:[%s1 + $0xb8] sm:$0xff]
  %v58 = vld [vmem:[%s1 + $0xc0] sm:$0xff]
  %v59 = vld [vmem:[%s1 + $0xc8] sm:$0xff]
  %v60 = vld [vmem:[%s1 + $0xd0] sm:$0xff]
  %v61 = vld [vmem:[%s1 + $0xd8] sm:$0xff]
  %v62 = vld [vmem:[%s1 + $0xe0] sm:$0xff]
  %v63 = vld [vmem:[%s1 + $0xe8] sm:$0xff]
  %v64 = vld [vmem:[%s1 + $0xf0] sm:$0xff]
  %v65 = vld [vmem:[%s1 + $0xf8] sm:$0xff]
  %v66 = vld [vmem:[%s1 + $0x100] sm:$0xff]
  %v67 = vld [vmem:[%s1 + $0x108] sm:$0xff]
  %v68 = vld [vmem:[%s1 + $0x110] sm:$0xff]
  %v69 = vld [vmem:[%s1 + $0x118] sm:$0xff]
  %v70 = vld [vmem:[%s1 + $0x120] sm:$0xff]
  %v71 = vld [vmem:[%s1 + $0x128] sm:$0xff]
  %v72 = vld [vmem:[%s1 + $0x130] sm:$0xff]
  %v73 = vld [vmem:[%s1 + $0x138] sm:$0xff]
  %v74 = vld [vmem:[%s1 + $0x140] sm:$0xff]
  %v75 = vld [vmem:[%s1 + $0x148] sm:$0xff]
  %v76 = vld [vmem:[%s1 + $0x150] sm:$0xff]
  %v77 = vld [vmem:[%s1 + $0x158] sm:$0xff]
  %v78 = vld [vmem:[%s1 + $0x160] sm:$0xff]
  %v79 = vld [vmem:[%s1 + $0x168] sm:$0xff]
  %v80 = vld [vmem:[%s1 + $0x170] sm:$0xff]
  %v81 = vld [vmem:[%s1 + $0x178] sm:$0xff]
  %v82 = vld [vmem:[%s1 + $0x180] sm:$0xff]
  %v83 = vld [vmem:[%s1 + $0x188] sm:$0xff]
  %v84 = vld [vmem:[%s1 + $0x190] sm:$0xff]
  %v85 = vld [vmem:[%s1 + $0x198] sm:$0xff]
  %v86 = vld [vmem:[%s1 + $0x1a0] sm:$0xff]
  %v87 = vld [vmem:[%s1 + $0x1a8] sm:$0xff]
  %v88 = vld [vmem:[%s1 + $0x1b0] sm:$0xff]
  %v89 = vld [vmem:[%s1 + $0x1b8] sm:$0xff]
  %v90 = vld [vmem:[%s1 + $0x1c0] sm:$0x11]
  %v91 = vld [vmem:[%s1 + $0x1c8] sm:$0x11]
  %v108 = vunpack.c.l.b16 %v18
  %v109 = vunpack.c.h.b16 %v18
  %v110 = vunpack.c.l.b16 %v19
  %v111 = vunpack.c.h.b16 %v19
  %v112 = vunpack.c.l.b16 %v20
  %v113 = vunpack.c.h.b16 %v20
  %v114 = vunpack.c.l.b16 %v21
  %v115 = vunpack.c.h.b16 %v21
  %v116 = vunpack.c.l.b16 %v22
  %v117 = vunpack.c.h.b16 %v22
  %v118 = vunpack.c.l.b16 %v23
  %v119 = vunpack.c.h.b16 %v23
  %v120 = vunpack.c.l.b16 %v24
  %v121 = vunpack.c.h.b16 %v24
  %v122 = vunpack.c.l.b16 %v25
  %v123 = vunpack.c.h.b16 %v25
  %v124 = vunpack.c.l.b16 %v26
  %v125 = vunpack.c.h.b16 %v26
  %v126 = vunpack.c.l.b16 %v27
  %v127 = vunpack.c.h.b16 %v27
  %v128 = vunpack.c.l.b16 %v28
  %v129 = vunpack.c.h.b16 %v28
  %v130 = vunpack.c.l.b16 %v29
  %v131 = vunpack.c.h.b16 %v29
  %v132 = vunpack.c.l.b16 %v30
  %v133 = vunpack.c.h.b16 %v30
  %v134 = vunpack.c.l.b16 %v31
  %v135 = vunpack.c.h.b16 %v31
  %v136 = vunpack.c.l.b16 %v32
  %v137 = vunpack.c.h.b16 %v32
  %v138 = vunpack.c.l.b16 %v33
  %v139 = vunpack.c.h.b16 %v33
  %v140 = vpack.c.b16 %v110, %v108
  %v141 = vpack.c.b16 %v111, %v109
  %v142 = vpack.c.b16 %v114, %v112
  %v143 = vpack.c.b16 %v115, %v113
  %v144 = vpack.c.b16 %v118, %v116
  %v145 = vpack.c.b16 %v119, %v117
  %v146 = vpack.c.b16 %v122, %v120
  %v147 = vpack.c.b16 %v123, %v121
  %v148 = vpack.c.b16 %v126, %v124
  %v149 = vpack.c.b16 %v127, %v125
  %v150 = vpack.c.b16 %v130, %v128
  %v151 = vpack.c.b16 %v131, %v129
  %v152 = vpack.c.b16 %v134, %v132
  %v153 = vpack.c.b16 %v135, %v133
  %v154 = vpack.c.b16 %v138, %v136
  %v155 = vpack.c.b16 %v139, %v137
  %v222 = vunpack.c.l.b16 %v34
  %v223 = vunpack.c.h.b16 %v34
  %v224 = vunpack.c.l.b16 %v35
  %v225 = vunpack.c.h.b16 %v35
  %v226 = vunpack.c.l.b16 %v36
  %v227 = vunpack.c.h.b16 %v36
  %v228 = vunpack.c.l.b16 %v37
  %v229 = vunpack.c.h.b16 %v37
  %v230 = vunpack.c.l.b16 %v38
  %v231 = vunpack.c.h.b16 %v38
  %v232 = vunpack.c.l.b16 %v39
  %v233 = vunpack.c.h.b16 %v39
  %v234 = vunpack.c.l.b16 %v40
  %v235 = vunpack.c.h.b16 %v40
  %v236 = vunpack.c.l.b16 %v41
  %v237 = vunpack.c.h.b16 %v41
  %v238 = vunpack.c.l.b16 %v42
  %v239 = vunpack.c.h.b16 %v42
  %v240 = vunpack.c.l.b16 %v43
  %v241 = vunpack.c.h.b16 %v43
  %v242 = vunpack.c.l.b16 %v44
  %v243 = vunpack.c.h.b16 %v44
  %v244 = vunpack.c.l.b16 %v45
  %v245 = vunpack.c.h.b16 %v45
  %v246 = vunpack.c.l.b16 %v46
  %v247 = vunpack.c.h.b16 %v46
  %v248 = vunpack.c.l.b16 %v47
  %v249 = vunpack.c.h.b16 %v47
  %v250 = vunpack.c.l.b16 %v48
  %v251 = vunpack.c.h.b16 %v48
  %v252 = vunpack.c.l.b16 %v49
  %v253 = vunpack.c.h.b16 %v49
  %v254 = vunpack.c.l.b16 %v50
  %v255 = vunpack.c.h.b16 %v50
  %v256 = vunpack.c.l.b16 %v51
  %v257 = vunpack.c.h.b16 %v51
  %v258 = vunpack.c.l.b16 %v52
  %v259 = vunpack.c.h.b16 %v52
  %v260 = vunpack.c.l.b16 %v53
  %v261 = vunpack.c.h.b16 %v53
  %v262 = vunpack.c.l.b16 %v54
  %v263 = vunpack.c.h.b16 %v54
  %v264 = vunpack.c.l.b16 %v55
  %v265 = vunpack.c.h.b16 %v55
  %v266 = vunpack.c.l.b16 %v56
  %v267 = vunpack.c.h.b16 %v56
  %v268 = vunpack.c.l.b16 %v57
  %v269 = vunpack.c.h.b16 %v57
  %v270 = vunpack.c.l.b16 %v58
  %v271 = vunpack.c.h.b16 %v58
  %v272 = vunpack.c.l.b16 %v59
  %v273 = vunpack.c.h.b16 %v59
  %v274 = vunpack.c.l.b16 %v60
  %v275 = vunpack.c.h.b16 %v60
  %v276 = vunpack.c.l.b16 %v61
  %v277 = vunpack.c.h.b16 %v61
  %v278 = vunpack.c.l.b16 %v62
  %v279 = vunpack.c.h.b16 %v62
  %v280 = vunpack.c.l.b16 %v63
  %v281 = vunpack.c.h.b16 %v63
  %v282 = vunpack.c.l.b16 %v64
  %v283 = vunpack.c.h.b16 %v64
  %v284 = vunpack.c.l.b16 %v65
  %v285 = vunpack.c.h.b16 %v65
  %v286 = vunpack.c.l.b16 %v66
  %v287 = vunpack.c.h.b16 %v66
  %v288 = vunpack.c.l.b16 %v67
  %v289 = vunpack.c.h.b16 %v67
  %v290 = vunpack.c.l.b16 %v68
  %v291 = vunpack.c.h.b16 %v68
  %v292 = vunpack.c.l.b16 %v69
  %v293 = vunpack.c.h.b16 %v69
  %v294 = vunpack.c.l.b16 %v70
  %v295 = vunpack.c.h.b16 %v70
  %v296 = vunpack.c.l.b16 %v71
  %v297 = vunpack.c.h.b16 %v71
  %v298 = vunpack.c.l.b16 %v72
  %v299 = vunpack.c.h.b16 %v72
  %v300 = vunpack.c.l.b16 %v73
  %v301 = vunpack.c.h.b16 %v73
  %v302 = vunpack.c.l.b16 %v74
  %v303 = vunpack.c.h.b16 %v74
  %v304 = vunpack.c.l.b16 %v75
  %v305 = vunpack.c.h.b16 %v75
  %v306 = vunpack.c.l.b16 %v76
  %v307 = vunpack.c.h.b16 %v76
  %v308 = vunpack.c.l.b16 %v77
  %v309 = vunpack.c.h.b16 %v77
  %v310 = vunpack.c.l.b16 %v78
  %v311 = vunpack.c.h.b16 %v78
  %v312 = vunpack.c.l.b16 %v79
  %v313 = vunpack.c.h.b16 %v79
  %v314 = vunpack.c.l.b16 %v80
  %v315 = vunpack.c.h.b16 %v80
  %v316 = vunpack.c.l.b16 %v81
  %v317 = vunpack.c.h.b16 %v81
  %v318 = vunpack.c.l.b16 %v82
  %v319 = vunpack.c.h.b16 %v82
  %v320 = vunpack.c.l.b16 %v83
  %v321 = vunpack.c.h.b16 %v83
  %v322 = vunpack.c.l.b16 %v84
  %v323 = vunpack.c.h.b16 %v84
  %v324 = vunpack.c.l.b16 %v85
  %v325 = vunpack.c.h.b16 %v85
  %v326 = vunpack.c.l.b16 %v86
  %v327 = vunpack.c.h.b16 %v86
  %v328 = vunpack.c.l.b16 %v87
  %v329 = vunpack.c.h.b16 %v87
  %v330 = vunpack.c.l.b16 %v88
  %v331 = vunpack.c.h.b16 %v88
  %v332 = vunpack.c.l.b16 %v89
  %v333 = vunpack.c.h.b16 %v89
  %v334 = vunpack.c.l.b16 %v90
  %v335 = vunpack.c.h.b16 %v90
  %v336 = vunpack.c.l.b16 %v91
  %v337 = vunpack.c.h.b16 %v91
  %v338 = vpack.c.b16 %v226, %v222
  %v339 = vpack.c.b16 %v227, %v223
  %v340 = vpack.c.b16 %v228, %v224
  %v341 = vpack.c.b16 %v229, %v225
  %v342 = vpack.c.b16 %v234, %v230
  %v343 = vpack.c.b16 %v235, %v231
  %v344 = vpack.c.b16 %v236, %v232
  %v345 = vpack.c.b16 %v237, %v233
  %v346 = vpack.c.b16 %v242, %v238
  %v347 = vpack.c.b16 %v243, %v239
  %v348 = vpack.c.b16 %v244, %v240
  %v349 = vpack.c.b16 %v245, %v241
  %v350 = vpack.c.b16 %v250, %v246
  %v351 = vpack.c.b16 %v251, %v247
  %v352 = vpack.c.b16 %v252, %v248
  %v353 = vpack.c.b16 %v253, %v249
  %v354 = vpack.c.b16 %v258, %v254
  %v355 = vpack.c.b16 %v259, %v255
  %v356 = vpack.c.b16 %v260, %v256
  %v357 = vpack.c.b16 %v261, %v257
  %v358 = vpack.c.b16 %v266, %v262
  %v359 = vpack.c.b16 %v267, %v263
  %v360 = vpack.c.b16 %v268, %v264
  %v361 = vpack.c.b16 %v269, %v265
  %v362 = vpack.c.b16 %v274, %v270
  %v363 = vpack.c.b16 %v275, %v271
  %v364 = vpack.c.b16 %v276, %v272
  %v365 = vpack.c.b16 %v277, %v273
  %v366 = vpack.c.b16 %v282, %v278
  %v367 = vpack.c.b16 %v283, %v279
  %v368 = vpack.c.b16 %v284, %v280
  %v369 = vpack.c.b16 %v285, %v281
  %v370 = vpack.c.b16 %v290, %v286
  %v371 = vpack.c.b16 %v291, %v287
  %v372 = vpack.c.b16 %v292, %v288
  %v373 = vpack.c.b16 %v293, %v289
  %v374 = vpack.c.b16 %v298, %v294
  %v375 = vpack.c.b16 %v299, %v295
  %v376 = vpack.c.b16 %v300, %v296
  %v377 = vpack.c.b16 %v301, %v297
  %v378 = vpack.c.b16 %v306, %v302
  %v379 = vpack.c.b16 %v307, %v303
  %v380 = vpack.c.b16 %v308, %v304
  %v381 = vpack.c.b16 %v309, %v305
  %v382 = vpack.c.b16 %v314, %v310
  %v383 = vpack.c.b16 %v315, %v311
  %v384 = vpack.c.b16 %v316, %v312
  %v385 = vpack.c.b16 %v317, %v313
  %v386 = vpack.c.b16 %v322, %v318
  %v387 = vpack.c.b16 %v323, %v319
  %v388 = vpack.c.b16 %v324, %v320
  %v389 = vpack.c.b16 %v325, %v321
  %v390 = vpack.c.b16 %v330, %v326
  %v391 = vpack.c.b16 %v331, %v327
  %v392 = vpack.c.b16 %v332, %v328
  %v393 = vpack.c.b16 %v333, %v329
  %v394 = vpack.c.b16 %v334, %v334
  %v395 = vpack.c.b16 %v335, %v335
  %v396 = vpack.c.b16 %v336, %v336
  %v397 = vpack.c.b16 %v337, %v337
  %vm454 = vcmask 793600
  %v456 = vsel %vm454, %v141, 0
  %v459 = vsel %vm454, %v143, 0
  %v462 = vsel %vm454, %v145, 0
  %v465 = vsel %vm454, %v147, 0
  %v468 = vsel %vm454, %v149, 0
  %v471 = vsel %vm454, %v151, 0
  %v474 = vsel %vm454, %v153, 0
  %v477 = vsel %vm454, %v155, 0
  %vm479 = vcmask 1040384
  %v480 = vsel 0, 4294967295, 65535
  %v481 = vsel %vm479, %v480, 0
  %v483 = vand.u32 %v394, %v481
  %v486 = vand.u32 %v395, %v481
  %v489 = vand.u32 %v396, %v481
  %v492 = vand.u32 %v397, %v481
  %494 = vmatprep.subr.bf16.mxu0 %v367
  %495 = vmatpush1.bf16.msra.mxu0 %v366
  %496 = vmatprep.subr.bf16.mxu0 %v363
  %497 = vmatpush1.bf16.msra.mxu0 %v362
  %498 = vmatprep.subr.bf16.mxu0 %v359
  %499 = vmatpush1.bf16.msra.mxu0 %v358
  %500 = vmatprep.subr.bf16.mxu0 %v355
  %501 = vmatpush1.bf16.msra.mxu0 %v354
  %502 = vmatprep.subr.bf16.mxu0 %v351
  %503 = vmatpush1.bf16.msra.mxu0 %v350
  %504 = vmatprep.subr.bf16.mxu0 %v347
  %505 = vmatpush1.bf16.msra.mxu0 %v346
  %506 = vmatprep.subr.bf16.mxu0 %v343
  %507 = vmatpush1.bf16.msra.mxu0 %v342
  %508 = vmatprep.subr.bf16.mxu0 %v339
  %509 = vmatpush1.bf16.msra.mxu0 %v338
  %510 = vmatprep.subr.bf16.mxu0 0
  %511 = vmatpush2.bf16.msra.mxu0 0
  %512 = vmatprep.subr.bf16.mxu0 %v486
  %513 = vmatpush2.bf16.msra.mxu0 %v483
  %514 = vmatprep.subr.bf16.mxu0 %v391
  %515 = vmatpush2.bf16.msra.mxu0 %v390
  %516 = vmatprep.subr.bf16.mxu0 %v387
  %517 = vmatpush2.bf16.msra.mxu0 %v386
  %518 = vmatprep.subr.bf16.mxu0 %v383
  %519 = vmatpush2.bf16.msra.mxu0 %v382
  %520 = vmatprep.subr.bf16.mxu0 %v379
  %521 = vmatpush2.bf16.msra.mxu0 %v378
  %522 = vmatprep.subr.bf16.mxu0 %v375
  %523 = vmatpush2.bf16.msra.mxu0 %v374
  %524 = vmatprep.subr.bf16.mxu0 %v371
  %525 = vmatpush2.bf16.msra.mxu0 %v370
  %526 = vmatprep.mubr.bf16.mxu0 %v456
  %527 = vmatmul.mubr.bf16.gmra.mxu0 %v140
  %v528 = vpop.f32.mrf.mxu0
  %v529 = vadd.f32 0.0, %v528
  %v530 = vpop.f32.mrf.mxu0
  %v531 = vadd.f32 0.0, %v530
  %v532 = vpop.f32.mrf.mxu0
  %v533 = vadd.f32 0.0, %v532
  %v534 = vpop.f32.mrf.mxu0
  %v535 = vadd.f32 0.0, %v534
  %536 = vmatprep.mubr.bf16.mxu0 %v459
  %537 = vmatmul.mubr.bf16.gmra.mxu0 %v142
  %v538 = vpop.f32.mrf.mxu0
  %v539 = vadd.f32 0.0, %v538
  %v540 = vpop.f32.mrf.mxu0
  %v541 = vadd.f32 0.0, %v540
  %v542 = vpop.f32.mrf.mxu0
  %v543 = vadd.f32 0.0, %v542
  %v544 = vpop.f32.mrf.mxu0
  %v545 = vadd.f32 0.0, %v544
  %546 = vmatprep.mubr.bf16.mxu0 %v462
  %547 = vmatmul.mubr.bf16.gmra.mxu0 %v144
  %v548 = vpop.f32.mrf.mxu0
  %v549 = vadd.f32 0.0, %v548
  %v550 = vpop.f32.mrf.mxu0
  %v551 = vadd.f32 0.0, %v550
  %v552 = vpop.f32.mrf.mxu0
  %v553 = vadd.f32 0.0, %v552
  %v554 = vpop.f32.mrf.mxu0
  %v555 = vadd.f32 0.0, %v554
  %556 = vmatprep.mubr.bf16.mxu0 %v465
  %557 = vmatmul.mubr.bf16.gmra.mxu0 %v146
  %v558 = vpop.f32.mrf.mxu0
  %v559 = vadd.f32 0.0, %v558
  %v560 = vpop.f32.mrf.mxu0
  %v561 = vadd.f32 0.0, %v560
  %v562 = vpop.f32.mrf.mxu0
  %v563 = vadd.f32 0.0, %v562
  %v564 = vpop.f32.mrf.mxu0
  %v565 = vadd.f32 0.0, %v564
  %566 = vmatprep.mubr.bf16.mxu0 %v468
  %567 = vmatmul.mubr.bf16.gmra.mxu0 %v148
  %v568 = vpop.f32.mrf.mxu0
  %v569 = vadd.f32 0.0, %v568
  %v570 = vpop.f32.mrf.mxu0
  %v571 = vadd.f32 0.0, %v570
  %v572 = vpop.f32.mrf.mxu0
  %v573 = vadd.f32 0.0, %v572
  %v574 = vpop.f32.mrf.mxu0
  %v575 = vadd.f32 0.0, %v574
  %576 = vmatprep.mubr.bf16.mxu0 %v471
  %577 = vmatmul.mubr.bf16.gmra.mxu0 %v150
  %v578 = vpop.f32.mrf.mxu0
  %v579 = vadd.f32 0.0, %v578
  %v580 = vpop.f32.mrf.mxu0
  %v581 = vadd.f32 0.0, %v580
  %v582 = vpop.f32.mrf.mxu0
  %v583 = vadd.f32 0.0, %v582
  %v584 = vpop.f32.mrf.mxu0
  %v585 = vadd.f32 0.0, %v584
  %586 = vmatprep.mubr.bf16.mxu0 %v474
  %587 = vmatmul.mubr.bf16.gmra.mxu0 %v152
  %v588 = vpop.f32.mrf.mxu0
  %v589 = vadd.f32 0.0, %v588
  %v590 = vpop.f32.mrf.mxu0
  %v591 = vadd.f32 0.0, %v590
  %v592 = vpop.f32.mrf.mxu0
  %v593 = vadd.f32 0.0, %v592
  %v594 = vpop.f32.mrf.mxu0
  %v595 = vadd.f32 0.0, %v594
  %596 = vmatprep.mubr.bf16.mxu0 %v477
  %597 = vmatmul.mubr.bf16.gmra.mxu0 %v154
  %v598 = vpop.f32.mrf.mxu0
  %v599 = vadd.f32 0.0, %v598
  %v600 = vpop.f32.mrf.mxu0
  %v601 = vadd.f32 0.0, %v600
  %v602 = vpop.f32.mrf.mxu0
  %v603 = vadd.f32 0.0, %v602
  %v604 = vpop.f32.mrf.mxu0
  %v605 = vadd.f32 0.0, %v604
  %606 = vdwg.mxu0
  %607 = vmatprep.subr.bf16.mxu0 %v369
  %608 = vmatpush1.bf16.msra.mxu0 %v368
  %609 = vmatprep.subr.bf16.mxu0 %v365
  %610 = vmatpush1.bf16.msra.mxu0 %v364
  %611 = vmatprep.subr.bf16.mxu0 %v361
  %612 = vmatpush1.bf16.msra.mxu0 %v360
  %613 = vmatprep.subr.bf16.mxu0 %v357
  %614 = vmatpush1.bf16.msra.mxu0 %v356
  %615 = vmatprep.subr.bf16.mxu0 %v353
  %616 = vmatpush1.bf16.msra.mxu0 %v352
  %617 = vmatprep.subr.bf16.mxu0 %v349
  %618 = vmatpush1.bf16.msra.mxu0 %v348
  %619 = vmatprep.subr.bf16.mxu0 %v345
  %620 = vmatpush1.bf16.msra.mxu0 %v344
  %621 = vmatprep.subr.bf16.mxu0 %v341
  %622 = vmatpush1.bf16.msra.mxu0 %v340
  %623 = vmatprep.subr.bf16.mxu0 0
  %624 = vmatpush2.bf16.msra.mxu0 0
  %625 = vmatprep.subr.bf16.mxu0 %v492
  %626 = vmatpush2.bf16.msra.mxu0 %v489
  %627 = vmatprep.subr.bf16.mxu0 %v393
  %628 = vmatpush2.bf16.msra.mxu0 %v392
  %629 = vmatprep.subr.bf16.mxu0 %v389
  %630 = vmatpush2.bf16.msra.mxu0 %v388
  %631 = vmatprep.subr.bf16.mxu0 %v385
  %632 = vmatpush2.bf16.msra.mxu0 %v384
  %633 = vmatprep.subr.bf16.mxu0 %v381
  %634 = vmatpush2.bf16.msra.mxu0 %v380
  %635 = vmatprep.subr.bf16.mxu0 %v377
  %636 = vmatpush2.bf16.msra.mxu0 %v376
  %637 = vmatprep.subr.bf16.mxu0 %v373
  %638 = vmatpush2.bf16.msra.mxu0 %v372
  %639 = vmatprep.mubr.bf16.mxu0 %v456
  %640 = vmatmul.mubr.bf16.gmra.mxu0 %v140
  %v641 = vpop.f32.mrf.mxu0
  %v642 = vadd.f32 0.0, %v641
  %v643 = vpop.f32.mrf.mxu0
  %v644 = vadd.f32 0.0, %v643
  %v645 = vpop.f32.mrf.mxu0
  %v646 = vadd.f32 0.0, %v645
  %v647 = vpop.f32.mrf.mxu0
  %v648 = vadd.f32 0.0, %v647
  %649 = vmatprep.mubr.bf16.mxu0 %v459
  %650 = vmatmul.mubr.bf16.gmra.mxu0 %v142
  %v651 = vpop.f32.mrf.mxu0
  %v652 = vadd.f32 0.0, %v651
  %v653 = vpop.f32.mrf.mxu0
  %v654 = vadd.f32 0.0, %v653
  %v655 = vpop.f32.mrf.mxu0
  %v656 = vadd.f32 0.0, %v655
  %v657 = vpop.f32.mrf.mxu0
  %v658 = vadd.f32 0.0, %v657
  %659 = vmatprep.mubr.bf16.mxu0 %v462
  %660 = vmatmul.mubr.bf16.gmra.mxu0 %v144
  %v661 = vpop.f32.mrf.mxu0
  %v662 = vadd.f32 0.0, %v661
  %v663 = vpop.f32.mrf.mxu0
  %v664 = vadd.f32 0.0, %v663
  %v665 = vpop.f32.mrf.mxu0
  %v666 = vadd.f32 0.0, %v665
  %v667 = vpop.f32.mrf.mxu0
  %v668 = vadd.f32 0.0, %v667
  %669 = vmatprep.mubr.bf16.mxu0 %v465
  %670 = vmatmul.mubr.bf16.gmra.mxu0 %v146
  %v671 = vpop.f32.mrf.mxu0
  %v672 = vadd.f32 0.0, %v671
  %v673 = vpop.f32.mrf.mxu0
  %v674 = vadd.f32 0.0, %v673
  %v675 = vpop.f32.mrf.mxu0
  %v676 = vadd.f32 0.0, %v675
  %v677 = vpop.f32.mrf.mxu0
  %v678 = vadd.f32 0.0, %v677
  %679 = vmatprep.mubr.bf16.mxu0 %v468
  %680 = vmatmul.mubr.bf16.gmra.mxu0 %v148
  %v681 = vpop.f32.mrf.mxu0
  %v682 = vadd.f32 0.0, %v681
  %v683 = vpop.f32.mrf.mxu0
  %v684 = vadd.f32 0.0, %v683
  %v685 = vpop.f32.mrf.mxu0
  %v686 = vadd.f32 0.0, %v685
  %v687 = vpop.f32.mrf.mxu0
  %v688 = vadd.f32 0.0, %v687
  %689 = vmatprep.mubr.bf16.mxu0 %v471
  %690 = vmatmul.mubr.bf16.gmra.mxu0 %v150
  %v691 = vpop.f32.mrf.mxu0
  %v692 = vadd.f32 0.0, %v691
  %v693 = vpop.f32.mrf.mxu0
  %v694 = vadd.f32 0.0, %v693
  %v695 = vpop.f32.mrf.mxu0
  %v696 = vadd.f32 0.0, %v695
  %v697 = vpop.f32.mrf.mxu0
  %v698 = vadd.f32 0.0, %v697
  %699 = vmatprep.mubr.bf16.mxu0 %v474
  %700 = vmatmul.mubr.bf16.gmra.mxu0 %v152
  %v701 = vpop.f32.mrf.mxu0
  %v702 = vadd.f32 0.0, %v701
  %v703 = vpop.f32.mrf.mxu0
  %v704 = vadd.f32 0.0, %v703
  %v705 = vpop.f32.mrf.mxu0
  %v706 = vadd.f32 0.0, %v705
  %v707 = vpop.f32.mrf.mxu0
  %v708 = vadd.f32 0.0, %v707
  %709 = vmatprep.mubr.bf16.mxu0 %v477
  %710 = vmatmul.mubr.bf16.gmra.mxu0 %v154
  %v711 = vpop.f32.mrf.mxu0
  %v712 = vadd.f32 0.0, %v711
  %v713 = vpop.f32.mrf.mxu0
  %v714 = vadd.f32 0.0, %v713
  %v715 = vpop.f32.mrf.mxu0
  %v716 = vadd.f32 0.0, %v715
  %v717 = vpop.f32.mrf.mxu0
  %v718 = vadd.f32 0.0, %v717
  %719 = vdwg.mxu0
  %v720 = vadd.f32 %v529, %v531
  %v721 = vadd.f32 %v720, %v642
  %v722 = vadd.f32 %v721, %v644
  %723 = vadd.xlane.f32.xlu0 %v722
  %v724 = vpop.xlane.xlu0 %723
  %v725 = vadd.f32 %v533, %v535
  %v726 = vadd.f32 %v725, %v646
  %v727 = vadd.f32 %v726, %v648
  %728 = vadd.xlane.f32.xlu0 %v727
  %v729 = vpop.xlane.xlu0 %728
  %v730 = vadd.f32 %v539, %v541
  %v731 = vadd.f32 %v730, %v652
  %v732 = vadd.f32 %v731, %v654
  %733 = vadd.xlane.f32.xlu0 %v732
  %v734 = vpop.xlane.xlu0 %733
  %v735 = vadd.f32 %v543, %v545
  %v736 = vadd.f32 %v735, %v656
  %v737 = vadd.f32 %v736, %v658
  %738 = vadd.xlane.f32.xlu0 %v737
  %v739 = vpop.xlane.xlu0 %738
  %v740 = vadd.f32 %v549, %v551
  %v741 = vadd.f32 %v740, %v662
  %v742 = vadd.f32 %v741, %v664
  %743 = vadd.xlane.f32.xlu0 %v742
  %v744 = vpop.xlane.xlu0 %743
  %v745 = vadd.f32 %v553, %v555
  %v746 = vadd.f32 %v745, %v666
  %v747 = vadd.f32 %v746, %v668
  %748 = vadd.xlane.f32.xlu0 %v747
  %v749 = vpop.xlane.xlu0 %748
  %v750 = vadd.f32 %v559, %v561
  %v751 = vadd.f32 %v750, %v672
  %v752 = vadd.f32 %v751, %v674
  %753 = vadd.xlane.f32.xlu0 %v752
  %v754 = vpop.xlane.xlu0 %753
  %v755 = vadd.f32 %v563, %v565
  %v756 = vadd.f32 %v755, %v676
  %v757 = vadd.f32 %v756, %v678
  %758 = vadd.xlane.f32.xlu0 %v757
  %v759 = vpop.xlane.xlu0 %758
  %v760 = vadd.f32 %v569, %v571
  %v761 = vadd.f32 %v760, %v682
  %v762 = vadd.f32 %v761, %v684
  %763 = vadd.xlane.f32.xlu0 %v762
  %v764 = vpop.xlane.xlu0 %763
  %v765 = vadd.f32 %v573, %v575
  %v766 = vadd.f32 %v765, %v686
  %v767 = vadd.f32 %v766, %v688
  %768 = vadd.xlane.f32.xlu0 %v767
  %v769 = vpop.xlane.xlu0 %768
  %v770 = vadd.f32 %v579, %v581
  %v771 = vadd.f32 %v770, %v692
  %v772 = vadd.f32 %v771, %v694
  %773 = vadd.xlane.f32.xlu0 %v772
  %v774 = vpop.xlane.xlu0 %773
  %v775 = vadd.f32 %v583, %v585
  %v776 = vadd.f32 %v775, %v696
  %v777 = vadd.f32 %v776, %v698
  %778 = vadd.xlane.f32.xlu0 %v777
  %v779 = vpop.xlane.xlu0 %778
  %v780 = vadd.f32 %v589, %v591
  %v781 = vadd.f32 %v780, %v702
  %v782 = vadd.f32 %v781, %v704
  %783 = vadd.xlane.f32.xlu0 %v782
  %v784 = vpop.xlane.xlu0 %783
  %v785 = vadd.f32 %v593, %v595
  %v786 = vadd.f32 %v785, %v706
  %v787 = vadd.f32 %v786, %v708
  %788 = vadd.xlane.f32.xlu0 %v787
  %v789 = vpop.xlane.xlu0 %788
  %v790 = vadd.f32 %v599, %v601
  %v791 = vadd.f32 %v790, %v712
  %v792 = vadd.f32 %v791, %v714
  %793 = vadd.xlane.f32.xlu0 %v792
  %v794 = vpop.xlane.xlu0 %793
  %v795 = vadd.f32 %v603, %v605
  %v796 = vadd.f32 %v795, %v716
  %v797 = vadd.f32 %v796, %v718
  %798 = vadd.xlane.f32.xlu0 %v797
  %v799 = vpop.xlane.xlu0 %798
  %v800 = vmul.f32 %v529, %v529
  %v801 = vmul.f32 %v531, %v531
  %v802 = vmul.f32 %v642, %v642
  %v803 = vmul.f32 %v644, %v644
  %v804 = vmul.f32 %v533, %v533
  %v805 = vmul.f32 %v535, %v535
  %v806 = vmul.f32 %v646, %v646
  %v807 = vmul.f32 %v648, %v648
  %v808 = vmul.f32 %v539, %v539
  %v809 = vmul.f32 %v541, %v541
  %v810 = vmul.f32 %v652, %v652
  %v811 = vmul.f32 %v654, %v654
  %v812 = vmul.f32 %v543, %v543
  %v813 = vmul.f32 %v545, %v545
  %v814 = vmul.f32 %v656, %v656
  %v815 = vmul.f32 %v658, %v658
  %v816 = vmul.f32 %v549, %v549
  %v817 = vmul.f32 %v551, %v551
  %v818 = vmul.f32 %v662, %v662
  %v819 = vmul.f32 %v664, %v664
  %v820 = vmul.f32 %v553, %v553
  %v821 = vmul.f32 %v555, %v555
  %v822 = vmul.f32 %v666, %v666
  %v823 = vmul.f32 %v668, %v668
  %v824 = vmul.f32 %v559, %v559
  %v825 = vmul.f32 %v561, %v561
  %v826 = vmul.f32 %v672, %v672
  %v827 = vmul.f32 %v674, %v674
  %v828 = vmul.f32 %v563, %v563
  %v829 = vmul.f32 %v565, %v565
  %v830 = vmul.f32 %v676, %v676
  %v831 = vmul.f32 %v678, %v678
  %v832 = vmul.f32 %v569, %v569
  %v833 = vmul.f32 %v571, %v571
  %v834 = vmul.f32 %v682, %v682
  %v835 = vmul.f32 %v684, %v684
  %v836 = vmul.f32 %v573, %v573
  %v837 = vmul.f32 %v575, %v575
  %v838 = vmul.f32 %v686, %v686
  %v839 = vmul.f32 %v688, %v688
  %v840 = vmul.f32 %v579, %v579
  %v841 = vmul.f32 %v581, %v581
  %v842 = vmul.f32 %v692, %v692
  %v843 = vmul.f32 %v694, %v694
  %v844 = vmul.f32 %v583, %v583
  %v845 = vmul.f32 %v585, %v585
  %v846 = vmul.f32 %v696, %v696
  %v847 = vmul.f32 %v698, %v698
  %v848 = vmul.f32 %v589, %v589
  %v849 = vmul.f32 %v591, %v591
  %v850 = vmul.f32 %v702, %v702
  %v851 = vmul.f32 %v704, %v704
  %v852 = vmul.f32 %v593, %v593
  %v853 = vmul.f32 %v595, %v595
  %v854 = vmul.f32 %v706, %v706
  %v855 = vmul.f32 %v708, %v708
  %v856 = vmul.f32 %v599, %v599
  %v857 = vmul.f32 %v601, %v601
  %v858 = vmul.f32 %v712, %v712
  %v859 = vmul.f32 %v714, %v714
  %v860 = vmul.f32 %v603, %v603
  %v861 = vmul.f32 %v605, %v605
  %v862 = vmul.f32 %v716, %v716
  %v863 = vmul.f32 %v718, %v718
  %v864 = vadd.f32 %v800, %v801
  %v865 = vadd.f32 %v864, %v802
  %v866 = vadd.f32 %v865, %v803
  %867 = vadd.xlane.f32.xlu0 %v866
  %v868 = vpop.xlane.xlu0 %867
  %v869 = vadd.f32 %v804, %v805
  %v870 = vadd.f32 %v869, %v806
  %v871 = vadd.f32 %v870, %v807
  %872 = vadd.xlane.f32.xlu0 %v871
  %v873 = vpop.xlane.xlu0 %872
  %v874 = vadd.f32 %v808, %v809
  %v875 = vadd.f32 %v874, %v810
  %v876 = vadd.f32 %v875, %v811
  %877 = vadd.xlane.f32.xlu0 %v876
  %v878 = vpop.xlane.xlu0 %877
  %v879 = vadd.f32 %v812, %v813
  %v880 = vadd.f32 %v879, %v814
  %v881 = vadd.f32 %v880, %v815
  %882 = vadd.xlane.f32.xlu0 %v881
  %v883 = vpop.xlane.xlu0 %882
  %v884 = vadd.f32 %v816, %v817
  %v885 = vadd.f32 %v884, %v818
  %v886 = vadd.f32 %v885, %v819
  %887 = vadd.xlane.f32.xlu0 %v886
  %v888 = vpop.xlane.xlu0 %887
  %v889 = vadd.f32 %v820, %v821
  %v890 = vadd.f32 %v889, %v822
  %v891 = vadd.f32 %v890, %v823
  %892 = vadd.xlane.f32.xlu0 %v891
  %v893 = vpop.xlane.xlu0 %892
  %v894 = vadd.f32 %v824, %v825
  %v895 = vadd.f32 %v894, %v826
  %v896 = vadd.f32 %v895, %v827
  %897 = vadd.xlane.f32.xlu0 %v896
  %v898 = vpop.xlane.xlu0 %897
  %v899 = vadd.f32 %v828, %v829
  %v900 = vadd.f32 %v899, %v830
  %v901 = vadd.f32 %v900, %v831
  %902 = vadd.xlane.f32.xlu0 %v901
  %v903 = vpop.xlane.xlu0 %902
  %v904 = vadd.f32 %v832, %v833
  %v905 = vadd.f32 %v904, %v834
  %v906 = vadd.f32 %v905, %v835
  %907 = vadd.xlane.f32.xlu0 %v906
  %v908 = vpop.xlane.xlu0 %907
  %v909 = vadd.f32 %v836, %v837
  %v910 = vadd.f32 %v909, %v838
  %v911 = vadd.f32 %v910, %v839
  %912 = vadd.xlane.f32.xlu0 %v911
  %v913 = vpop.xlane.xlu0 %912
  %v914 = vadd.f32 %v840, %v841
  %v915 = vadd.f32 %v914, %v842
  %v916 = vadd.f32 %v915, %v843
  %917 = vadd.xlane.f32.xlu0 %v916
  %v918 = vpop.xlane.xlu0 %917
  %v919 = vadd.f32 %v844, %v845
  %v920 = vadd.f32 %v919, %v846
  %v921 = vadd.f32 %v920, %v847
  %922 = vadd.xlane.f32.xlu0 %v921
  %v923 = vpop.xlane.xlu0 %922
  %v924 = vadd.f32 %v848, %v849
  %v925 = vadd.f32 %v924, %v850
  %v926 = vadd.f32 %v925, %v851
  %927 = vadd.xlane.f32.xlu0 %v926
  %v928 = vpop.xlane.xlu0 %927
  %v929 = vadd.f32 %v852, %v853
  %v930 = vadd.f32 %v929, %v854
  %v931 = vadd.f32 %v930, %v855
  %932 = vadd.xlane.f32.xlu0 %v931
  %v933 = vpop.xlane.xlu0 %932
  %v934 = vadd.f32 %v856, %v857
  %v935 = vadd.f32 %v934, %v858
  %v936 = vadd.f32 %v935, %v859
  %937 = vadd.xlane.f32.xlu0 %v936
  %v938 = vpop.xlane.xlu0 %937
  %v939 = vadd.f32 %v860, %v861
  %v940 = vadd.f32 %v939, %v862
  %v941 = vadd.f32 %v940, %v863
  %942 = vadd.xlane.f32.xlu0 %v941
  %v943 = vpop.xlane.xlu0 %942
  %v944 = vadd.f32 %v724, %v744
  %v945 = vadd.f32 %v729, %v749
  %v946 = vadd.f32 %v734, %v754
  %v947 = vadd.f32 %v739, %v759
  %v948 = vadd.f32 %v868, %v888
  %v949 = vadd.f32 %v873, %v893
  %v950 = vadd.f32 %v878, %v898
  %v951 = vadd.f32 %v883, %v903
  %v952 = vadd.f32 %v944, %v764
  %v953 = vadd.f32 %v945, %v769
  %v954 = vadd.f32 %v946, %v774
  %v955 = vadd.f32 %v947, %v779
  %v956 = vadd.f32 %v948, %v908
  %v957 = vadd.f32 %v949, %v913
  %v958 = vadd.f32 %v950, %v918
  %v959 = vadd.f32 %v951, %v923
  %v960 = vadd.f32 %v952, %v784
  %v961 = vadd.f32 %v953, %v789
  %v962 = vadd.f32 %v954, %v794
  %v963 = vadd.f32 %v955, %v799
  %v964 = vadd.f32 %v956, %v928
  %v965 = vadd.f32 %v957, %v933
  %v966 = vadd.f32 %v958, %v938
  %v967 = vadd.f32 %v959, %v943
  %v968 = vmul.f32 %v960, 0.00048828125
  %v969 = vmul.f32 %v961, 0.00048828125
  %v970 = vmul.f32 %v962, 0.00048828125
  %v971 = vmul.f32 %v963, 0.00048828125
  %v972 = vmul.f32 %v964, 0.00048828125
  %v973 = vmul.f32 %v965, 0.00048828125
  %v974 = vmul.f32 %v966, 0.00048828125
  %v975 = vmul.f32 %v967, 0.00048828125
  %v976 = vmul.f32 %v968, %v968
  %v977 = vmul.f32 %v969, %v969
  %v978 = vmul.f32 %v970, %v970
  %v979 = vmul.f32 %v971, %v971
  %v980 = vsub.f32 %v972, %v976
  %v981 = vsub.f32 %v973, %v977
  %v982 = vsub.f32 %v974, %v978
  %v983 = vsub.f32 %v975, %v979
  %v984 = vld [vmem:[%s2] sm:$0xff]
  %v985 = vld [vmem:[%s2 + $0x8] sm:$0xff]
  %v986 = vld [vmem:[%s2 + $0x10] sm:$0xff]
  %v987 = vld [vmem:[%s2 + $0x18] sm:$0xff]
  %v988 = vadd.f32 %v980, 1e-05
  %v989 = vadd.f32 %v981, 1e-05
  %v990 = vadd.f32 %v982, 1e-05
  %v991 = vadd.f32 %v983, 1e-05
  %v992 = vrsqrt.pop %v988
  %v993 = vrsqrt.pop %v989
  %v994 = vrsqrt.pop %v990
  %v995 = vrsqrt.pop %v991
  %v996 = vmul.f32 %v984, %v992
  %v997 = vmul.f32 %v985, %v993
  %v998 = vmul.f32 %v986, %v994
  %v999 = vmul.f32 %v987, %v995
  %v1000 = vld [vmem:[%s3] sm:$0xff]
  %v1001 = vld [vmem:[%s3 + $0x8] sm:$0xff]
  %v1002 = vld [vmem:[%s3 + $0x10] sm:$0xff]
  %v1003 = vld [vmem:[%s3 + $0x18] sm:$0xff]
  %v1004 = vmul.f32 %v968, %v996
  %v1005 = vmul.f32 %v969, %v997
  %v1006 = vmul.f32 %v970, %v998
  %v1007 = vmul.f32 %v971, %v999
  %v1008 = vsub.f32 %v1000, %v1004
  %v1009 = vsub.f32 %v1001, %v1005
  %v1010 = vsub.f32 %v1002, %v1006
  %v1011 = vsub.f32 %v1003, %v1007
  %1013 = vset.pattern.permute.xlu0 0
  %1014 = vperm.xlu0 %1013, %v996
  %v1015 = vpop.permute.xlu0 %1014
  %1018 = vset.pattern.permute.xlu0 0
  %1019 = vperm.xlu0 %1018, %v997
  %v1020 = vpop.permute.xlu0 %1019
  %1023 = vset.pattern.permute.xlu0 0
  %1024 = vperm.xlu0 %1023, %v998
  %v1025 = vpop.permute.xlu0 %1024
  %1028 = vset.pattern.permute.xlu0 0
  %1029 = vperm.xlu0 %1028, %v999
  %v1030 = vpop.permute.xlu0 %1029
  %v1032 = vmul.f32 %v529, %v1015
  %v1033 = vmul.f32 %v531, %v1015
  %v1034 = vmul.f32 %v642, %v1015
  %v1035 = vmul.f32 %v644, %v1015
  %v1036 = vmul.f32 %v533, %v1020
  %v1037 = vmul.f32 %v535, %v1020
  %v1038 = vmul.f32 %v646, %v1020
  %v1039 = vmul.f32 %v648, %v1020
  %v1040 = vmul.f32 %v539, %v1025
  %v1041 = vmul.f32 %v541, %v1025
  %v1042 = vmul.f32 %v652, %v1025
  %v1043 = vmul.f32 %v654, %v1025
  %v1044 = vmul.f32 %v543, %v1030
  %v1045 = vmul.f32 %v545, %v1030
  %v1046 = vmul.f32 %v656, %v1030
  %v1047 = vmul.f32 %v658, %v1030
  %v1048 = vmul.f32 %v549, %v1015
  %v1049 = vmul.f32 %v551, %v1015
  %v1050 = vmul.f32 %v662, %v1015
  %v1051 = vmul.f32 %v664, %v1015
  %v1052 = vmul.f32 %v553, %v1020
  %v1053 = vmul.f32 %v555, %v1020
  %v1054 = vmul.f32 %v666, %v1020
  %v1055 = vmul.f32 %v668, %v1020
  %v1056 = vmul.f32 %v559, %v1025
  %v1057 = vmul.f32 %v561, %v1025
  %v1058 = vmul.f32 %v672, %v1025
  %v1059 = vmul.f32 %v674, %v1025
  %v1060 = vmul.f32 %v563, %v1030
  %v1061 = vmul.f32 %v565, %v1030
  %v1062 = vmul.f32 %v676, %v1030
  %v1063 = vmul.f32 %v678, %v1030
  %v1064 = vmul.f32 %v569, %v1015
  %v1065 = vmul.f32 %v571, %v1015
  %v1066 = vmul.f32 %v682, %v1015
  %v1067 = vmul.f32 %v684, %v1015
  %v1068 = vmul.f32 %v573, %v1020
  %v1069 = vmul.f32 %v575, %v1020
  %v1070 = vmul.f32 %v686, %v1020
  %v1071 = vmul.f32 %v688, %v1020
  %v1072 = vmul.f32 %v579, %v1025
  %v1073 = vmul.f32 %v581, %v1025
  %v1074 = vmul.f32 %v692, %v1025
  %v1075 = vmul.f32 %v694, %v1025
  %v1076 = vmul.f32 %v583, %v1030
  %v1077 = vmul.f32 %v585, %v1030
  %v1078 = vmul.f32 %v696, %v1030
  %v1079 = vmul.f32 %v698, %v1030
  %v1080 = vmul.f32 %v589, %v1015
  %v1081 = vmul.f32 %v591, %v1015
  %v1082 = vmul.f32 %v702, %v1015
  %v1083 = vmul.f32 %v704, %v1015
  %v1084 = vmul.f32 %v593, %v1020
  %v1085 = vmul.f32 %v595, %v1020
  %v1086 = vmul.f32 %v706, %v1020
  %v1087 = vmul.f32 %v708, %v1020
  %v1088 = vmul.f32 %v599, %v1025
  %v1089 = vmul.f32 %v601, %v1025
  %v1090 = vmul.f32 %v712, %v1025
  %v1091 = vmul.f32 %v714, %v1025
  %v1092 = vmul.f32 %v603, %v1030
  %v1093 = vmul.f32 %v605, %v1030
  %v1094 = vmul.f32 %v716, %v1030
  %v1095 = vmul.f32 %v718, %v1030
  %1097 = vset.pattern.permute.xlu0 0
  %1098 = vperm.xlu0 %1097, %v1008
  %v1099 = vpop.permute.xlu0 %1098
  %1102 = vset.pattern.permute.xlu0 0
  %1103 = vperm.xlu0 %1102, %v1009
  %v1104 = vpop.permute.xlu0 %1103
  %1107 = vset.pattern.permute.xlu0 0
  %1108 = vperm.xlu0 %1107, %v1010
  %v1109 = vpop.permute.xlu0 %1108
  %1112 = vset.pattern.permute.xlu0 0
  %1113 = vperm.xlu0 %1112, %v1011
  %v1114 = vpop.permute.xlu0 %1113
  %v1116 = vadd.f32 %v1032, %v1099
  %v1117 = vadd.f32 %v1033, %v1099
  %v1118 = vadd.f32 %v1034, %v1099
  %v1119 = vadd.f32 %v1035, %v1099
  %v1120 = vadd.f32 %v1036, %v1104
  %v1121 = vadd.f32 %v1037, %v1104
  %v1122 = vadd.f32 %v1038, %v1104
  %v1123 = vadd.f32 %v1039, %v1104
  %v1124 = vadd.f32 %v1040, %v1109
  %v1125 = vadd.f32 %v1041, %v1109
  %v1126 = vadd.f32 %v1042, %v1109
  %v1127 = vadd.f32 %v1043, %v1109
  %v1128 = vadd.f32 %v1044, %v1114
  %v1129 = vadd.f32 %v1045, %v1114
  %v1130 = vadd.f32 %v1046, %v1114
  %v1131 = vadd.f32 %v1047, %v1114
  %v1132 = vadd.f32 %v1048, %v1099
  %v1133 = vadd.f32 %v1049, %v1099
  %v1134 = vadd.f32 %v1050, %v1099
  %v1135 = vadd.f32 %v1051, %v1099
  %v1136 = vadd.f32 %v1052, %v1104
  %v1137 = vadd.f32 %v1053, %v1104
  %v1138 = vadd.f32 %v1054, %v1104
  %v1139 = vadd.f32 %v1055, %v1104
  %v1140 = vadd.f32 %v1056, %v1109
  %v1141 = vadd.f32 %v1057, %v1109
  %v1142 = vadd.f32 %v1058, %v1109
  %v1143 = vadd.f32 %v1059, %v1109
  %v1144 = vadd.f32 %v1060, %v1114
  %v1145 = vadd.f32 %v1061, %v1114
  %v1146 = vadd.f32 %v1062, %v1114
  %v1147 = vadd.f32 %v1063, %v1114
  %v1148 = vadd.f32 %v1064, %v1099
  %v1149 = vadd.f32 %v1065, %v1099
  %v1150 = vadd.f32 %v1066, %v1099
  %v1151 = vadd.f32 %v1067, %v1099
  %v1152 = vadd.f32 %v1068, %v1104
  %v1153 = vadd.f32 %v1069, %v1104
  %v1154 = vadd.f32 %v1070, %v1104
  %v1155 = vadd.f32 %v1071, %v1104
  %v1156 = vadd.f32 %v1072, %v1109
  %v1157 = vadd.f32 %v1073, %v1109
  %v1158 = vadd.f32 %v1074, %v1109
  %v1159 = vadd.f32 %v1075, %v1109
  %v1160 = vadd.f32 %v1076, %v1114
  %v1161 = vadd.f32 %v1077, %v1114
  %v1162 = vadd.f32 %v1078, %v1114
  %v1163 = vadd.f32 %v1079, %v1114
  %v1164 = vadd.f32 %v1080, %v1099
  %v1165 = vadd.f32 %v1081, %v1099
  %v1166 = vadd.f32 %v1082, %v1099
  %v1167 = vadd.f32 %v1083, %v1099
  %v1168 = vadd.f32 %v1084, %v1104
  %v1169 = vadd.f32 %v1085, %v1104
  %v1170 = vadd.f32 %v1086, %v1104
  %v1171 = vadd.f32 %v1087, %v1104
  %v1172 = vadd.f32 %v1088, %v1109
  %v1173 = vadd.f32 %v1089, %v1109
  %v1174 = vadd.f32 %v1090, %v1109
  %v1175 = vadd.f32 %v1091, %v1109
  %v1176 = vadd.f32 %v1092, %v1114
  %v1177 = vadd.f32 %v1093, %v1114
  %v1178 = vadd.f32 %v1094, %v1114
  %v1179 = vadd.f32 %v1095, %v1114
  %v1180 = vmax.f32 %v1116, 0.0
  %v1181 = vmax.f32 %v1117, 0.0
  %v1182 = vmax.f32 %v1118, 0.0
  %v1183 = vmax.f32 %v1119, 0.0
  %v1184 = vmax.f32 %v1120, 0.0
  %v1185 = vmax.f32 %v1121, 0.0
  %v1186 = vmax.f32 %v1122, 0.0
  %v1187 = vmax.f32 %v1123, 0.0
  %v1188 = vmax.f32 %v1124, 0.0
  %v1189 = vmax.f32 %v1125, 0.0
  %v1190 = vmax.f32 %v1126, 0.0
  %v1191 = vmax.f32 %v1127, 0.0
  %v1192 = vmax.f32 %v1128, 0.0
  %v1193 = vmax.f32 %v1129, 0.0
  %v1194 = vmax.f32 %v1130, 0.0
  %v1195 = vmax.f32 %v1131, 0.0
  %v1196 = vmax.f32 %v1132, 0.0
  %v1197 = vmax.f32 %v1133, 0.0
  %v1198 = vmax.f32 %v1134, 0.0
  %v1199 = vmax.f32 %v1135, 0.0
  %v1200 = vmax.f32 %v1136, 0.0
  %v1201 = vmax.f32 %v1137, 0.0
  %v1202 = vmax.f32 %v1138, 0.0
  %v1203 = vmax.f32 %v1139, 0.0
  %v1204 = vmax.f32 %v1140, 0.0
  %v1205 = vmax.f32 %v1141, 0.0
  %v1206 = vmax.f32 %v1142, 0.0
  %v1207 = vmax.f32 %v1143, 0.0
  %v1208 = vmax.f32 %v1144, 0.0
  %v1209 = vmax.f32 %v1145, 0.0
  %v1210 = vmax.f32 %v1146, 0.0
  %v1211 = vmax.f32 %v1147, 0.0
  %v1212 = vmax.f32 %v1148, 0.0
  %v1213 = vmax.f32 %v1149, 0.0
  %v1214 = vmax.f32 %v1150, 0.0
  %v1215 = vmax.f32 %v1151, 0.0
  %v1216 = vmax.f32 %v1152, 0.0
  %v1217 = vmax.f32 %v1153, 0.0
  %v1218 = vmax.f32 %v1154, 0.0
  %v1219 = vmax.f32 %v1155, 0.0
  %v1220 = vmax.f32 %v1156, 0.0
  %v1221 = vmax.f32 %v1157, 0.0
  %v1222 = vmax.f32 %v1158, 0.0
  %v1223 = vmax.f32 %v1159, 0.0
  %v1224 = vmax.f32 %v1160, 0.0
  %v1225 = vmax.f32 %v1161, 0.0
  %v1226 = vmax.f32 %v1162, 0.0
  %v1227 = vmax.f32 %v1163, 0.0
  %v1228 = vmax.f32 %v1164, 0.0
  %v1229 = vmax.f32 %v1165, 0.0
  %v1230 = vmax.f32 %v1166, 0.0
  %v1231 = vmax.f32 %v1167, 0.0
  %v1232 = vmax.f32 %v1168, 0.0
  %v1233 = vmax.f32 %v1169, 0.0
  %v1234 = vmax.f32 %v1170, 0.0
  %v1235 = vmax.f32 %v1171, 0.0
  %v1236 = vmax.f32 %v1172, 0.0
  %v1237 = vmax.f32 %v1173, 0.0
  %v1238 = vmax.f32 %v1174, 0.0
  %v1239 = vmax.f32 %v1175, 0.0
  %v1240 = vmax.f32 %v1176, 0.0
  %v1241 = vmax.f32 %v1177, 0.0
  %v1242 = vmax.f32 %v1178, 0.0
  %v1243 = vmax.f32 %v1179, 0.0
  %v1244 = vpack.c.bf16 %v1184, %v1180
  %v1245 = vpack.c.bf16 %v1185, %v1181
  %v1246 = vpack.c.bf16 %v1186, %v1182
  %v1247 = vpack.c.bf16 %v1187, %v1183
  %v1248 = vpack.c.bf16 %v1192, %v1188
  %v1249 = vpack.c.bf16 %v1193, %v1189
  %v1250 = vpack.c.bf16 %v1194, %v1190
  %v1251 = vpack.c.bf16 %v1195, %v1191
  %v1252 = vpack.c.bf16 %v1200, %v1196
  %v1253 = vpack.c.bf16 %v1201, %v1197
  %v1254 = vpack.c.bf16 %v1202, %v1198
  %v1255 = vpack.c.bf16 %v1203, %v1199
  %v1256 = vpack.c.bf16 %v1208, %v1204
  %v1257 = vpack.c.bf16 %v1209, %v1205
  %v1258 = vpack.c.bf16 %v1210, %v1206
  %v1259 = vpack.c.bf16 %v1211, %v1207
  %v1260 = vpack.c.bf16 %v1216, %v1212
  %v1261 = vpack.c.bf16 %v1217, %v1213
  %v1262 = vpack.c.bf16 %v1218, %v1214
  %v1263 = vpack.c.bf16 %v1219, %v1215
  %v1264 = vpack.c.bf16 %v1224, %v1220
  %v1265 = vpack.c.bf16 %v1225, %v1221
  %v1266 = vpack.c.bf16 %v1226, %v1222
  %v1267 = vpack.c.bf16 %v1227, %v1223
  %v1268 = vpack.c.bf16 %v1232, %v1228
  %v1269 = vpack.c.bf16 %v1233, %v1229
  %v1270 = vpack.c.bf16 %v1234, %v1230
  %v1271 = vpack.c.bf16 %v1235, %v1231
  %v1272 = vpack.c.bf16 %v1240, %v1236
  %v1273 = vpack.c.bf16 %v1241, %v1237
  %v1274 = vpack.c.bf16 %v1242, %v1238
  %v1275 = vpack.c.bf16 %v1243, %v1239
  %v1308 = vunpack.c.l.b16 %v1244
  %v1309 = vunpack.c.l.b16 %v1245
  %v1310 = vunpack.c.l.b16 %v1246
  %v1311 = vunpack.c.l.b16 %v1247
  %v1312 = vunpack.c.h.b16 %v1244
  %v1313 = vunpack.c.h.b16 %v1245
  %v1314 = vunpack.c.h.b16 %v1246
  %v1315 = vunpack.c.h.b16 %v1247
  %v1316 = vunpack.c.l.b16 %v1248
  %v1317 = vunpack.c.l.b16 %v1249
  %v1318 = vunpack.c.l.b16 %v1250
  %v1319 = vunpack.c.l.b16 %v1251
  %v1320 = vunpack.c.h.b16 %v1248
  %v1321 = vunpack.c.h.b16 %v1249
  %v1322 = vunpack.c.h.b16 %v1250
  %v1323 = vunpack.c.h.b16 %v1251
  %v1324 = vunpack.c.l.b16 %v1252
  %v1325 = vunpack.c.l.b16 %v1253
  %v1326 = vunpack.c.l.b16 %v1254
  %v1327 = vunpack.c.l.b16 %v1255
  %v1328 = vunpack.c.h.b16 %v1252
  %v1329 = vunpack.c.h.b16 %v1253
  %v1330 = vunpack.c.h.b16 %v1254
  %v1331 = vunpack.c.h.b16 %v1255
  %v1332 = vunpack.c.l.b16 %v1256
  %v1333 = vunpack.c.l.b16 %v1257
  %v1334 = vunpack.c.l.b16 %v1258
  %v1335 = vunpack.c.l.b16 %v1259
  %v1336 = vunpack.c.h.b16 %v1256
  %v1337 = vunpack.c.h.b16 %v1257
  %v1338 = vunpack.c.h.b16 %v1258
  %v1339 = vunpack.c.h.b16 %v1259
  %v1340 = vunpack.c.l.b16 %v1260
  %v1341 = vunpack.c.l.b16 %v1261
  %v1342 = vunpack.c.l.b16 %v1262
  %v1343 = vunpack.c.l.b16 %v1263
  %v1344 = vunpack.c.h.b16 %v1260
  %v1345 = vunpack.c.h.b16 %v1261
  %v1346 = vunpack.c.h.b16 %v1262
  %v1347 = vunpack.c.h.b16 %v1263
  %v1348 = vunpack.c.l.b16 %v1264
  %v1349 = vunpack.c.l.b16 %v1265
  %v1350 = vunpack.c.l.b16 %v1266
  %v1351 = vunpack.c.l.b16 %v1267
  %v1352 = vunpack.c.h.b16 %v1264
  %v1353 = vunpack.c.h.b16 %v1265
  %v1354 = vunpack.c.h.b16 %v1266
  %v1355 = vunpack.c.h.b16 %v1267
  %v1356 = vunpack.c.l.b16 %v1268
  %v1357 = vunpack.c.l.b16 %v1269
  %v1358 = vunpack.c.l.b16 %v1270
  %v1359 = vunpack.c.l.b16 %v1271
  %v1360 = vunpack.c.h.b16 %v1268
  %v1361 = vunpack.c.h.b16 %v1269
  %v1362 = vunpack.c.h.b16 %v1270
  %v1363 = vunpack.c.h.b16 %v1271
  %v1364 = vunpack.c.l.b16 %v1272
  %v1365 = vunpack.c.l.b16 %v1273
  %v1366 = vunpack.c.l.b16 %v1274
  %v1367 = vunpack.c.l.b16 %v1275
  %v1368 = vunpack.c.h.b16 %v1272
  %v1369 = vunpack.c.h.b16 %v1273
  %v1370 = vunpack.c.h.b16 %v1274
  %v1371 = vunpack.c.h.b16 %v1275
  %v1372 = vpack.c.b16 %v1309, %v1308
  %v1373 = vpack.c.b16 %v1311, %v1310
  %v1374 = vpack.c.b16 %v1313, %v1312
  %v1375 = vpack.c.b16 %v1315, %v1314
  %v1376 = vpack.c.b16 %v1317, %v1316
  %v1377 = vpack.c.b16 %v1319, %v1318
  %v1378 = vpack.c.b16 %v1321, %v1320
  %v1379 = vpack.c.b16 %v1323, %v1322
  %v1380 = vpack.c.b16 %v1325, %v1324
  %v1381 = vpack.c.b16 %v1327, %v1326
  %v1382 = vpack.c.b16 %v1329, %v1328
  %v1383 = vpack.c.b16 %v1331, %v1330
  %v1384 = vpack.c.b16 %v1333, %v1332
  %v1385 = vpack.c.b16 %v1335, %v1334
  %v1386 = vpack.c.b16 %v1337, %v1336
  %v1387 = vpack.c.b16 %v1339, %v1338
  %v1388 = vpack.c.b16 %v1341, %v1340
  %v1389 = vpack.c.b16 %v1343, %v1342
  %v1390 = vpack.c.b16 %v1345, %v1344
  %v1391 = vpack.c.b16 %v1347, %v1346
  %v1392 = vpack.c.b16 %v1349, %v1348
  %v1393 = vpack.c.b16 %v1351, %v1350
  %v1394 = vpack.c.b16 %v1353, %v1352
  %v1395 = vpack.c.b16 %v1355, %v1354
  %v1396 = vpack.c.b16 %v1357, %v1356
  %v1397 = vpack.c.b16 %v1359, %v1358
  %v1398 = vpack.c.b16 %v1361, %v1360
  %v1399 = vpack.c.b16 %v1363, %v1362
  %v1400 = vpack.c.b16 %v1365, %v1364
  %v1401 = vpack.c.b16 %v1367, %v1366
  %v1402 = vpack.c.b16 %v1369, %v1368
  %v1403 = vpack.c.b16 %v1371, %v1370
  %1436 = vst [vmem:[%s4] sm:$0xff] %v1372
  %1437 = vst [vmem:[%s4 + $0x8] sm:$0xff] %v1373
  %1438 = vst [vmem:[%s4 + $0x10] sm:$0xff] %v1374
  %1439 = vst [vmem:[%s4 + $0x18] sm:$0xff] %v1375
  %1440 = vst [vmem:[%s4 + $0x20] sm:$0xff] %v1376
  %1441 = vst [vmem:[%s4 + $0x28] sm:$0xff] %v1377
  %1442 = vst [vmem:[%s4 + $0x30] sm:$0xff] %v1378
  %1443 = vst [vmem:[%s4 + $0x38] sm:$0xff] %v1379
  %1444 = vst [vmem:[%s4 + $0x40] sm:$0xff] %v1380
  %1445 = vst [vmem:[%s4 + $0x48] sm:$0xff] %v1381
  %1446 = vst [vmem:[%s4 + $0x50] sm:$0xff] %v1382
  %1447 = vst [vmem:[%s4 + $0x58] sm:$0xff] %v1383
  %1448 = vst [vmem:[%s4 + $0x60] sm:$0xff] %v1384
  %1449 = vst [vmem:[%s4 + $0x68] sm:$0xff] %v1385
  %1450 = vst [vmem:[%s4 + $0x70] sm:$0xff] %v1386
  %1451 = vst [vmem:[%s4 + $0x78] sm:$0xff] %v1387
  %1452 = vst [vmem:[%s4 + $0x80] sm:$0xff] %v1388
  %1453 = vst [vmem:[%s4 + $0x88] sm:$0xff] %v1389
  %1454 = vst [vmem:[%s4 + $0x90] sm:$0xff] %v1390
  %1455 = vst [vmem:[%s4 + $0x98] sm:$0xff] %v1391
  %1456 = vst [vmem:[%s4 + $0xa0] sm:$0xff] %v1392
  %1457 = vst [vmem:[%s4 + $0xa8] sm:$0xff] %v1393
  %1458 = vst [vmem:[%s4 + $0xb0] sm:$0xff] %v1394
  %1459 = vst [vmem:[%s4 + $0xb8] sm:$0xff] %v1395
  %1460 = vst [vmem:[%s4 + $0xc0] sm:$0xff] %v1396
  %1461 = vst [vmem:[%s4 + $0xc8] sm:$0xff] %v1397
  %1462 = vst [vmem:[%s4 + $0xd0] sm:$0xff] %v1398
  %1463 = vst [vmem:[%s4 + $0xd8] sm:$0xff] %v1399
  %1464 = vst [vmem:[%s4 + $0xe0] sm:$0xff] %v1400
  %1465 = vst [vmem:[%s4 + $0xe8] sm:$0xff] %v1401
  %1466 = vst [vmem:[%s4 + $0xf0] sm:$0xff] %v1402
  %1467 = vst [vmem:[%s4 + $0xf8] sm:$0xff] %v1403
  // Predicated region
  $region18: #{_lambda_.8} parent=0 // pred_check
    _
  $region19: #{_lambda_.8} parent=0 // pred_check_branch
    %1469 = sbr.rel (0) target = $region21
  $region20: #{_lambda_.8} parent=0 // pred_region
    _
  $region21: #{_lambda_.8} parent=0 // pred_fallthru
    _
  // Predicated region
  $region22: #{_lambda_.8} parent=0 // pred_check
    _
  $region23: #{_lambda_.8} parent=0 // pred_check_branch
    %1471 = sbr.rel (0) target = $region25
  $region24: #{_lambda_.8} parent=0 // pred_region
    _
  $region25: #{_lambda_.8} parent=0 // pred_fallthru
    _

// kernel: _lambda_.9
$region0: #{_lambda_.9}
  #allocation0 [shape = 'u32[]', space=smem, size = 0x4, offset = 0x4, fixed_abs, tag = 'smem constant byte address 0x4 - core index']
  #allocation1 [shape = 'u32[144,128]{1,0:T(1,128)}', space=vmem, size = 0x12000, scoped, tag = 'internal scratch']
  %s0 = inlined_call_operand.vmem [shape: bf16[12,288], index: 0, kind: input, shape index: {}]
  %s1 = inlined_call_operand.vmem [shape: bf16[288,2048], index: 1, kind: input, shape index: {}]
  %s2 = inlined_call_operand.vmem [shape: f32[12,1], index: 2, kind: input, shape index: {}]
  %s3 = inlined_call_operand.vmem [shape: f32[12,2048], index: 3, kind: output, shape index: {}]
  %s4 = sld [smem:[#allocation0]]
  $region22: #{_lambda_.9} parent=0
    _
  %s6 = ssub.s32 1, %s4
  %s7 = scalar_select 0, %s6, %s4
  // Predicated region
  $region2: #{_lambda_.9} parent=0 // pred_check
    _
  $region3: #{_lambda_.9} parent=0 // pred_check_branch
    %9 = sbr.rel (0) target = $region5
  $region4: #{_lambda_.9} parent=0 // pred_region
    _
  $region5: #{_lambda_.9} parent=0 // pred_fallthru
    _
  // Predicated region
  $region6: #{_lambda_.9} parent=0 // pred_check
    _
  $region7: #{_lambda_.9} parent=0 // pred_check_branch
    %11 = sbr.rel (0) target = $region9
  $region8: #{_lambda_.9} parent=0 // pred_region
    _
  $region9: #{_lambda_.9} parent=0 // pred_fallthru
    _
  // Predicated region
  $region10: #{_lambda_.9} parent=0 // pred_check
    _
  $region11: #{_lambda_.9} parent=0 // pred_check_branch
    %13 = sbr.rel (0) target = $region13
  $region12: #{_lambda_.9} parent=0 // pred_region
    _
  $region13: #{_lambda_.9} parent=0 // pred_fallthru
    _
  %v15 = vld [vmem:[%s0] sm:$0xff]
  %v16 = vld [vmem:[%s0 + $0x8] sm:$0xf]
  %v17 = vld [vmem:[%s0 + $0xc] sm:$0x33]
  %v18 = vld [vmem:[%s0 + $0x14] sm:$0x3]
  %v19 = vld [vmem:[%s1] sm:$0xff]
  %v20 = vld [vmem:[%s1 + $0x8] sm:$0xff]
  %v21 = vld [vmem:[%s1 + $0x10] sm:$0xff]
  %v22 = vld [vmem:[%s1 + $0x18] sm:$0xff]
  %v23 = vld [vmem:[%s1 + $0x20] sm:$0xff]
  %v24 = vld [vmem:[%s1 + $0x28] sm:$0xff]
  %v25 = vld [vmem:[%s1 + $0x30] sm:$0xff]
  %v26 = vld [vmem:[%s1 + $0x38] sm:$0xff]
  %v27 = vld [vmem:[%s1 + $0x40] sm:$0xff]
  %v28 = vld [vmem:[%s1 + $0x48] sm:$0xff]
  %v29 = vld [vmem:[%s1 + $0x50] sm:$0xff]
  %v30 = vld [vmem:[%s1 + $0x58] sm:$0xff]
  %v31 = vld [vmem:[%s1 + $0x60] sm:$0xff]
  %v32 = vld [vmem:[%s1 + $0x68] sm:$0xff]
  %v33 = vld [vmem:[%s1 + $0x70] sm:$0xff]
  %v34 = vld [vmem:[%s1 + $0x78] sm:$0xff]
  %v35 = vld [vmem:[%s1 + $0x80] sm:$0xff]
  %v36 = vld [vmem:[%s1 + $0x88] sm:$0xff]
  %v37 = vld [vmem:[%s1 + $0x90] sm:$0xff]
  %v38 = vld [vmem:[%s1 + $0x98] sm:$0xff]
  %v39 = vld [vmem:[%s1 + $0xa0] sm:$0xff]
  %v40 = vld [vmem:[%s1 + $0xa8] sm:$0xff]
  %v41 = vld [vmem:[%s1 + $0xb0] sm:$0xff]
  %v42 = vld [vmem:[%s1 + $0xb8] sm:$0xff]
  %v43 = vld [vmem:[%s1 + $0xc0] sm:$0xff]
  %v44 = vld [vmem:[%s1 + $0xc8] sm:$0xff]
  %v45 = vld [vmem:[%s1 + $0xd0] sm:$0xff]
  %v46 = vld [vmem:[%s1 + $0xd8] sm:$0xff]
  %v47 = vld [vmem:[%s1 + $0xe0] sm:$0xff]
  %v48 = vld [vmem:[%s1 + $0xe8] sm:$0xff]
  %v49 = vld [vmem:[%s1 + $0xf0] sm:$0xff]
  %v50 = vld [vmem:[%s1 + $0xf8] sm:$0xff]
  %v51 = vld [vmem:[%s1 + $0x100] sm:$0xff]
  %v52 = vld [vmem:[%s1 + $0x108] sm:$0xff]
  %v53 = vld [vmem:[%s1 + $0x110] sm:$0xff]
  %v54 = vld [vmem:[%s1 + $0x118] sm:$0xff]
  %v55 = vld [vmem:[%s1 + $0x120] sm:$0xff]
  %v56 = vld [vmem:[%s1 + $0x128] sm:$0xff]
  %v57 = vld [vmem:[%s1 + $0x130] sm:$0xff]
  %v58 = vld [vmem:[%s1 + $0x138] sm:$0xff]
  %v59 = vld [vmem:[%s1 + $0x140] sm:$0xff]
  %v60 = vld [vmem:[%s1 + $0x148] sm:$0xff]
  %v61 = vld [vmem:[%s1 + $0x150] sm:$0xff]
  %v62 = vld [vmem:[%s1 + $0x158] sm:$0xff]
  %v63 = vld [vmem:[%s1 + $0x160] sm:$0xff]
  %v64 = vld [vmem:[%s1 + $0x168] sm:$0xff]
  %v65 = vld [vmem:[%s1 + $0x170] sm:$0xff]
  %v66 = vld [vmem:[%s1 + $0x178] sm:$0xff]
  %v67 = vld [vmem:[%s1 + $0x180] sm:$0xff]
  %v68 = vld [vmem:[%s1 + $0x188] sm:$0xff]
  %v69 = vld [vmem:[%s1 + $0x190] sm:$0xff]
  %v70 = vld [vmem:[%s1 + $0x198] sm:$0xff]
  %v71 = vld [vmem:[%s1 + $0x1a0] sm:$0xff]
  %v72 = vld [vmem:[%s1 + $0x1a8] sm:$0xff]
  %v73 = vld [vmem:[%s1 + $0x1b0] sm:$0xff]
  %v74 = vld [vmem:[%s1 + $0x1b8] sm:$0xff]
  %v75 = vld [vmem:[%s1 + $0x1c0] sm:$0xff]
  %v76 = vld [vmem:[%s1 + $0x1c8] sm:$0xff]
  %v77 = vld [vmem:[%s1 + $0x1d0] sm:$0xff]
  %v78 = vld [vmem:[%s1 + $0x1d8] sm:$0xff]
  %v79 = vld [vmem:[%s1 + $0x1e0] sm:$0xff]
  %v80 = vld [vmem:[%s1 + $0x1e8] sm:$0xff]
  %v81 = vld [vmem:[%s1 + $0x1f0] sm:$0xff]
  %v82 = vld [vmem:[%s1 + $0x1f8] sm:$0xff]
  %v83 = vld [vmem:[%s1 + $0x200] sm:$0xff]
  %v84 = vld [vmem:[%s1 + $0x208] sm:$0xff]
  %v85 = vld [vmem:[%s1 + $0x210] sm:$0xff]
  %v86 = vld [vmem:[%s1 + $0x218] sm:$0xff]
  %v87 = vld [vmem:[%s1 + $0x220] sm:$0xff]
  %v88 = vld [vmem:[%s1 + $0x228] sm:$0xff]
  %v89 = vld [vmem:[%s1 + $0x230] sm:$0xff]
  %v90 = vld [vmem:[%s1 + $0x238] sm:$0xff]
  %v91 = vld [vmem:[%s1 + $0x240] sm:$0xff]
  %v92 = vld [vmem:[%s1 + $0x248] sm:$0xff]
  %v93 = vld [vmem:[%s1 + $0x250] sm:$0xff]
  %v94 = vld [vmem:[%s1 + $0x258] sm:$0xff]
  %v95 = vld [vmem:[%s1 + $0x260] sm:$0xff]
  %v96 = vld [vmem:[%s1 + $0x268] sm:$0xff]
  %v97 = vld [vmem:[%s1 + $0x270] sm:$0xff]
  %v98 = vld [vmem:[%s1 + $0x278] sm:$0xff]
  %v99 = vld [vmem:[%s1 + $0x280] sm:$0xff]
  %v100 = vld [vmem:[%s1 + $0x288] sm:$0xff]
  %v101 = vld [vmem:[%s1 + $0x290] sm:$0xff]
  %v102 = vld [vmem:[%s1 + $0x298] sm:$0xff]
  %v103 = vld [vmem:[%s1 + $0x2a0] sm:$0xff]
  %v104 = vld [vmem:[%s1 + $0x2a8] sm:$0xff]
  %v105 = vld [vmem:[%s1 + $0x2b0] sm:$0xff]
  %v106 = vld [vmem:[%s1 + $0x2b8] sm:$0xff]
  %v107 = vld [vmem:[%s1 + $0x2c0] sm:$0xff]
  %v108 = vld [vmem:[%s1 + $0x2c8] sm:$0xff]
  %v109 = vld [vmem:[%s1 + $0x2d0] sm:$0xff]
  %v110 = vld [vmem:[%s1 + $0x2d8] sm:$0xff]
  %v111 = vld [vmem:[%s1 + $0x2e0] sm:$0xff]
  %v112 = vld [vmem:[%s1 + $0x2e8] sm:$0xff]
  %v113 = vld [vmem:[%s1 + $0x2f0] sm:$0xff]
  %v114 = vld [vmem:[%s1 + $0x2f8] sm:$0xff]
  %v115 = vld [vmem:[%s1 + $0x300] sm:$0xff]
  %v116 = vld [vmem:[%s1 + $0x308] sm:$0xff]
  %v117 = vld [vmem:[%s1 + $0x310] sm:$0xff]
  %v118 = vld [vmem:[%s1 + $0x318] sm:$0xff]
  %v119 = vld [vmem:[%s1 + $0x320] sm:$0xff]
  %v120 = vld [vmem:[%s1 + $0x328] sm:$0xff]
  %v121 = vld [vmem:[%s1 + $0x330] sm:$0xff]
  %v122 = vld [vmem:[%s1 + $0x338] sm:$0xff]
  %v123 = vld [vmem:[%s1 + $0x340] sm:$0xff]
  %v124 = vld [vmem:[%s1 + $0x348] sm:$0xff]
  %v125 = vld [vmem:[%s1 + $0x350] sm:$0xff]
  %v126 = vld [vmem:[%s1 + $0x358] sm:$0xff]
  %v127 = vld [vmem:[%s1 + $0x360] sm:$0xff]
  %v128 = vld [vmem:[%s1 + $0x368] sm:$0xff]
  %v129 = vld [vmem:[%s1 + $0x370] sm:$0xff]
  %v130 = vld [vmem:[%s1 + $0x378] sm:$0xff]
  %v131 = vld [vmem:[%s1 + $0x380] sm:$0xff]
  %v132 = vld [vmem:[%s1 + $0x388] sm:$0xff]
  %v133 = vld [vmem:[%s1 + $0x390] sm:$0xff]
  %v134 = vld [vmem:[%s1 + $0x398] sm:$0xff]
  %v135 = vld [vmem:[%s1 + $0x3a0] sm:$0xff]
  %v136 = vld [vmem:[%s1 + $0x3a8] sm:$0xff]
  %v137 = vld [vmem:[%s1 + $0x3b0] sm:$0xff]
  %v138 = vld [vmem:[%s1 + $0x3b8] sm:$0xff]
  %v139 = vld [vmem:[%s1 + $0x3c0] sm:$0xff]
  %v140 = vld [vmem:[%s1 + $0x3c8] sm:$0xff]
  %v141 = vld [vmem:[%s1 + $0x3d0] sm:$0xff]
  %v142 = vld [vmem:[%s1 + $0x3d8] sm:$0xff]
  %v143 = vld [vmem:[%s1 + $0x3e0] sm:$0xff]
  %v144 = vld [vmem:[%s1 + $0x3e8] sm:$0xff]
  %v145 = vld [vmem:[%s1 + $0x3f0] sm:$0xff]
  %v146 = vld [vmem:[%s1 + $0x3f8] sm:$0xff]
  %v147 = vld [vmem:[%s1 + $0x400] sm:$0xff]
  %v148 = vld [vmem:[%s1 + $0x408] sm:$0xff]
  %v149 = vld [vmem:[%s1 + $0x410] sm:$0xff]
  %v150 = vld [vmem:[%s1 + $0x418] sm:$0xff]
  %v151 = vld [vmem:[%s1 + $0x420] sm:$0xff]
  %v152 = vld [vmem:[%s1 + $0x428] sm:$0xff]
  %v153 = vld [vmem:[%s1 + $0x430] sm:$0xff]
  %v154 = vld [vmem:[%s1 + $0x438] sm:$0xff]
  %v155 = vld [vmem:[%s1 + $0x440] sm:$0xff]
  %v156 = vld [vmem:[%s1 + $0x448] sm:$0xff]
  %v157 = vld [vmem:[%s1 + $0x450] sm:$0xff]
  %v158 = vld [vmem:[%s1 + $0x458] sm:$0xff]
  %v159 = vld [vmem:[%s1 + $0x460] sm:$0xff]
  %v160 = vld [vmem:[%s1 + $0x468] sm:$0xff]
  %v161 = vld [vmem:[%s1 + $0x470] sm:$0xff]
  %v162 = vld [vmem:[%s1 + $0x478] sm:$0xff]
  %v163 = vld [vmem:[%s1 + $0x480] sm:$0xff]
  %v164 = vld [vmem:[%s1 + $0x488] sm:$0xff]
  %v165 = vld [vmem:[%s1 + $0x490] sm:$0xff]
  %v166 = vld [vmem:[%s1 + $0x498] sm:$0xff]
  %v167 = vld [vmem:[%s1 + $0x4a0] sm:$0xff]
  %v168 = vld [vmem:[%s1 + $0x4a8] sm:$0xff]
  %v169 = vld [vmem:[%s1 + $0x4b0] sm:$0xff]
  %v170 = vld [vmem:[%s1 + $0x4b8] sm:$0xff]
  %v171 = vld [vmem:[%s1 + $0x4c0] sm:$0xff]
  %v172 = vld [vmem:[%s1 + $0x4c8] sm:$0xff]
  %v173 = vld [vmem:[%s1 + $0x4d0] sm:$0xff]
  %v174 = vld [vmem:[%s1 + $0x4d8] sm:$0xff]
  %v175 = vld [vmem:[%s1 + $0x4e0] sm:$0xff]
  %v176 = vld [vmem:[%s1 + $0x4e8] sm:$0xff]
  %v177 = vld [vmem:[%s1 + $0x4f0] sm:$0xff]
  %v178 = vld [vmem:[%s1 + $0x4f8] sm:$0xff]
  %v179 = vld [vmem:[%s1 + $0x500] sm:$0xff]
  %v180 = vld [vmem:[%s1 + $0x508] sm:$0xff]
  %v181 = vld [vmem:[%s1 + $0x510] sm:$0xff]
  %v182 = vld [vmem:[%s1 + $0x518] sm:$0xff]
  %v183 = vld [vmem:[%s1 + $0x520] sm:$0xff]
  %v184 = vld [vmem:[%s1 + $0x528] sm:$0xff]
  %v185 = vld [vmem:[%s1 + $0x530] sm:$0xff]
  %v186 = vld [vmem:[%s1 + $0x538] sm:$0xff]
  %v187 = vld [vmem:[%s1 + $0x540] sm:$0xff]
  %v188 = vld [vmem:[%s1 + $0x548] sm:$0xff]
  %v189 = vld [vmem:[%s1 + $0x550] sm:$0xff]
  %v190 = vld [vmem:[%s1 + $0x558] sm:$0xff]
  %v191 = vld [vmem:[%s1 + $0x560] sm:$0xff]
  %v192 = vld [vmem:[%s1 + $0x568] sm:$0xff]
  %v193 = vld [vmem:[%s1 + $0x570] sm:$0xff]
  %v194 = vld [vmem:[%s1 + $0x578] sm:$0xff]
  %v195 = vld [vmem:[%s1 + $0x580] sm:$0xff]
  %v196 = vld [vmem:[%s1 + $0x588] sm:$0xff]
  %v197 = vld [vmem:[%s1 + $0x590] sm:$0xff]
  %v198 = vld [vmem:[%s1 + $0x598] sm:$0xff]
  %v199 = vld [vmem:[%s1 + $0x5a0] sm:$0xff]
  %v200 = vld [vmem:[%s1 + $0x5a8] sm:$0xff]
  %v201 = vld [vmem:[%s1 + $0x5b0] sm:$0xff]
  %v202 = vld [vmem:[%s1 + $0x5b8] sm:$0xff]
  %v203 = vld [vmem:[%s1 + $0x5c0] sm:$0xff]
  %v204 = vld [vmem:[%s1 + $0x5c8] sm:$0xff]
  %v205 = vld [vmem:[%s1 + $0x5d0] sm:$0xff]
  %v206 = vld [vmem:[%s1 + $0x5d8] sm:$0xff]
  %v207 = vld [vmem:[%s1 + $0x5e0] sm:$0xff]
  %v208 = vld [vmem:[%s1 + $0x5e8] sm:$0xff]
  %v209 = vld [vmem:[%s1 + $0x5f0] sm:$0xff]
  %v210 = vld [vmem:[%s1 + $0x5f8] sm:$0xff]
  %v211 = vld [vmem:[%s1 + $0x600] sm:$0xff]
  %v212 = vld [vmem:[%s1 + $0x608] sm:$0xff]
  %v213 = vld [vmem:[%s1 + $0x610] sm:$0xff]
  %v214 = vld [vmem:[%s1 + $0x618] sm:$0xff]
  %v215 = vld [vmem:[%s1 + $0x620] sm:$0xff]
  %v216 = vld [vmem:[%s1 + $0x628] sm:$0xff]
  %v217 = vld [vmem:[%s1 + $0x630] sm:$0xff]
  %v218 = vld [vmem:[%s1 + $0x638] sm:$0xff]
  %v219 = vld [vmem:[%s1 + $0x640] sm:$0xff]
  %v220 = vld [vmem:[%s1 + $0x648] sm:$0xff]
  %v221 = vld [vmem:[%s1 + $0x650] sm:$0xff]
  %v222 = vld [vmem:[%s1 + $0x658] sm:$0xff]
  %v223 = vld [vmem:[%s1 + $0x660] sm:$0xff]
  %v224 = vld [vmem:[%s1 + $0x668] sm:$0xff]
  %v225 = vld [vmem:[%s1 + $0x670] sm:$0xff]
  %v226 = vld [vmem:[%s1 + $0x678] sm:$0xff]
  %v227 = vld [vmem:[%s1 + $0x680] sm:$0xff]
  %v228 = vld [vmem:[%s1 + $0x688] sm:$0xff]
  %v229 = vld [vmem:[%s1 + $0x690] sm:$0xff]
  %v230 = vld [vmem:[%s1 + $0x698] sm:$0xff]
  %v231 = vld [vmem:[%s1 + $0x6a0] sm:$0xff]
  %v232 = vld [vmem:[%s1 + $0x6a8] sm:$0xff]
  %v233 = vld [vmem:[%s1 + $0x6b0] sm:$0xff]
  %v234 = vld [vmem:[%s1 + $0x6b8] sm:$0xff]
  %v235 = vld [vmem:[%s1 + $0x6c0] sm:$0xff]
  %v236 = vld [vmem:[%s1 + $0x6c8] sm:$0xff]
  %v237 = vld [vmem:[%s1 + $0x6d0] sm:$0xff]
  %v238 = vld [vmem:[%s1 + $0x6d8] sm:$0xff]
  %v239 = vld [vmem:[%s1 + $0x6e0] sm:$0xff]
  %v240 = vld [vmem:[%s1 + $0x6e8] sm:$0xff]
  %v241 = vld [vmem:[%s1 + $0x6f0] sm:$0xff]
  %v242 = vld [vmem:[%s1 + $0x6f8] sm:$0xff]
  %v243 = vld [vmem:[%s1 + $0x700] sm:$0xff]
  %v244 = vld [vmem:[%s1 + $0x708] sm:$0xff]
  %v245 = vld [vmem:[%s1 + $0x710] sm:$0xff]
  %v246 = vld [vmem:[%s1 + $0x718] sm:$0xff]
  %v247 = vld [vmem:[%s1 + $0x720] sm:$0xff]
  %v248 = vld [vmem:[%s1 + $0x728] sm:$0xff]
  %v249 = vld [vmem:[%s1 + $0x730] sm:$0xff]
  %v250 = vld [vmem:[%s1 + $0x738] sm:$0xff]
  %v251 = vld [vmem:[%s1 + $0x740] sm:$0xff]
  %v252 = vld [vmem:[%s1 + $0x748] sm:$0xff]
  %v253 = vld [vmem:[%s1 + $0x750] sm:$0xff]
  %v254 = vld [vmem:[%s1 + $0x758] sm:$0xff]
  %v255 = vld [vmem:[%s1 + $0x760] sm:$0xff]
  %v256 = vld [vmem:[%s1 + $0x768] sm:$0xff]
  %v257 = vld [vmem:[%s1 + $0x770] sm:$0xff]
  %v258 = vld [vmem:[%s1 + $0x778] sm:$0xff]
  %v259 = vld [vmem:[%s1 + $0x780] sm:$0xff]
  %v260 = vld [vmem:[%s1 + $0x788] sm:$0xff]
  %v261 = vld [vmem:[%s1 + $0x790] sm:$0xff]
  %v262 = vld [vmem:[%s1 + $0x798] sm:$0xff]
  %v263 = vld [vmem:[%s1 + $0x7a0] sm:$0xff]
  %v264 = vld [vmem:[%s1 + $0x7a8] sm:$0xff]
  %v265 = vld [vmem:[%s1 + $0x7b0] sm:$0xff]
  %v266 = vld [vmem:[%s1 + $0x7b8] sm:$0xff]
  %v267 = vld [vmem:[%s1 + $0x7c0] sm:$0xff]
  %v268 = vld [vmem:[%s1 + $0x7c8] sm:$0xff]
  %v269 = vld [vmem:[%s1 + $0x7d0] sm:$0xff]
  %v270 = vld [vmem:[%s1 + $0x7d8] sm:$0xff]
  %v271 = vld [vmem:[%s1 + $0x7e0] sm:$0xff]
  %v272 = vld [vmem:[%s1 + $0x7e8] sm:$0xff]
  %v273 = vld [vmem:[%s1 + $0x7f0] sm:$0xff]
  %v274 = vld [vmem:[%s1 + $0x7f8] sm:$0xff]
  %v275 = vld [vmem:[%s1 + $0x800] sm:$0xff]
  %v276 = vld [vmem:[%s1 + $0x808] sm:$0xff]
  %v277 = vld [vmem:[%s1 + $0x810] sm:$0xff]
  %v278 = vld [vmem:[%s1 + $0x818] sm:$0xff]
  %v279 = vld [vmem:[%s1 + $0x820] sm:$0xff]
  %v280 = vld [vmem:[%s1 + $0x828] sm:$0xff]
  %v281 = vld [vmem:[%s1 + $0x830] sm:$0xff]
  %v282 = vld [vmem:[%s1 + $0x838] sm:$0xff]
  %v283 = vld [vmem:[%s1 + $0x840] sm:$0xff]
  %v284 = vld [vmem:[%s1 + $0x848] sm:$0xff]
  %v285 = vld [vmem:[%s1 + $0x850] sm:$0xff]
  %v286 = vld [vmem:[%s1 + $0x858] sm:$0xff]
  %v287 = vld [vmem:[%s1 + $0x860] sm:$0xff]
  %v288 = vld [vmem:[%s1 + $0x868] sm:$0xff]
  %v289 = vld [vmem:[%s1 + $0x870] sm:$0xff]
  %v290 = vld [vmem:[%s1 + $0x878] sm:$0xff]
  %v291 = vld [vmem:[%s1 + $0x880] sm:$0xff]
  %v292 = vld [vmem:[%s1 + $0x888] sm:$0xff]
  %v293 = vld [vmem:[%s1 + $0x890] sm:$0xff]
  %v294 = vld [vmem:[%s1 + $0x898] sm:$0xff]
  %v295 = vld [vmem:[%s1 + $0x8a0] sm:$0xff]
  %v296 = vld [vmem:[%s1 + $0x8a8] sm:$0xff]
  %v297 = vld [vmem:[%s1 + $0x8b0] sm:$0xff]
  %v298 = vld [vmem:[%s1 + $0x8b8] sm:$0xff]
  %v299 = vld [vmem:[%s1 + $0x8c0] sm:$0xff]
  %v300 = vld [vmem:[%s1 + $0x8c8] sm:$0xff]
  %v301 = vld [vmem:[%s1 + $0x8d0] sm:$0xff]
  %v302 = vld [vmem:[%s1 + $0x8d8] sm:$0xff]
  %v303 = vld [vmem:[%s1 + $0x8e0] sm:$0xff]
  %v304 = vld [vmem:[%s1 + $0x8e8] sm:$0xff]
  %v305 = vld [vmem:[%s1 + $0x8f0] sm:$0xff]
  %v306 = vld [vmem:[%s1 + $0x8f8] sm:$0xff]
  %v307 = vld [vmem:[%s2] sm:$0xff]
  %v308 = vld [vmem:[%s2 + $0x8] sm:$0xf]
  %310 = vset.pattern.permute.xlu0 0
  %311 = vperm.xlu0 %310, %v307
  %v312 = vpop.permute.xlu0 %311
  %315 = vset.pattern.permute.xlu0 0
  %316 = vperm.xlu0 %315, %v308
  %v317 = vpop.permute.xlu0 %316
  %v323 = vunpack.c.l.b16 %v15
  %v324 = vunpack.c.h.b16 %v15
  %v325 = vunpack.c.l.b16 %v16
  %v326 = vunpack.c.l.b16 %v17
  %v327 = vunpack.c.h.b16 %v17
  %v328 = vunpack.c.l.b16 %v18
  %v329 = vpack.c.b16 %v326, %v323
  %v330 = vpack.c.b16 %v327, %v324
  %v331 = vpack.c.b16 %v328, %v325
  %v622 = vunpack.c.l.b16 %v19
  %v623 = vunpack.c.h.b16 %v19
  %v624 = vunpack.c.l.b16 %v20
  %v625 = vunpack.c.h.b16 %v20
  %v626 = vunpack.c.l.b16 %v21
  %v627 = vunpack.c.h.b16 %v21
  %v628 = vunpack.c.l.b16 %v22
  %v629 = vunpack.c.h.b16 %v22
  %v630 = vunpack.c.l.b16 %v23
  %v631 = vunpack.c.h.b16 %v23
  %v632 = vunpack.c.l.b16 %v24
  %v633 = vunpack.c.h.b16 %v24
  %v634 = vunpack.c.l.b16 %v25
  %v635 = vunpack.c.h.b16 %v25
  %v636 = vunpack.c.l.b16 %v26
  %v637 = vunpack.c.h.b16 %v26
  %v638 = vunpack.c.l.b16 %v27
  %v639 = vunpack.c.h.b16 %v27
  %v640 = vunpack.c.l.b16 %v28
  %v641 = vunpack.c.h.b16 %v28
  %v642 = vunpack.c.l.b16 %v29
  %v643 = vunpack.c.h.b16 %v29
  %v644 = vunpack.c.l.b16 %v30
  %v645 = vunpack.c.h.b16 %v30
  %v646 = vunpack.c.l.b16 %v31
  %v647 = vunpack.c.h.b16 %v31
  %v648 = vunpack.c.l.b16 %v32
  %v649 = vunpack.c.h.b16 %v32
  %v650 = vunpack.c.l.b16 %v33
  %v651 = vunpack.c.h.b16 %v33
  %v652 = vunpack.c.l.b16 %v34
  %v653 = vunpack.c.h.b16 %v34
  %v654 = vunpack.c.l.b16 %v35
  %v655 = vunpack.c.h.b16 %v35
  %v656 = vunpack.c.l.b16 %v36
  %v657 = vunpack.c.h.b16 %v36
  %v658 = vunpack.c.l.b16 %v37
  %v659 = vunpack.c.h.b16 %v37
  %v660 = vunpack.c.l.b16 %v38
  %v661 = vunpack.c.h.b16 %v38
  %v662 = vunpack.c.l.b16 %v39
  %v663 = vunpack.c.h.b16 %v39
  %v664 = vunpack.c.l.b16 %v40
  %v665 = vunpack.c.h.b16 %v40
  %v666 = vunpack.c.l.b16 %v41
  %v667 = vunpack.c.h.b16 %v41
  %v668 = vunpack.c.l.b16 %v42
  %v669 = vunpack.c.h.b16 %v42
  %v670 = vunpack.c.l.b16 %v43
  %v671 = vunpack.c.h.b16 %v43
  %v672 = vunpack.c.l.b16 %v44
  %v673 = vunpack.c.h.b16 %v44
  %v674 = vunpack.c.l.b16 %v45
  %v675 = vunpack.c.h.b16 %v45
  %v676 = vunpack.c.l.b16 %v46
  %v677 = vunpack.c.h.b16 %v46
  %v678 = vunpack.c.l.b16 %v47
  %v679 = vunpack.c.h.b16 %v47
  %v680 = vunpack.c.l.b16 %v48
  %v681 = vunpack.c.h.b16 %v48
  %v682 = vunpack.c.l.b16 %v49
  %v683 = vunpack.c.h.b16 %v49
  %v684 = vunpack.c.l.b16 %v50
  %v685 = vunpack.c.h.b16 %v50
  %v686 = vunpack.c.l.b16 %v51
  %v687 = vunpack.c.h.b16 %v51
  %v688 = vunpack.c.l.b16 %v52
  %v689 = vunpack.c.h.b16 %v52
  %v690 = vunpack.c.l.b16 %v53
  %v691 = vunpack.c.h.b16 %v53
  %v692 = vunpack.c.l.b16 %v54
  %v693 = vunpack.c.h.b16 %v54
  %v694 = vunpack.c.l.b16 %v55
  %v695 = vunpack.c.h.b16 %v55
  %v696 = vunpack.c.l.b16 %v56
  %v697 = vunpack.c.h.b16 %v56
  %v698 = vunpack.c.l.b16 %v57
  %v699 = vunpack.c.h.b16 %v57
  %v700 = vunpack.c.l.b16 %v58
  %v701 = vunpack.c.h.b16 %v58
  %v702 = vunpack.c.l.b16 %v59
  %v703 = vunpack.c.h.b16 %v59
  %v704 = vunpack.c.l.b16 %v60
  %v705 = vunpack.c.h.b16 %v60
  %v706 = vunpack.c.l.b16 %v61
  %v707 = vunpack.c.h.b16 %v61
  %v708 = vunpack.c.l.b16 %v62
  %v709 = vunpack.c.h.b16 %v62
  %v710 = vunpack.c.l.b16 %v63
  %v711 = vunpack.c.h.b16 %v63
  %v712 = vunpack.c.l.b16 %v64
  %v713 = vunpack.c.h.b16 %v64
  %v714 = vunpack.c.l.b16 %v65
  %v715 = vunpack.c.h.b16 %v65
  %v716 = vunpack.c.l.b16 %v66
  %v717 = vunpack.c.h.b16 %v66
  %v718 = vunpack.c.l.b16 %v67
  %v719 = vunpack.c.h.b16 %v67
  %v720 = vunpack.c.l.b16 %v68
  %v721 = vunpack.c.h.b16 %v68
  %v722 = vunpack.c.l.b16 %v69
  %v723 = vunpack.c.h.b16 %v69
  %v724 = vunpack.c.l.b16 %v70
  %v725 = vunpack.c.h.b16 %v70
  %v726 = vunpack.c.l.b16 %v71
  %v727 = vunpack.c.h.b16 %v71
  %v728 = vunpack.c.l.b16 %v72
  %v729 = vunpack.c.h.b16 %v72
  %v730 = vunpack.c.l.b16 %v73
  %v731 = vunpack.c.h.b16 %v73
  %v732 = vunpack.c.l.b16 %v74
  %v733 = vunpack.c.h.b16 %v74
  %v734 = vunpack.c.l.b16 %v75
  %v735 = vunpack.c.h.b16 %v75
  %v736 = vunpack.c.l.b16 %v76
  %v737 = vunpack.c.h.b16 %v76
  %v738 = vunpack.c.l.b16 %v77
  %v739 = vunpack.c.h.b16 %v77
  %v740 = vunpack.c.l.b16 %v78
  %v741 = vunpack.c.h.b16 %v78
  %v742 = vunpack.c.l.b16 %v79
  %v743 = vunpack.c.h.b16 %v79
  %v744 = vunpack.c.l.b16 %v80
  %v745 = vunpack.c.h.b16 %v80
  %v746 = vunpack.c.l.b16 %v81
  %v747 = vunpack.c.h.b16 %v81
  %v748 = vunpack.c.l.b16 %v82
  %v749 = vunpack.c.h.b16 %v82
  %v750 = vunpack.c.l.b16 %v83
  %v751 = vunpack.c.h.b16 %v83
  %v752 = vunpack.c.l.b16 %v84
  %v753 = vunpack.c.h.b16 %v84
  %v754 = vunpack.c.l.b16 %v85
  %v755 = vunpack.c.h.b16 %v85
  %v756 = vunpack.c.l.b16 %v86
  %v757 = vunpack.c.h.b16 %v86
  %v758 = vunpack.c.l.b16 %v87
  %v759 = vunpack.c.h.b16 %v87
  %v760 = vunpack.c.l.b16 %v88
  %v761 = vunpack.c.h.b16 %v88
  %v762 = vunpack.c.l.b16 %v89
  %v763 = vunpack.c.h.b16 %v89
  %v764 = vunpack.c.l.b16 %v90
  %v765 = vunpack.c.h.b16 %v90
  %v766 = vunpack.c.l.b16 %v91
  %v767 = vunpack.c.h.b16 %v91
  %v768 = vunpack.c.l.b16 %v92
  %v769 = vunpack.c.h.b16 %v92
  %v770 = vunpack.c.l.b16 %v93
  %v771 = vunpack.c.h.b16 %v93
  %v772 = vunpack.c.l.b16 %v94
  %v773 = vunpack.c.h.b16 %v94
  %v774 = vunpack.c.l.b16 %v95
  %v775 = vunpack.c.h.b16 %v95
  %v776 = vunpack.c.l.b16 %v96
  %v777 = vunpack.c.h.b16 %v96
  %v778 = vunpack.c.l.b16 %v97
  %v779 = vunpack.c.h.b16 %v97
  %v780 = vunpack.c.l.b16 %v98
  %v781 = vunpack.c.h.b16 %v98
  %v782 = vunpack.c.l.b16 %v99
  %v783 = vunpack.c.h.b16 %v99
  %v784 = vunpack.c.l.b16 %v100
  %v785 = vunpack.c.h.b16 %v100
  %v786 = vunpack.c.l.b16 %v101
  %v787 = vunpack.c.h.b16 %v101
  %v788 = vunpack.c.l.b16 %v102
  %v789 = vunpack.c.h.b16 %v102
  %v790 = vunpack.c.l.b16 %v103
  %v791 = vunpack.c.h.b16 %v103
  %v792 = vunpack.c.l.b16 %v104
  %v793 = vunpack.c.h.b16 %v104
  %v794 = vunpack.c.l.b16 %v105
  %v795 = vunpack.c.h.b16 %v105
  %v796 = vunpack.c.l.b16 %v106
  %v797 = vunpack.c.h.b16 %v106
  %v798 = vunpack.c.l.b16 %v107
  %v799 = vunpack.c.h.b16 %v107
  %v800 = vunpack.c.l.b16 %v108
  %v801 = vunpack.c.h.b16 %v108
  %v802 = vunpack.c.l.b16 %v109
  %v803 = vunpack.c.h.b16 %v109
  %v804 = vunpack.c.l.b16 %v110
  %v805 = vunpack.c.h.b16 %v110
  %v806 = vunpack.c.l.b16 %v111
  %v807 = vunpack.c.h.b16 %v111
  %v808 = vunpack.c.l.b16 %v112
  %v809 = vunpack.c.h.b16 %v112
  %v810 = vunpack.c.l.b16 %v113
  %v811 = vunpack.c.h.b16 %v113
  %v812 = vunpack.c.l.b16 %v114
  %v813 = vunpack.c.h.b16 %v114
  %v814 = vunpack.c.l.b16 %v115
  %v815 = vunpack.c.h.b16 %v115
  %v816 = vunpack.c.l.b16 %v116
  %v817 = vunpack.c.h.b16 %v116
  %v818 = vunpack.c.l.b16 %v117
  %v819 = vunpack.c.h.b16 %v117
  %v820 = vunpack.c.l.b16 %v118
  %v821 = vunpack.c.h.b16 %v118
  %v822 = vunpack.c.l.b16 %v119
  %v823 = vunpack.c.h.b16 %v119
  %v824 = vunpack.c.l.b16 %v120
  %v825 = vunpack.c.h.b16 %v120
  %v826 = vunpack.c.l.b16 %v121
  %v827 = vunpack.c.h.b16 %v121
  %v828 = vunpack.c.l.b16 %v122
  %v829 = vunpack.c.h.b16 %v122
  %v830 = vunpack.c.l.b16 %v123
  %v831 = vunpack.c.h.b16 %v123
  %v832 = vunpack.c.l.b16 %v124
  %v833 = vunpack.c.h.b16 %v124
  %v834 = vunpack.c.l.b16 %v125
  %v835 = vunpack.c.h.b16 %v125
  %v836 = vunpack.c.l.b16 %v126
  %v837 = vunpack.c.h.b16 %v126
  %v838 = vunpack.c.l.b16 %v127
  %v839 = vunpack.c.h.b16 %v127
  %v840 = vunpack.c.l.b16 %v128
  %v841 = vunpack.c.h.b16 %v128
  %v842 = vunpack.c.l.b16 %v129
  %v843 = vunpack.c.h.b16 %v129
  %v844 = vunpack.c.l.b16 %v130
  %v845 = vunpack.c.h.b16 %v130
  %v846 = vunpack.c.l.b16 %v131
  %v847 = vunpack.c.h.b16 %v131
  %v848 = vunpack.c.l.b16 %v132
  %v849 = vunpack.c.h.b16 %v132
  %v850 = vunpack.c.l.b16 %v133
  %v851 = vunpack.c.h.b16 %v133
  %v852 = vunpack.c.l.b16 %v134
  %v853 = vunpack.c.h.b16 %v134
  %v854 = vunpack.c.l.b16 %v135
  %v855 = vunpack.c.h.b16 %v135
  %v856 = vunpack.c.l.b16 %v136
  %v857 = vunpack.c.h.b16 %v136
  %v858 = vunpack.c.l.b16 %v137
  %v859 = vunpack.c.h.b16 %v137
  %v860 = vunpack.c.l.b16 %v138
  %v861 = vunpack.c.h.b16 %v138
  %v862 = vunpack.c.l.b16 %v139
  %v863 = vunpack.c.h.b16 %v139
  %v864 = vunpack.c.l.b16 %v140
  %v865 = vunpack.c.h.b16 %v140
  %v866 = vunpack.c.l.b16 %v141
  %v867 = vunpack.c.h.b16 %v141
  %v868 = vunpack.c.l.b16 %v142
  %v869 = vunpack.c.h.b16 %v142
  %v870 = vunpack.c.l.b16 %v143
  %v871 = vunpack.c.h.b16 %v143
  %v872 = vunpack.c.l.b16 %v144
  %v873 = vunpack.c.h.b16 %v144
  %v874 = vunpack.c.l.b16 %v145
  %v875 = vunpack.c.h.b16 %v145
  %v876 = vunpack.c.l.b16 %v146
  %v877 = vunpack.c.h.b16 %v146
  %v878 = vunpack.c.l.b16 %v147
  %v879 = vunpack.c.h.b16 %v147
  %v880 = vunpack.c.l.b16 %v148
  %v881 = vunpack.c.h.b16 %v148
  %v882 = vunpack.c.l.b16 %v149
  %v883 = vunpack.c.h.b16 %v149
  %v884 = vunpack.c.l.b16 %v150
  %v885 = vunpack.c.h.b16 %v150
  %v886 = vunpack.c.l.b16 %v151
  %v887 = vunpack.c.h.b16 %v151
  %v888 = vunpack.c.l.b16 %v152
  %v889 = vunpack.c.h.b16 %v152
  %v890 = vunpack.c.l.b16 %v153
  %v891 = vunpack.c.h.b16 %v153
  %v892 = vunpack.c.l.b16 %v154
  %v893 = vunpack.c.h.b16 %v154
  %v894 = vunpack.c.l.b16 %v155
  %v895 = vunpack.c.h.b16 %v155
  %v896 = vunpack.c.l.b16 %v156
  %v897 = vunpack.c.h.b16 %v156
  %v898 = vunpack.c.l.b16 %v157
  %v899 = vunpack.c.h.b16 %v157
  %v900 = vunpack.c.l.b16 %v158
  %v901 = vunpack.c.h.b16 %v158
  %v902 = vunpack.c.l.b16 %v159
  %v903 = vunpack.c.h.b16 %v159
  %v904 = vunpack.c.l.b16 %v160
  %v905 = vunpack.c.h.b16 %v160
  %v906 = vunpack.c.l.b16 %v161
  %v907 = vunpack.c.h.b16 %v161
  %v908 = vunpack.c.l.b16 %v162
  %v909 = vunpack.c.h.b16 %v162
  %v910 = vunpack.c.l.b16 %v163
  %v911 = vunpack.c.h.b16 %v163
  %v912 = vunpack.c.l.b16 %v164
  %v913 = vunpack.c.h.b16 %v164
  %v914 = vunpack.c.l.b16 %v165
  %v915 = vunpack.c.h.b16 %v165
  %v916 = vunpack.c.l.b16 %v166
  %v917 = vunpack.c.h.b16 %v166
  %v918 = vunpack.c.l.b16 %v167
  %v919 = vunpack.c.h.b16 %v167
  %v920 = vunpack.c.l.b16 %v168
  %v921 = vunpack.c.h.b16 %v168
  %v922 = vunpack.c.l.b16 %v169
  %v923 = vunpack.c.h.b16 %v169
  %v924 = vunpack.c.l.b16 %v170
  %v925 = vunpack.c.h.b16 %v170
  %v926 = vunpack.c.l.b16 %v171
  %v927 = vunpack.c.h.b16 %v171
  %v928 = vunpack.c.l.b16 %v172
  %v929 = vunpack.c.h.b16 %v172
  %v930 = vunpack.c.l.b16 %v173
  %v931 = vunpack.c.h.b16 %v173
  %v932 = vunpack.c.l.b16 %v174
  %v933 = vunpack.c.h.b16 %v174
  %v934 = vunpack.c.l.b16 %v175
  %v935 = vunpack.c.h.b16 %v175
  %v936 = vunpack.c.l.b16 %v176
  %v937 = vunpack.c.h.b16 %v176
  %v938 = vunpack.c.l.b16 %v177
  %v939 = vunpack.c.h.b16 %v177
  %v940 = vunpack.c.l.b16 %v178
  %v941 = vunpack.c.h.b16 %v178
  %v942 = vunpack.c.l.b16 %v179
  %v943 = vunpack.c.h.b16 %v179
  %v944 = vunpack.c.l.b16 %v180
  %v945 = vunpack.c.h.b16 %v180
  %v946 = vunpack.c.l.b16 %v181
  %v947 = vunpack.c.h.b16 %v181
  %v948 = vunpack.c.l.b16 %v182
  %v949 = vunpack.c.h.b16 %v182
  %v950 = vunpack.c.l.b16 %v183
  %v951 = vunpack.c.h.b16 %v183
  %v952 = vunpack.c.l.b16 %v184
  %v953 = vunpack.c.h.b16 %v184
  %v954 = vunpack.c.l.b16 %v185
  %v955 = vunpack.c.h.b16 %v185
  %v956 = vunpack.c.l.b16 %v186
  %v957 = vunpack.c.h.b16 %v186
  %v958 = vunpack.c.l.b16 %v187
  %v959 = vunpack.c.h.b16 %v187
  %v960 = vunpack.c.l.b16 %v188
  %v961 = vunpack.c.h.b16 %v188
  %v962 = vunpack.c.l.b16 %v189
  %v963 = vunpack.c.h.b16 %v189
  %v964 = vunpack.c.l.b16 %v190
  %v965 = vunpack.c.h.b16 %v190
  %v966 = vunpack.c.l.b16 %v191
  %v967 = vunpack.c.h.b16 %v191
  %v968 = vunpack.c.l.b16 %v192
  %v969 = vunpack.c.h.b16 %v192
  %v970 = vunpack.c.l.b16 %v193
  %v971 = vunpack.c.h.b16 %v193
  %v972 = vunpack.c.l.b16 %v194
  %v973 = vunpack.c.h.b16 %v194
  %v974 = vunpack.c.l.b16 %v195
  %v975 = vunpack.c.h.b16 %v195
  %v976 = vunpack.c.l.b16 %v196
  %v977 = vunpack.c.h.b16 %v196
  %v978 = vunpack.c.l.b16 %v197
  %v979 = vunpack.c.h.b16 %v197
  %v980 = vunpack.c.l.b16 %v198
  %v981 = vunpack.c.h.b16 %v198
  %v982 = vunpack.c.l.b16 %v199
  %v983 = vunpack.c.h.b16 %v199
  %v984 = vunpack.c.l.b16 %v200
  %v985 = vunpack.c.h.b16 %v200
  %v986 = vunpack.c.l.b16 %v201
  %v987 = vunpack.c.h.b16 %v201
  %v988 = vunpack.c.l.b16 %v202
  %v989 = vunpack.c.h.b16 %v202
  %v990 = vunpack.c.l.b16 %v203
  %v991 = vunpack.c.h.b16 %v203
  %v992 = vunpack.c.l.b16 %v204
  %v993 = vunpack.c.h.b16 %v204
  %v994 = vunpack.c.l.b16 %v205
  %v995 = vunpack.c.h.b16 %v205
  %v996 = vunpack.c.l.b16 %v206
  %v997 = vunpack.c.h.b16 %v206
  %v998 = vunpack.c.l.b16 %v207
  %v999 = vunpack.c.h.b16 %v207
  %v1000 = vunpack.c.l.b16 %v208
  %v1001 = vunpack.c.h.b16 %v208
  %v1002 = vunpack.c.l.b16 %v209
  %v1003 = vunpack.c.h.b16 %v209
  %v1004 = vunpack.c.l.b16 %v210
  %v1005 = vunpack.c.h.b16 %v210
  %v1006 = vunpack.c.l.b16 %v211
  %v1007 = vunpack.c.h.b16 %v211
  %v1008 = vunpack.c.l.b16 %v212
  %v1009 = vunpack.c.h.b16 %v212
  %v1010 = vunpack.c.l.b16 %v213
  %v1011 = vunpack.c.h.b16 %v213
  %v1012 = vunpack.c.l.b16 %v214
  %v1013 = vunpack.c.h.b16 %v214
  %v1014 = vunpack.c.l.b16 %v215
  %v1015 = vunpack.c.h.b16 %v215
  %v1016 = vunpack.c.l.b16 %v216
  %v1017 = vunpack.c.h.b16 %v216
  %v1018 = vunpack.c.l.b16 %v217
  %v1019 = vunpack.c.h.b16 %v217
  %v1020 = vunpack.c.l.b16 %v218
  %v1021 = vunpack.c.h.b16 %v218
  %v1022 = vunpack.c.l.b16 %v219
  %v1023 = vunpack.c.h.b16 %v219
  %v1024 = vunpack.c.l.b16 %v220
  %v1025 = vunpack.c.h.b16 %v220
  %v1026 = vunpack.c.l.b16 %v221
  %v1027 = vunpack.c.h.b16 %v221
  %v1028 = vunpack.c.l.b16 %v222
  %v1029 = vunpack.c.h.b16 %v222
  %v1030 = vunpack.c.l.b16 %v223
  %v1031 = vunpack.c.h.b16 %v223
  %v1032 = vunpack.c.l.b16 %v224
  %v1033 = vunpack.c.h.b16 %v224
  %v1034 = vunpack.c.l.b16 %v225
  %v1035 = vunpack.c.h.b16 %v225
  %v1036 = vunpack.c.l.b16 %v226
  %v1037 = vunpack.c.h.b16 %v226
  %v1038 = vunpack.c.l.b16 %v227
  %v1039 = vunpack.c.h.b16 %v227
  %v1040 = vunpack.c.l.b16 %v228
  %v1041 = vunpack.c.h.b16 %v228
  %v1042 = vunpack.c.l.b16 %v229
  %v1043 = vunpack.c.h.b16 %v229
  %v1044 = vunpack.c.l.b16 %v230
  %v1045 = vunpack.c.h.b16 %v230
  %v1046 = vunpack.c.l.b16 %v231
  %v1047 = vunpack.c.h.b16 %v231
  %v1048 = vunpack.c.l.b16 %v232
  %v1049 = vunpack.c.h.b16 %v232
  %v1050 = vunpack.c.l.b16 %v233
  %v1051 = vunpack.c.h.b16 %v233
  %v1052 = vunpack.c.l.b16 %v234
  %v1053 = vunpack.c.h.b16 %v234
  %v1054 = vunpack.c.l.b16 %v235
  %v1055 = vunpack.c.h.b16 %v235
  %v1056 = vunpack.c.l.b16 %v236
  %v1057 = vunpack.c.h.b16 %v236
  %v1058 = vunpack.c.l.b16 %v237
  %v1059 = vunpack.c.h.b16 %v237
  %v1060 = vunpack.c.l.b16 %v238
  %v1061 = vunpack.c.h.b16 %v238
  %v1062 = vunpack.c.l.b16 %v239
  %v1063 = vunpack.c.h.b16 %v239
  %v1064 = vunpack.c.l.b16 %v240
  %v1065 = vunpack.c.h.b16 %v240
  %v1066 = vunpack.c.l.b16 %v241
  %v1067 = vunpack.c.h.b16 %v241
  %v1068 = vunpack.c.l.b16 %v242
  %v1069 = vunpack.c.h.b16 %v242
  %v1070 = vunpack.c.l.b16 %v243
  %v1071 = vunpack.c.h.b16 %v243
  %v1072 = vunpack.c.l.b16 %v244
  %v1073 = vunpack.c.h.b16 %v244
  %v1074 = vunpack.c.l.b16 %v245
  %v1075 = vunpack.c.h.b16 %v245
  %v1076 = vunpack.c.l.b16 %v246
  %v1077 = vunpack.c.h.b16 %v246
  %v1078 = vunpack.c.l.b16 %v247
  %v1079 = vunpack.c.h.b16 %v247
  %v1080 = vunpack.c.l.b16 %v248
  %v1081 = vunpack.c.h.b16 %v248
  %v1082 = vunpack.c.l.b16 %v249
  %v1083 = vunpack.c.h.b16 %v249
  %v1084 = vunpack.c.l.b16 %v250
  %v1085 = vunpack.c.h.b16 %v250
  %v1086 = vunpack.c.l.b16 %v251
  %v1087 = vunpack.c.h.b16 %v251
  %v1088 = vunpack.c.l.b16 %v252
  %v1089 = vunpack.c.h.b16 %v252
  %v1090 = vunpack.c.l.b16 %v253
  %v1091 = vunpack.c.h.b16 %v253
  %v1092 = vunpack.c.l.b16 %v254
  %v1093 = vunpack.c.h.b16 %v254
  %v1094 = vunpack.c.l.b16 %v255
  %v1095 = vunpack.c.h.b16 %v255
  %v1096 = vunpack.c.l.b16 %v256
  %v1097 = vunpack.c.h.b16 %v256
  %v1098 = vunpack.c.l.b16 %v257
  %v1099 = vunpack.c.h.b16 %v257
  %v1100 = vunpack.c.l.b16 %v258
  %v1101 = vunpack.c.h.b16 %v258
  %v1102 = vunpack.c.l.b16 %v259
  %v1103 = vunpack.c.h.b16 %v259
  %v1104 = vunpack.c.l.b16 %v260
  %v1105 = vunpack.c.h.b16 %v260
  %v1106 = vunpack.c.l.b16 %v261
  %v1107 = vunpack.c.h.b16 %v261
  %v1108 = vunpack.c.l.b16 %v262
  %v1109 = vunpack.c.h.b16 %v262
  %v1110 = vunpack.c.l.b16 %v263
  %v1111 = vunpack.c.h.b16 %v263
  %v1112 = vunpack.c.l.b16 %v264
  %v1113 = vunpack.c.h.b16 %v264
  %v1114 = vunpack.c.l.b16 %v265
  %v1115 = vunpack.c.h.b16 %v265
  %v1116 = vunpack.c.l.b16 %v266
  %v1117 = vunpack.c.h.b16 %v266
  %v1118 = vunpack.c.l.b16 %v267
  %v1119 = vunpack.c.h.b16 %v267
  %v1120 = vunpack.c.l.b16 %v268
  %v1121 = vunpack.c.h.b16 %v268
  %v1122 = vunpack.c.l.b16 %v269
  %v1123 = vunpack.c.h.b16 %v269
  %v1124 = vunpack.c.l.b16 %v270
  %v1125 = vunpack.c.h.b16 %v270
  %v1126 = vunpack.c.l.b16 %v271
  %v1127 = vunpack.c.h.b16 %v271
  %v1128 = vunpack.c.l.b16 %v272
  %v1129 = vunpack.c.h.b16 %v272
  %v1130 = vunpack.c.l.b16 %v273
  %v1131 = vunpack.c.h.b16 %v273
  %v1132 = vunpack.c.l.b16 %v274
  %v1133 = vunpack.c.h.b16 %v274
  %v1134 = vunpack.c.l.b16 %v275
  %v1135 = vunpack.c.h.b16 %v275
  %v1136 = vunpack.c.l.b16 %v276
  %v1137 = vunpack.c.h.b16 %v276
  %v1138 = vunpack.c.l.b16 %v277
  %v1139 = vunpack.c.h.b16 %v277
  %v1140 = vunpack.c.l.b16 %v278
  %v1141 = vunpack.c.h.b16 %v278
  %v1142 = vunpack.c.l.b16 %v279
  %v1143 = vunpack.c.h.b16 %v279
  %v1144 = vunpack.c.l.b16 %v280
  %v1145 = vunpack.c.h.b16 %v280
  %v1146 = vunpack.c.l.b16 %v281
  %v1147 = vunpack.c.h.b16 %v281
  %v1148 = vunpack.c.l.b16 %v282
  %v1149 = vunpack.c.h.b16 %v282
  %v1150 = vunpack.c.l.b16 %v283
  %v1151 = vunpack.c.h.b16 %v283
  %v1152 = vunpack.c.l.b16 %v284
  %v1153 = vunpack.c.h.b16 %v284
  %v1154 = vunpack.c.l.b16 %v285
  %v1155 = vunpack.c.h.b16 %v285
  %v1156 = vunpack.c.l.b16 %v286
  %v1157 = vunpack.c.h.b16 %v286
  %v1158 = vunpack.c.l.b16 %v287
  %v1159 = vunpack.c.h.b16 %v287
  %v1160 = vunpack.c.l.b16 %v288
  %v1161 = vunpack.c.h.b16 %v288
  %v1162 = vunpack.c.l.b16 %v289
  %v1163 = vunpack.c.h.b16 %v289
  %v1164 = vunpack.c.l.b16 %v290
  %v1165 = vunpack.c.h.b16 %v290
  %v1166 = vunpack.c.l.b16 %v291
  %v1167 = vunpack.c.h.b16 %v291
  %v1168 = vunpack.c.l.b16 %v292
  %v1169 = vunpack.c.h.b16 %v292
  %v1170 = vunpack.c.l.b16 %v293
  %v1171 = vunpack.c.h.b16 %v293
  %v1172 = vunpack.c.l.b16 %v294
  %v1173 = vunpack.c.h.b16 %v294
  %v1174 = vunpack.c.l.b16 %v295
  %v1175 = vunpack.c.h.b16 %v295
  %v1176 = vunpack.c.l.b16 %v296
  %v1177 = vunpack.c.h.b16 %v296
  %v1178 = vunpack.c.l.b16 %v297
  %v1179 = vunpack.c.h.b16 %v297
  %v1180 = vunpack.c.l.b16 %v298
  %v1181 = vunpack.c.h.b16 %v298
  %v1182 = vunpack.c.l.b16 %v299
  %v1183 = vunpack.c.h.b16 %v299
  %v1184 = vunpack.c.l.b16 %v300
  %v1185 = vunpack.c.h.b16 %v300
  %v1186 = vunpack.c.l.b16 %v301
  %v1187 = vunpack.c.h.b16 %v301
  %v1188 = vunpack.c.l.b16 %v302
  %v1189 = vunpack.c.h.b16 %v302
  %v1190 = vunpack.c.l.b16 %v303
  %v1191 = vunpack.c.h.b16 %v303
  %v1192 = vunpack.c.l.b16 %v304
  %v1193 = vunpack.c.h.b16 %v304
  %v1194 = vunpack.c.l.b16 %v305
  %v1195 = vunpack.c.h.b16 %v305
  %v1196 = vunpack.c.l.b16 %v306
  %v1197 = vunpack.c.h.b16 %v306
  %v1198 = vpack.c.b16 %v638, %v622
  %v1199 = vpack.c.b16 %v639, %v623
  %v1200 = vpack.c.b16 %v640, %v624
  %v1201 = vpack.c.b16 %v641, %v625
  %v1202 = vpack.c.b16 %v642, %v626
  %v1203 = vpack.c.b16 %v643, %v627
  %v1204 = vpack.c.b16 %v644, %v628
  %v1205 = vpack.c.b16 %v645, %v629
  %v1206 = vpack.c.b16 %v646, %v630
  %v1207 = vpack.c.b16 %v647, %v631
  %v1208 = vpack.c.b16 %v648, %v632
  %v1209 = vpack.c.b16 %v649, %v633
  %v1210 = vpack.c.b16 %v650, %v634
  %v1211 = vpack.c.b16 %v651, %v635
  %v1212 = vpack.c.b16 %v652, %v636
  %v1213 = vpack.c.b16 %v653, %v637
  %v1214 = vpack.c.b16 %v670, %v654
  %v1215 = vpack.c.b16 %v671, %v655
  %v1216 = vpack.c.b16 %v672, %v656
  %v1217 = vpack.c.b16 %v673, %v657
  %v1218 = vpack.c.b16 %v674, %v658
  %v1219 = vpack.c.b16 %v675, %v659
  %v1220 = vpack.c.b16 %v676, %v660
  %v1221 = vpack.c.b16 %v677, %v661
  %v1222 = vpack.c.b16 %v678, %v662
  %v1223 = vpack.c.b16 %v679, %v663
  %v1224 = vpack.c.b16 %v680, %v664
  %v1225 = vpack.c.b16 %v681, %v665
  %v1226 = vpack.c.b16 %v682, %v666
  %v1227 = vpack.c.b16 %v683, %v667
  %v1228 = vpack.c.b16 %v684, %v668
  %v1229 = vpack.c.b16 %v685, %v669
  %v1230 = vpack.c.b16 %v702, %v686
  %v1231 = vpack.c.b16 %v703, %v687
  %v1232 = vpack.c.b16 %v704, %v688
  %v1233 = vpack.c.b16 %v705, %v689
  %v1234 = vpack.c.b16 %v706, %v690
  %v1235 = vpack.c.b16 %v707, %v691
  %v1236 = vpack.c.b16 %v708, %v692
  %v1237 = vpack.c.b16 %v709, %v693
  %v1238 = vpack.c.b16 %v710, %v694
  %v1239 = vpack.c.b16 %v711, %v695
  %v1240 = vpack.c.b16 %v712, %v696
  %v1241 = vpack.c.b16 %v713, %v697
  %v1242 = vpack.c.b16 %v714, %v698
  %v1243 = vpack.c.b16 %v715, %v699
  %v1244 = vpack.c.b16 %v716, %v700
  %v1245 = vpack.c.b16 %v717, %v701
  %v1246 = vpack.c.b16 %v734, %v718
  %v1247 = vpack.c.b16 %v735, %v719
  %v1248 = vpack.c.b16 %v736, %v720
  %v1249 = vpack.c.b16 %v737, %v721
  %v1250 = vpack.c.b16 %v738, %v722
  %v1251 = vpack.c.b16 %v739, %v723
  %v1252 = vpack.c.b16 %v740, %v724
  %v1253 = vpack.c.b16 %v741, %v725
  %v1254 = vpack.c.b16 %v742, %v726
  %v1255 = vpack.c.b16 %v743, %v727
  %v1256 = vpack.c.b16 %v744, %v728
  %v1257 = vpack.c.b16 %v745, %v729
  %v1258 = vpack.c.b16 %v746, %v730
  %v1259 = vpack.c.b16 %v747, %v731
  %v1260 = vpack.c.b16 %v748, %v732
  %v1261 = vpack.c.b16 %v749, %v733
  %v1262 = vpack.c.b16 %v766, %v750
  %v1263 = vpack.c.b16 %v767, %v751
  %v1264 = vpack.c.b16 %v768, %v752
  %v1265 = vpack.c.b16 %v769, %v753
  %v1266 = vpack.c.b16 %v770, %v754
  %v1267 = vpack.c.b16 %v771, %v755
  %v1268 = vpack.c.b16 %v772, %v756
  %v1269 = vpack.c.b16 %v773, %v757
  %v1270 = vpack.c.b16 %v774, %v758
  %v1271 = vpack.c.b16 %v775, %v759
  %v1272 = vpack.c.b16 %v776, %v760
  %v1273 = vpack.c.b16 %v777, %v761
  %v1274 = vpack.c.b16 %v778, %v762
  %v1275 = vpack.c.b16 %v779, %v763
  %v1276 = vpack.c.b16 %v780, %v764
  %v1277 = vpack.c.b16 %v781, %v765
  %v1278 = vpack.c.b16 %v798, %v782
  %v1279 = vpack.c.b16 %v799, %v783
  %v1280 = vpack.c.b16 %v800, %v784
  %v1281 = vpack.c.b16 %v801, %v785
  %v1282 = vpack.c.b16 %v802, %v786
  %v1283 = vpack.c.b16 %v803, %v787
  %v1284 = vpack.c.b16 %v804, %v788
  %v1285 = vpack.c.b16 %v805, %v789
  %v1286 = vpack.c.b16 %v806, %v790
  %v1287 = vpack.c.b16 %v807, %v791
  %v1288 = vpack.c.b16 %v808, %v792
  %v1289 = vpack.c.b16 %v809, %v793
  %v1290 = vpack.c.b16 %v810, %v794
  %v1291 = vpack.c.b16 %v811, %v795
  %v1292 = vpack.c.b16 %v812, %v796
  %v1293 = vpack.c.b16 %v813, %v797
  %v1294 = vpack.c.b16 %v830, %v814
  %v1295 = vpack.c.b16 %v831, %v815
  %v1296 = vpack.c.b16 %v832, %v816
  %v1297 = vpack.c.b16 %v833, %v817
  %v1298 = vpack.c.b16 %v834, %v818
  %v1299 = vpack.c.b16 %v835, %v819
  %v1300 = vpack.c.b16 %v836, %v820
  %v1301 = vpack.c.b16 %v837, %v821
  %v1302 = vpack.c.b16 %v838, %v822
  %v1303 = vpack.c.b16 %v839, %v823
  %v1304 = vpack.c.b16 %v840, %v824
  %v1305 = vpack.c.b16 %v841, %v825
  %v1306 = vpack.c.b16 %v842, %v826
  %v1307 = vpack.c.b16 %v843, %v827
  %v1308 = vpack.c.b16 %v844, %v828
  %v1309 = vpack.c.b16 %v845, %v829
  %v1310 = vpack.c.b16 %v862, %v846
  %v1311 = vpack.c.b16 %v863, %v847
  %v1312 = vpack.c.b16 %v864, %v848
  %v1313 = vpack.c.b16 %v865, %v849
  %v1314 = vpack.c.b16 %v866, %v850
  %v1315 = vpack.c.b16 %v867, %v851
  %v1316 = vpack.c.b16 %v868, %v852
  %v1317 = vpack.c.b16 %v869, %v853
  %v1318 = vpack.c.b16 %v870, %v854
  %v1319 = vpack.c.b16 %v871, %v855
  %v1320 = vpack.c.b16 %v872, %v856
  %v1321 = vpack.c.b16 %v873, %v857
  %v1322 = vpack.c.b16 %v874, %v858
  %v1323 = vpack.c.b16 %v875, %v859
  %v1324 = vpack.c.b16 %v876, %v860
  %v1325 = vpack.c.b16 %v877, %v861
  %v1326 = vpack.c.b16 %v894, %v878
  %v1327 = vpack.c.b16 %v895, %v879
  %v1328 = vpack.c.b16 %v896, %v880
  %v1329 = vpack.c.b16 %v897, %v881
  %v1330 = vpack.c.b16 %v898, %v882
  %v1331 = vpack.c.b16 %v899, %v883
  %v1332 = vpack.c.b16 %v900, %v884
  %v1333 = vpack.c.b16 %v901, %v885
  %v1334 = vpack.c.b16 %v902, %v886
  %v1335 = vpack.c.b16 %v903, %v887
  %v1336 = vpack.c.b16 %v904, %v888
  %v1337 = vpack.c.b16 %v905, %v889
  %v1338 = vpack.c.b16 %v906, %v890
  %v1339 = vpack.c.b16 %v907, %v891
  %v1340 = vpack.c.b16 %v908, %v892
  %v1341 = vpack.c.b16 %v909, %v893
  %v1342 = vpack.c.b16 %v926, %v910
  %v1343 = vpack.c.b16 %v927, %v911
  %v1344 = vpack.c.b16 %v928, %v912
  %v1345 = vpack.c.b16 %v929, %v913
  %v1346 = vpack.c.b16 %v930, %v914
  %v1347 = vpack.c.b16 %v931, %v915
  %v1348 = vpack.c.b16 %v932, %v916
  %v1349 = vpack.c.b16 %v933, %v917
  %v1350 = vpack.c.b16 %v934, %v918
  %v1351 = vpack.c.b16 %v935, %v919
  %v1352 = vpack.c.b16 %v936, %v920
  %v1353 = vpack.c.b16 %v937, %v921
  %v1354 = vpack.c.b16 %v938, %v922
  %v1355 = vpack.c.b16 %v939, %v923
  %v1356 = vpack.c.b16 %v940, %v924
  %v1357 = vpack.c.b16 %v941, %v925
  %v1358 = vpack.c.b16 %v958, %v942
  %v1359 = vpack.c.b16 %v959, %v943
  %v1360 = vpack.c.b16 %v960, %v944
  %v1361 = vpack.c.b16 %v961, %v945
  %v1362 = vpack.c.b16 %v962, %v946
  %v1363 = vpack.c.b16 %v963, %v947
  %v1364 = vpack.c.b16 %v964, %v948
  %v1365 = vpack.c.b16 %v965, %v949
  %v1366 = vpack.c.b16 %v966, %v950
  %v1367 = vpack.c.b16 %v967, %v951
  %v1368 = vpack.c.b16 %v968, %v952
  %v1369 = vpack.c.b16 %v969, %v953
  %v1370 = vpack.c.b16 %v970, %v954
  %v1371 = vpack.c.b16 %v971, %v955
  %v1372 = vpack.c.b16 %v972, %v956
  %v1373 = vpack.c.b16 %v973, %v957
  %v1374 = vpack.c.b16 %v990, %v974
  %v1375 = vpack.c.b16 %v991, %v975
  %v1376 = vpack.c.b16 %v992, %v976
  %v1377 = vpack.c.b16 %v993, %v977
  %v1378 = vpack.c.b16 %v994, %v978
  %v1379 = vpack.c.b16 %v995, %v979
  %v1380 = vpack.c.b16 %v996, %v980
  %v1381 = vpack.c.b16 %v997, %v981
  %v1382 = vpack.c.b16 %v998, %v982
  %v1383 = vpack.c.b16 %v999, %v983
  %v1384 = vpack.c.b16 %v1000, %v984
  %v1385 = vpack.c.b16 %v1001, %v985
  %v1386 = vpack.c.b16 %v1002, %v986
  %v1387 = vpack.c.b16 %v1003, %v987
  %v1388 = vpack.c.b16 %v1004, %v988
  %v1389 = vpack.c.b16 %v1005, %v989
  %v1390 = vpack.c.b16 %v1022, %v1006
  %v1391 = vpack.c.b16 %v1023, %v1007
  %v1392 = vpack.c.b16 %v1024, %v1008
  %v1393 = vpack.c.b16 %v1025, %v1009
  %v1394 = vpack.c.b16 %v1026, %v1010
  %v1395 = vpack.c.b16 %v1027, %v1011
  %v1396 = vpack.c.b16 %v1028, %v1012
  %v1397 = vpack.c.b16 %v1029, %v1013
  %v1398 = vpack.c.b16 %v1030, %v1014
  %v1399 = vpack.c.b16 %v1031, %v1015
  %v1400 = vpack.c.b16 %v1032, %v1016
  %v1401 = vpack.c.b16 %v1033, %v1017
  %v1402 = vpack.c.b16 %v1034, %v1018
  %v1403 = vpack.c.b16 %v1035, %v1019
  %v1404 = vpack.c.b16 %v1036, %v1020
  %v1405 = vpack.c.b16 %v1037, %v1021
  %v1406 = vpack.c.b16 %v1054, %v1038
  %v1407 = vpack.c.b16 %v1055, %v1039
  %v1408 = vpack.c.b16 %v1056, %v1040
  %v1409 = vpack.c.b16 %v1057, %v1041
  %v1410 = vpack.c.b16 %v1058, %v1042
  %v1411 = vpack.c.b16 %v1059, %v1043
  %v1412 = vpack.c.b16 %v1060, %v1044
  %v1413 = vpack.c.b16 %v1061, %v1045
  %v1414 = vpack.c.b16 %v1062, %v1046
  %v1415 = vpack.c.b16 %v1063, %v1047
  %v1416 = vpack.c.b16 %v1064, %v1048
  %v1417 = vpack.c.b16 %v1065, %v1049
  %v1418 = vpack.c.b16 %v1066, %v1050
  %v1419 = vpack.c.b16 %v1067, %v1051
  %v1420 = vpack.c.b16 %v1068, %v1052
  %v1421 = vpack.c.b16 %v1069, %v1053
  %v1422 = vpack.c.b16 %v1086, %v1070
  %v1423 = vpack.c.b16 %v1087, %v1071
  %v1424 = vpack.c.b16 %v1088, %v1072
  %v1425 = vpack.c.b16 %v1089, %v1073
  %v1426 = vpack.c.b16 %v1090, %v1074
  %v1427 = vpack.c.b16 %v1091, %v1075
  %v1428 = vpack.c.b16 %v1092, %v1076
  %v1429 = vpack.c.b16 %v1093, %v1077
  %v1430 = vpack.c.b16 %v1094, %v1078
  %v1431 = vpack.c.b16 %v1095, %v1079
  %v1432 = vpack.c.b16 %v1096, %v1080
  %v1433 = vpack.c.b16 %v1097, %v1081
  %v1434 = vpack.c.b16 %v1098, %v1082
  %v1435 = vpack.c.b16 %v1099, %v1083
  %v1436 = vpack.c.b16 %v1100, %v1084
  %v1437 = vpack.c.b16 %v1101, %v1085
  %v1438 = vpack.c.b16 %v1118, %v1102
  %v1439 = vpack.c.b16 %v1119, %v1103
  %v1440 = vpack.c.b16 %v1120, %v1104
  %v1441 = vpack.c.b16 %v1121, %v1105
  %v1442 = vpack.c.b16 %v1122, %v1106
  %v1443 = vpack.c.b16 %v1123, %v1107
  %v1444 = vpack.c.b16 %v1124, %v1108
  %v1445 = vpack.c.b16 %v1125, %v1109
  %v1446 = vpack.c.b16 %v1126, %v1110
  %v1447 = vpack.c.b16 %v1127, %v1111
  %v1448 = vpack.c.b16 %v1128, %v1112
  %v1449 = vpack.c.b16 %v1129, %v1113
  %v1450 = vpack.c.b16 %v1130, %v1114
  %v1451 = vpack.c.b16 %v1131, %v1115
  %v1452 = vpack.c.b16 %v1132, %v1116
  %v1453 = vpack.c.b16 %v1133, %v1117
  %v1454 = vpack.c.b16 %v1150, %v1134
  %v1455 = vpack.c.b16 %v1151, %v1135
  %v1456 = vpack.c.b16 %v1152, %v1136
  %v1457 = vpack.c.b16 %v1153, %v1137
  %v1458 = vpack.c.b16 %v1154, %v1138
  %v1459 = vpack.c.b16 %v1155, %v1139
  %v1460 = vpack.c.b16 %v1156, %v1140
  %v1461 = vpack.c.b16 %v1157, %v1141
  %v1462 = vpack.c.b16 %v1158, %v1142
  %v1463 = vpack.c.b16 %v1159, %v1143
  %v1464 = vpack.c.b16 %v1160, %v1144
  %v1465 = vpack.c.b16 %v1161, %v1145
  %v1466 = vpack.c.b16 %v1162, %v1146
  %v1467 = vpack.c.b16 %v1163, %v1147
  %v1468 = vpack.c.b16 %v1164, %v1148
  %v1469 = vpack.c.b16 %v1165, %v1149
  %v1470 = vpack.c.b16 %v1182, %v1166
  %v1471 = vpack.c.b16 %v1183, %v1167
  %v1472 = vpack.c.b16 %v1184, %v1168
  %v1473 = vpack.c.b16 %v1185, %v1169
  %v1474 = vpack.c.b16 %v1186, %v1170
  %v1475 = vpack.c.b16 %v1187, %v1171
  %v1476 = vpack.c.b16 %v1188, %v1172
  %v1477 = vpack.c.b16 %v1189, %v1173
  %v1478 = vpack.c.b16 %v1190, %v1174
  %v1479 = vpack.c.b16 %v1191, %v1175
  %v1480 = vpack.c.b16 %v1192, %v1176
  %v1481 = vpack.c.b16 %v1193, %v1177
  %v1482 = vpack.c.b16 %v1194, %v1178
  %v1483 = vpack.c.b16 %v1195, %v1179
  %v1484 = vpack.c.b16 %v1196, %v1180
  %v1485 = vpack.c.b16 %v1197, %v1181
  %vm1774 = vcmask 261120
  %v1776 = vsel %vm1774, %v331, 0
  %1778 = vmatprep.subr.bf16.mxu0 %v1311
  %1779 = vmatpush1.bf16.msra.mxu0 %v1310
  %1780 = vmatprep.subr.bf16.mxu0 %v1295
  %1781 = vmatpush1.bf16.msra.mxu0 %v1294
  %1782 = vmatprep.subr.bf16.mxu0 %v1279
  %1783 = vmatpush1.bf16.msra.mxu0 %v1278
  %1784 = vmatprep.subr.bf16.mxu0 %v1263
  %1785 = vmatpush1.bf16.msra.mxu0 %v1262
  %1786 = vmatprep.subr.bf16.mxu0 %v1247
  %1787 = vmatpush1.bf16.msra.mxu0 %v1246
  %1788 = vmatprep.subr.bf16.mxu0 %v1231
  %1789 = vmatpush1.bf16.msra.mxu0 %v1230
  %1790 = vmatprep.subr.bf16.mxu0 %v1215
  %1791 = vmatpush1.bf16.msra.mxu0 %v1214
  %1792 = vmatprep.subr.bf16.mxu0 %v1199
  %1793 = vmatpush1.bf16.msra.mxu0 %v1198
  %1794 = vmatprep.subr.bf16.mxu0 %v1439
  %1795 = vmatpush2.bf16.msra.mxu0 %v1438
  %1796 = vmatprep.subr.bf16.mxu0 %v1423
  %1797 = vmatpush2.bf16.msra.mxu0 %v1422
  %1798 = vmatprep.subr.bf16.mxu0 %v1407
  %1799 = vmatpush2.bf16.msra.mxu0 %v1406
  %1800 = vmatprep.subr.bf16.mxu0 %v1391
  %1801 = vmatpush2.bf16.msra.mxu0 %v1390
  %1802 = vmatprep.subr.bf16.mxu0 %v1375
  %1803 = vmatpush2.bf16.msra.mxu0 %v1374
  %1804 = vmatprep.subr.bf16.mxu0 %v1359
  %1805 = vmatpush2.bf16.msra.mxu0 %v1358
  %1806 = vmatprep.subr.bf16.mxu0 %v1343
  %1807 = vmatpush2.bf16.msra.mxu0 %v1342
  %1808 = vmatprep.subr.bf16.mxu0 %v1327
  %1809 = vmatpush2.bf16.msra.mxu0 %v1326
  %1810 = vmatprep.mubr.bf16.mxu0 %v330
  %1811 = vmatmul.mubr.bf16.gmra.mxu0 %v329
  %v1812 = vpop.f32.mrf.mxu0
  %v1813 = vadd.f32 %v312, %v1812
  %v1814 = vpop.f32.mrf.mxu0
  %v1815 = vadd.f32 %v312, %v1814
  %v1816 = vpop.f32.mrf.mxu0
  %v1817 = vadd.f32 %v317, %v1816
  %v1818 = vpop.f32.mrf.mxu0
  %v1819 = vadd.f32 %v317, %v1818
  %1820 = vdwg.mxu0
  %1821 = vmatprep.subr.bf16.mxu0 0
  %1822 = vmatpush1.bf16.msra.mxu0 0
  %1823 = vmatprep.subr.bf16.mxu0 0
  %1824 = vmatpush1.bf16.msra.mxu0 0
  %1825 = vmatprep.subr.bf16.mxu0 0
  %1826 = vmatpush1.bf16.msra.mxu0 0
  %1827 = vmatprep.subr.bf16.mxu0 0
  %1828 = vmatpush1.bf16.msra.mxu0 0
  %1829 = vmatprep.subr.bf16.mxu0 0
  %1830 = vmatpush1.bf16.msra.mxu0 0
  %1831 = vmatprep.subr.bf16.mxu0 0
  %1832 = vmatpush1.bf16.msra.mxu0 0
  %1833 = vmatprep.subr.bf16.mxu0 %v1471
  %1834 = vmatpush1.bf16.msra.mxu0 %v1470
  %1835 = vmatprep.subr.bf16.mxu0 %v1455
  %1836 = vmatpush1.bf16.msra.mxu0 %v1454
  %1837 = vmatprep.subr.bf16.mxu0 0
  %1838 = vmatpush2.bf16.msra.mxu0 0
  %1839 = vmatprep.subr.bf16.mxu0 0
  %1840 = vmatpush2.bf16.msra.mxu0 0
  %1841 = vmatprep.subr.bf16.mxu0 0
  %1842 = vmatpush2.bf16.msra.mxu0 0
  %1843 = vmatprep.subr.bf16.mxu0 0
  %1844 = vmatpush2.bf16.msra.mxu0 0
  %1845 = vmatprep.subr.bf16.mxu0 0
  %1846 = vmatpush2.bf16.msra.mxu0 0
  %1847 = vmatprep.subr.bf16.mxu0 0
  %1848 = vmatpush2.bf16.msra.mxu0 0
  %1849 = vmatprep.subr.bf16.mxu0 0
  %1850 = vmatpush2.bf16.msra.mxu0 0
  %1851 = vmatprep.subr.bf16.mxu0 0
  %1852 = vmatpush2.bf16.msra.mxu0 0
  %1853 = vmatprep.mubr.bf16.mxu0 0
  %1854 = vmatmul.mubr.bf16.gmra.mxu0 %v1776
  %v1855 = vpop.f32.mrf.mxu0
  %v1856 = vadd.f32 %v1813, %v1855
  %v1857 = vpop.f32.mrf.mxu0
  %v1858 = vadd.f32 %v1815, %v1857
  %v1859 = vpop.f32.mrf.mxu0
  %v1860 = vadd.f32 %v1817, %v1859
  %v1861 = vpop.f32.mrf.mxu0
  %v1862 = vadd.f32 %v1819, %v1861
  %1863 = vdwg.mxu0
  %1864 = vmatprep.subr.bf16.mxu0 %v1313
  %1865 = vmatpush1.bf16.msra.mxu0 %v1312
  %1866 = vmatprep.subr.bf16.mxu0 %v1297
  %1867 = vmatpush1.bf16.msra.mxu0 %v1296
  %1868 = vmatprep.subr.bf16.mxu0 %v1281
  %1869 = vmatpush1.bf16.msra.mxu0 %v1280
  %1870 = vmatprep.subr.bf16.mxu0 %v1265
  %1871 = vmatpush1.bf16.msra.mxu0 %v1264
  %1872 = vmatprep.subr.bf16.mxu0 %v1249
  %1873 = vmatpush1.bf16.msra.mxu0 %v1248
  %1874 = vmatprep.subr.bf16.mxu0 %v1233
  %1875 = vmatpush1.bf16.msra.mxu0 %v1232
  %1876 = vmatprep.subr.bf16.mxu0 %v1217
  %1877 = vmatpush1.bf16.msra.mxu0 %v1216
  %1878 = vmatprep.subr.bf16.mxu0 %v1201
  %1879 = vmatpush1.bf16.msra.mxu0 %v1200
  %1880 = vmatprep.subr.bf16.mxu0 %v1441
  %1881 = vmatpush2.bf16.msra.mxu0 %v1440
  %1882 = vmatprep.subr.bf16.mxu0 %v1425
  %1883 = vmatpush2.bf16.msra.mxu0 %v1424
  %1884 = vmatprep.subr.bf16.mxu0 %v1409
  %1885 = vmatpush2.bf16.msra.mxu0 %v1408
  %1886 = vmatprep.subr.bf16.mxu0 %v1393
  %1887 = vmatpush2.bf16.msra.mxu0 %v1392
  %1888 = vmatprep.subr.bf16.mxu0 %v1377
  %1889 = vmatpush2.bf16.msra.mxu0 %v1376
  %1890 = vmatprep.subr.bf16.mxu0 %v1361
  %1891 = vmatpush2.bf16.msra.mxu0 %v1360
  %1892 = vmatprep.subr.bf16.mxu0 %v1345
  %1893 = vmatpush2.bf16.msra.mxu0 %v1344
  %1894 = vmatprep.subr.bf16.mxu0 %v1329
  %1895 = vmatpush2.bf16.msra.mxu0 %v1328
  %1896 = vmatprep.mubr.bf16.mxu0 %v330
  %1897 = vmatmul.mubr.bf16.gmra.mxu0 %v329
  %v1898 = vpop.f32.mrf.mxu0
  %v1899 = vadd.f32 %v312, %v1898
  %v1900 = vpop.f32.mrf.mxu0
  %v1901 = vadd.f32 %v312, %v1900
  %v1902 = vpop.f32.mrf.mxu0
  %v1903 = vadd.f32 %v317, %v1902
  %v1904 = vpop.f32.mrf.mxu0
  %v1905 = vadd.f32 %v317, %v1904
  %1906 = vdwg.mxu0
  %1907 = vmatprep.subr.bf16.mxu0 0
  %1908 = vmatpush1.bf16.msra.mxu0 0
  %1909 = vmatprep.subr.bf16.mxu0 0
  %1910 = vmatpush1.bf16.msra.mxu0 0
  %1911 = vmatprep.subr.bf16.mxu0 0
  %1912 = vmatpush1.bf16.msra.mxu0 0
  %1913 = vmatprep.subr.bf16.mxu0 0
  %1914 = vmatpush1.bf16.msra.mxu0 0
  %1915 = vmatprep.subr.bf16.mxu0 0
  %1916 = vmatpush1.bf16.msra.mxu0 0
  %1917 = vmatprep.subr.bf16.mxu0 0
  %1918 = vmatpush1.bf16.msra.mxu0 0
  %1919 = vmatprep.subr.bf16.mxu0 %v1473
  %1920 = vmatpush1.bf16.msra.mxu0 %v1472
  %1921 = vmatprep.subr.bf16.mxu0 %v1457
  %1922 = vmatpush1.bf16.msra.mxu0 %v1456
  %1923 = vmatprep.subr.bf16.mxu0 0
  %1924 = vmatpush2.bf16.msra.mxu0 0
  %1925 = vmatprep.subr.bf16.mxu0 0
  %1926 = vmatpush2.bf16.msra.mxu0 0
  %1927 = vmatprep.subr.bf16.mxu0 0
  %1928 = vmatpush2.bf16.msra.mxu0 0
  %1929 = vmatprep.subr.bf16.mxu0 0
  %1930 = vmatpush2.bf16.msra.mxu0 0
  %1931 = vmatprep.subr.bf16.mxu0 0
  %1932 = vmatpush2.bf16.msra.mxu0 0
  %1933 = vmatprep.subr.bf16.mxu0 0
  %1934 = vmatpush2.bf16.msra.mxu0 0
  %1935 = vmatprep.subr.bf16.mxu0 0
  %1936 = vmatpush2.bf16.msra.mxu0 0
  %1937 = vmatprep.subr.bf16.mxu0 0
  %1938 = vmatpush2.bf16.msra.mxu0 0
  %1939 = vmatprep.mubr.bf16.mxu0 0
  %1940 = vmatmul.mubr.bf16.gmra.mxu0 %v1776
  %v1941 = vpop.f32.mrf.mxu0
  %v1942 = vadd.f32 %v1899, %v1941
  %v1943 = vpop.f32.mrf.mxu0
  %v1944 = vadd.f32 %v1901, %v1943
  %v1945 = vpop.f32.mrf.mxu0
  %v1946 = vadd.f32 %v1903, %v1945
  %v1947 = vpop.f32.mrf.mxu0
  %v1948 = vadd.f32 %v1905, %v1947
  %1949 = vdwg.mxu0
  %1950 = vmatprep.subr.bf16.mxu0 %v1315
  %1951 = vmatpush1.bf16.msra.mxu0 %v1314
  %1952 = vmatprep.subr.bf16.mxu0 %v1299
  %1953 = vmatpush1.bf16.msra.mxu0 %v1298
  %1954 = vmatprep.subr.bf16.mxu0 %v1283
  %1955 = vmatpush1.bf16.msra.mxu0 %v1282
  %1956 = vmatprep.subr.bf16.mxu0 %v1267
  %1957 = vmatpush1.bf16.msra.mxu0 %v1266
  %1958 = vmatprep.subr.bf16.mxu0 %v1251
  %1959 = vmatpush1.bf16.msra.mxu0 %v1250
  %1960 = vmatprep.subr.bf16.mxu0 %v1235
  %1961 = vmatpush1.bf16.msra.mxu0 %v1234
  %1962 = vmatprep.subr.bf16.mxu0 %v1219
  %1963 = vmatpush1.bf16.msra.mxu0 %v1218
  %1964 = vmatprep.subr.bf16.mxu0 %v1203
  %1965 = vmatpush1.bf16.msra.mxu0 %v1202
  %1966 = vmatprep.subr.bf16.mxu0 %v1443
  %1967 = vmatpush2.bf16.msra.mxu0 %v1442
  %1968 = vmatprep.subr.bf16.mxu0 %v1427
  %1969 = vmatpush2.bf16.msra.mxu0 %v1426
  %1970 = vmatprep.subr.bf16.mxu0 %v1411
  %1971 = vmatpush2.bf16.msra.mxu0 %v1410
  %1972 = vmatprep.subr.bf16.mxu0 %v1395
  %1973 = vmatpush2.bf16.msra.mxu0 %v1394
  %1974 = vmatprep.subr.bf16.mxu0 %v1379
  %1975 = vmatpush2.bf16.msra.mxu0 %v1378
  %1976 = vmatprep.subr.bf16.mxu0 %v1363
  %1977 = vmatpush2.bf16.msra.mxu0 %v1362
  %1978 = vmatprep.subr.bf16.mxu0 %v1347
  %1979 = vmatpush2.bf16.msra.mxu0 %v1346
  %1980 = vmatprep.subr.bf16.mxu0 %v1331
  %1981 = vmatpush2.bf16.msra.mxu0 %v1330
  %1982 = vmatprep.mubr.bf16.mxu0 %v330
  %1983 = vmatmul.mubr.bf16.gmra.mxu0 %v329
  %v1984 = vpop.f32.mrf.mxu0
  %v1985 = vadd.f32 %v312, %v1984
  %v1986 = vpop.f32.mrf.mxu0
  %v1987 = vadd.f32 %v312, %v1986
  %v1988 = vpop.f32.mrf.mxu0
  %v1989 = vadd.f32 %v317, %v1988
  %v1990 = vpop.f32.mrf.mxu0
  %v1991 = vadd.f32 %v317, %v1990
  %1992 = vdwg.mxu0
  %1993 = vmatprep.subr.bf16.mxu0 0
  %1994 = vmatpush1.bf16.msra.mxu0 0
  %1995 = vmatprep.subr.bf16.mxu0 0
  %1996 = vmatpush1.bf16.msra.mxu0 0
  %1997 = vmatprep.subr.bf16.mxu0 0
  %1998 = vmatpush1.bf16.msra.mxu0 0
  %1999 = vmatprep.subr.bf16.mxu0 0
  %2000 = vmatpush1.bf16.msra.mxu0 0
  %2001 = vmatprep.subr.bf16.mxu0 0
  %2002 = vmatpush1.bf16.msra.mxu0 0
  %2003 = vmatprep.subr.bf16.mxu0 0
  %2004 = vmatpush1.bf16.msra.mxu0 0
  %2005 = vmatprep.subr.bf16.mxu0 %v1475
  %2006 = vmatpush1.bf16.msra.mxu0 %v1474
  %2007 = vmatprep.subr.bf16.mxu0 %v1459
  %2008 = vmatpush1.bf16.msra.mxu0 %v1458
  %2009 = vmatprep.subr.bf16.mxu0 0
  %2010 = vmatpush2.bf16.msra.mxu0 0
  %2011 = vmatprep.subr.bf16.mxu0 0
  %2012 = vmatpush2.bf16.msra.mxu0 0
  %2013 = vmatprep.subr.bf16.mxu0 0
  %2014 = vmatpush2.bf16.msra.mxu0 0
  %2015 = vmatprep.subr.bf16.mxu0 0
  %2016 = vmatpush2.bf16.msra.mxu0 0
  %2017 = vmatprep.subr.bf16.mxu0 0
  %2018 = vmatpush2.bf16.msra.mxu0 0
  %2019 = vmatprep.subr.bf16.mxu0 0
  %2020 = vmatpush2.bf16.msra.mxu0 0
  %2021 = vmatprep.subr.bf16.mxu0 0
  %2022 = vmatpush2.bf16.msra.mxu0 0
  %2023 = vmatprep.subr.bf16.mxu0 0
  %2024 = vmatpush2.bf16.msra.mxu0 0
  %2025 = vmatprep.mubr.bf16.mxu0 0
  %2026 = vmatmul.mubr.bf16.gmra.mxu0 %v1776
  %v2027 = vpop.f32.mrf.mxu0
  %v2028 = vadd.f32 %v1985, %v2027
  %v2029 = vpop.f32.mrf.mxu0
  %v2030 = vadd.f32 %v1987, %v2029
  %v2031 = vpop.f32.mrf.mxu0
  %v2032 = vadd.f32 %v1989, %v2031
  %v2033 = vpop.f32.mrf.mxu0
  %v2034 = vadd.f32 %v1991, %v2033
  %2035 = vdwg.mxu0
  %2036 = vmatprep.subr.bf16.mxu0 %v1317
  %2037 = vmatpush1.bf16.msra.mxu0 %v1316
  %2038 = vmatprep.subr.bf16.mxu0 %v1301
  %2039 = vmatpush1.bf16.msra.mxu0 %v1300
  %2040 = vmatprep.subr.bf16.mxu0 %v1285
  %2041 = vmatpush1.bf16.msra.mxu0 %v1284
  %2042 = vmatprep.subr.bf16.mxu0 %v1269
  %2043 = vmatpush1.bf16.msra.mxu0 %v1268
  %2044 = vmatprep.subr.bf16.mxu0 %v1253
  %2045 = vmatpush1.bf16.msra.mxu0 %v1252
  %2046 = vmatprep.subr.bf16.mxu0 %v1237
  %2047 = vmatpush1.bf16.msra.mxu0 %v1236
  %2048 = vmatprep.subr.bf16.mxu0 %v1221
  %2049 = vmatpush1.bf16.msra.mxu0 %v1220
  %2050 = vmatprep.subr.bf16.mxu0 %v1205
  %2051 = vmatpush1.bf16.msra.mxu0 %v1204
  %2052 = vmatprep.subr.bf16.mxu0 %v1445
  %2053 = vmatpush2.bf16.msra.mxu0 %v1444
  %2054 = vmatprep.subr.bf16.mxu0 %v1429
  %2055 = vmatpush2.bf16.msra.mxu0 %v1428
  %2056 = vmatprep.subr.bf16.mxu0 %v1413
  %2057 = vmatpush2.bf16.msra.mxu0 %v1412
  %2058 = vmatprep.subr.bf16.mxu0 %v1397
  %2059 = vmatpush2.bf16.msra.mxu0 %v1396
  %2060 = vmatprep.subr.bf16.mxu0 %v1381
  %2061 = vmatpush2.bf16.msra.mxu0 %v1380
  %2062 = vmatprep.subr.bf16.mxu0 %v1365
  %2063 = vmatpush2.bf16.msra.mxu0 %v1364
  %2064 = vmatprep.subr.bf16.mxu0 %v1349
  %2065 = vmatpush2.bf16.msra.mxu0 %v1348
  %2066 = vmatprep.subr.bf16.mxu0 %v1333
  %2067 = vmatpush2.bf16.msra.mxu0 %v1332
  %2068 = vmatprep.mubr.bf16.mxu0 %v330
  %2069 = vmatmul.mubr.bf16.gmra.mxu0 %v329
  %v2070 = vpop.f32.mrf.mxu0
  %v2071 = vadd.f32 %v312, %v2070
  %v2072 = vpop.f32.mrf.mxu0
  %v2073 = vadd.f32 %v312, %v2072
  %v2074 = vpop.f32.mrf.mxu0
  %v2075 = vadd.f32 %v317, %v2074
  %v2076 = vpop.f32.mrf.mxu0
  %v2077 = vadd.f32 %v317, %v2076
  %2078 = vdwg.mxu0
  %2079 = vmatprep.subr.bf16.mxu0 0
  %2080 = vmatpush1.bf16.msra.mxu0 0
  %2081 = vmatprep.subr.bf16.mxu0 0
  %2082 = vmatpush1.bf16.msra.mxu0 0
  %2083 = vmatprep.subr.bf16.mxu0 0
  %2084 = vmatpush1.bf16.msra.mxu0 0
  %2085 = vmatprep.subr.bf16.mxu0 0
  %2086 = vmatpush1.bf16.msra.mxu0 0
  %2087 = vmatprep.subr.bf16.mxu0 0
  %2088 = vmatpush1.bf16.msra.mxu0 0
  %2089 = vmatprep.subr.bf16.mxu0 0
  %2090 = vmatpush1.bf16.msra.mxu0 0
  %2091 = vmatprep.subr.bf16.mxu0 %v1477
  %2092 = vmatpush1.bf16.msra.mxu0 %v1476
  %2093 = vmatprep.subr.bf16.mxu0 %v1461
  %2094 = vmatpush1.bf16.msra.mxu0 %v1460
  %2095 = vmatprep.subr.bf16.mxu0 0
  %2096 = vmatpush2.bf16.msra.mxu0 0
  %2097 = vmatprep.subr.bf16.mxu0 0
  %2098 = vmatpush2.bf16.msra.mxu0 0
  %2099 = vmatprep.subr.bf16.mxu0 0
  %2100 = vmatpush2.bf16.msra.mxu0 0
  %2101 = vmatprep.subr.bf16.mxu0 0
  %2102 = vmatpush2.bf16.msra.mxu0 0
  %2103 = vmatprep.subr.bf16.mxu0 0
  %2104 = vmatpush2.bf16.msra.mxu0 0
  %2105 = vmatprep.subr.bf16.mxu0 0
  %2106 = vmatpush2.bf16.msra.mxu0 0
  %2107 = vmatprep.subr.bf16.mxu0 0
  %2108 = vmatpush2.bf16.msra.mxu0 0
  %2109 = vmatprep.subr.bf16.mxu0 0
  %2110 = vmatpush2.bf16.msra.mxu0 0
  %2111 = vmatprep.mubr.bf16.mxu0 0
  %2112 = vmatmul.mubr.bf16.gmra.mxu0 %v1776
  %v2113 = vpop.f32.mrf.mxu0
  %v2114 = vadd.f32 %v2071, %v2113
  %v2115 = vpop.f32.mrf.mxu0
  %v2116 = vadd.f32 %v2073, %v2115
  %v2117 = vpop.f32.mrf.mxu0
  %v2118 = vadd.f32 %v2075, %v2117
  %v2119 = vpop.f32.mrf.mxu0
  %v2120 = vadd.f32 %v2077, %v2119
  %2121 = vdwg.mxu0
  %2122 = vmatprep.subr.bf16.mxu0 %v1319
  %2123 = vmatpush1.bf16.msra.mxu0 %v1318
  %2124 = vmatprep.subr.bf16.mxu0 %v1303
  %2125 = vmatpush1.bf16.msra.mxu0 %v1302
  %2126 = vmatprep.subr.bf16.mxu0 %v1287
  %2127 = vmatpush1.bf16.msra.mxu0 %v1286
  %2128 = vmatprep.subr.bf16.mxu0 %v1271
  %2129 = vmatpush1.bf16.msra.mxu0 %v1270
  %2130 = vmatprep.subr.bf16.mxu0 %v1255
  %2131 = vmatpush1.bf16.msra.mxu0 %v1254
  %2132 = vmatprep.subr.bf16.mxu0 %v1239
  %2133 = vmatpush1.bf16.msra.mxu0 %v1238
  %2134 = vmatprep.subr.bf16.mxu0 %v1223
  %2135 = vmatpush1.bf16.msra.mxu0 %v1222
  %2136 = vmatprep.subr.bf16.mxu0 %v1207
  %2137 = vmatpush1.bf16.msra.mxu0 %v1206
  %2138 = vmatprep.subr.bf16.mxu0 %v1447
  %2139 = vmatpush2.bf16.msra.mxu0 %v1446
  %2140 = vmatprep.subr.bf16.mxu0 %v1431
  %2141 = vmatpush2.bf16.msra.mxu0 %v1430
  %2142 = vmatprep.subr.bf16.mxu0 %v1415
  %2143 = vmatpush2.bf16.msra.mxu0 %v1414
  %2144 = vmatprep.subr.bf16.mxu0 %v1399
  %2145 = vmatpush2.bf16.msra.mxu0 %v1398
  %2146 = vmatprep.subr.bf16.mxu0 %v1383
  %2147 = vmatpush2.bf16.msra.mxu0 %v1382
  %2148 = vmatprep.subr.bf16.mxu0 %v1367
  %2149 = vmatpush2.bf16.msra.mxu0 %v1366
  %2150 = vmatprep.subr.bf16.mxu0 %v1351
  %2151 = vmatpush2.bf16.msra.mxu0 %v1350
  %2152 = vmatprep.subr.bf16.mxu0 %v1335
  %2153 = vmatpush2.bf16.msra.mxu0 %v1334
  %2154 = vmatprep.mubr.bf16.mxu0 %v330
  %2155 = vmatmul.mubr.bf16.gmra.mxu0 %v329
  %v2156 = vpop.f32.mrf.mxu0
  %v2157 = vadd.f32 %v312, %v2156
  %v2158 = vpop.f32.mrf.mxu0
  %v2159 = vadd.f32 %v312, %v2158
  %v2160 = vpop.f32.mrf.mxu0
  %v2161 = vadd.f32 %v317, %v2160
  %v2162 = vpop.f32.mrf.mxu0
  %v2163 = vadd.f32 %v317, %v2162
  %2164 = vdwg.mxu0
  %2165 = vmatprep.subr.bf16.mxu0 0
  %2166 = vmatpush1.bf16.msra.mxu0 0
  %2167 = vmatprep.subr.bf16.mxu0 0
  %2168 = vmatpush1.bf16.msra.mxu0 0
  %2169 = vmatprep.subr.bf16.mxu0 0
  %2170 = vmatpush1.bf16.msra.mxu0 0
  %2171 = vmatprep.subr.bf16.mxu0 0
  %2172 = vmatpush1.bf16.msra.mxu0 0
  %2173 = vmatprep.subr.bf16.mxu0 0
  %2174 = vmatpush1.bf16.msra.mxu0 0
  %2175 = vmatprep.subr.bf16.mxu0 0
  %2176 = vmatpush1.bf16.msra.mxu0 0
  %2177 = vmatprep.subr.bf16.mxu0 %v1479
  %2178 = vmatpush1.bf16.msra.mxu0 %v1478
  %2179 = vmatprep.subr.bf16.mxu0 %v1463
  %2180 = vmatpush1.bf16.msra.mxu0 %v1462
  %2181 = vmatprep.subr.bf16.mxu0 0
  %2182 = vmatpush2.bf16.msra.mxu0 0
  %2183 = vmatprep.subr.bf16.mxu0 0
  %2184 = vmatpush2.bf16.msra.mxu0 0
  %2185 = vmatprep.subr.bf16.mxu0 0
  %2186 = vmatpush2.bf16.msra.mxu0 0
  %2187 = vmatprep.subr.bf16.mxu0 0
  %2188 = vmatpush2.bf16.msra.mxu0 0
  %2189 = vmatprep.subr.bf16.mxu0 0
  %2190 = vmatpush2.bf16.msra.mxu0 0
  %2191 = vmatprep.subr.bf16.mxu0 0
  %2192 = vmatpush2.bf16.msra.mxu0 0
  %2193 = vmatprep.subr.bf16.mxu0 0
  %2194 = vmatpush2.bf16.msra.mxu0 0
  %2195 = vmatprep.subr.bf16.mxu0 0
  %2196 = vmatpush2.bf16.msra.mxu0 0
  %2197 = vmatprep.mubr.bf16.mxu0 0
  %2198 = vmatmul.mubr.bf16.gmra.mxu0 %v1776
  %v2199 = vpop.f32.mrf.mxu0
  %v2200 = vadd.f32 %v2157, %v2199
  %v2201 = vpop.f32.mrf.mxu0
  %v2202 = vadd.f32 %v2159, %v2201
  %v2203 = vpop.f32.mrf.mxu0
  %v2204 = vadd.f32 %v2161, %v2203
  %v2205 = vpop.f32.mrf.mxu0
  %v2206 = vadd.f32 %v2163, %v2205
  %2207 = vdwg.mxu0
  %2208 = vmatprep.subr.bf16.mxu0 %v1321
  %2209 = vmatpush1.bf16.msra.mxu0 %v1320
  %2210 = vmatprep.subr.bf16.mxu0 %v1305
  %2211 = vmatpush1.bf16.msra.mxu0 %v1304
  %2212 = vmatprep.subr.bf16.mxu0 %v1289
  %2213 = vmatpush1.bf16.msra.mxu0 %v1288
  %2214 = vmatprep.subr.bf16.mxu0 %v1273
  %2215 = vmatpush1.bf16.msra.mxu0 %v1272
  %2216 = vmatprep.subr.bf16.mxu0 %v1257
  %2217 = vmatpush1.bf16.msra.mxu0 %v1256
  %2218 = vmatprep.subr.bf16.mxu0 %v1241
  %2219 = vmatpush1.bf16.msra.mxu0 %v1240
  %2220 = vmatprep.subr.bf16.mxu0 %v1225
  %2221 = vmatpush1.bf16.msra.mxu0 %v1224
  %2222 = vmatprep.subr.bf16.mxu0 %v1209
  %2223 = vmatpush1.bf16.msra.mxu0 %v1208
  %2224 = vmatprep.subr.bf16.mxu0 %v1449
  %2225 = vmatpush2.bf16.msra.mxu0 %v1448
  %2226 = vmatprep.subr.bf16.mxu0 %v1433
  %2227 = vmatpush2.bf16.msra.mxu0 %v1432
  %2228 = vmatprep.subr.bf16.mxu0 %v1417
  %2229 = vmatpush2.bf16.msra.mxu0 %v1416
  %2230 = vmatprep.subr.bf16.mxu0 %v1401
  %2231 = vmatpush2.bf16.msra.mxu0 %v1400
  %2232 = vmatprep.subr.bf16.mxu0 %v1385
  %2233 = vmatpush2.bf16.msra.mxu0 %v1384
  %2234 = vmatprep.subr.bf16.mxu0 %v1369
  %2235 = vmatpush2.bf16.msra.mxu0 %v1368
  %2236 = vmatprep.subr.bf16.mxu0 %v1353
  %2237 = vmatpush2.bf16.msra.mxu0 %v1352
  %2238 = vmatprep.subr.bf16.mxu0 %v1337
  %2239 = vmatpush2.bf16.msra.mxu0 %v1336
  %2240 = vmatprep.mubr.bf16.mxu0 %v330
  %2241 = vmatmul.mubr.bf16.gmra.mxu0 %v329
  %v2242 = vpop.f32.mrf.mxu0
  %v2243 = vadd.f32 %v312, %v2242
  %v2244 = vpop.f32.mrf.mxu0
  %v2245 = vadd.f32 %v312, %v2244
  %v2246 = vpop.f32.mrf.mxu0
  %v2247 = vadd.f32 %v317, %v2246
  %v2248 = vpop.f32.mrf.mxu0
  %v2249 = vadd.f32 %v317, %v2248
  %2250 = vdwg.mxu0
  %2251 = vmatprep.subr.bf16.mxu0 0
  %2252 = vmatpush1.bf16.msra.mxu0 0
  %2253 = vmatprep.subr.bf16.mxu0 0
  %2254 = vmatpush1.bf16.msra.mxu0 0
  %2255 = vmatprep.subr.bf16.mxu0 0
  %2256 = vmatpush1.bf16.msra.mxu0 0
  %2257 = vmatprep.subr.bf16.mxu0 0
  %2258 = vmatpush1.bf16.msra.mxu0 0
  %2259 = vmatprep.subr.bf16.mxu0 0
  %2260 = vmatpush1.bf16.msra.mxu0 0
  %2261 = vmatprep.subr.bf16.mxu0 0
  %2262 = vmatpush1.bf16.msra.mxu0 0
  %2263 = vmatprep.subr.bf16.mxu0 %v1481
  %2264 = vmatpush1.bf16.msra.mxu0 %v1480
  %2265 = vmatprep.subr.bf16.mxu0 %v1465
  %2266 = vmatpush1.bf16.msra.mxu0 %v1464
  %2267 = vmatprep.subr.bf16.mxu0 0
  %2268 = vmatpush2.bf16.msra.mxu0 0
  %2269 = vmatprep.subr.bf16.mxu0 0
  %2270 = vmatpush2.bf16.msra.mxu0 0
  %2271 = vmatprep.subr.bf16.mxu0 0
  %2272 = vmatpush2.bf16.msra.mxu0 0
  %2273 = vmatprep.subr.bf16.mxu0 0
  %2274 = vmatpush2.bf16.msra.mxu0 0
  %2275 = vmatprep.subr.bf16.mxu0 0
  %2276 = vmatpush2.bf16.msra.mxu0 0
  %2277 = vmatprep.subr.bf16.mxu0 0
  %2278 = vmatpush2.bf16.msra.mxu0 0
  %2279 = vmatprep.subr.bf16.mxu0 0
  %2280 = vmatpush2.bf16.msra.mxu0 0
  %2281 = vmatprep.subr.bf16.mxu0 0
  %2282 = vmatpush2.bf16.msra.mxu0 0
  %2283 = vmatprep.mubr.bf16.mxu0 0
  %2284 = vmatmul.mubr.bf16.gmra.mxu0 %v1776
  %v2285 = vpop.f32.mrf.mxu0
  %v2286 = vadd.f32 %v2243, %v2285
  %v2287 = vpop.f32.mrf.mxu0
  %v2288 = vadd.f32 %v2245, %v2287
  %v2289 = vpop.f32.mrf.mxu0
  %v2290 = vadd.f32 %v2247, %v2289
  %v2291 = vpop.f32.mrf.mxu0
  %v2292 = vadd.f32 %v2249, %v2291
  %2293 = vdwg.mxu0
  %2294 = vmatprep.subr.bf16.mxu0 %v1323
  %2295 = vmatpush1.bf16.msra.mxu0 %v1322
  %2296 = vmatprep.subr.bf16.mxu0 %v1307
  %2297 = vmatpush1.bf16.msra.mxu0 %v1306
  %2298 = vmatprep.subr.bf16.mxu0 %v1291
  %2299 = vmatpush1.bf16.msra.mxu0 %v1290
  %2300 = vmatprep.subr.bf16.mxu0 %v1275
  %2301 = vmatpush1.bf16.msra.mxu0 %v1274
  %2302 = vmatprep.subr.bf16.mxu0 %v1259
  %2303 = vmatpush1.bf16.msra.mxu0 %v1258
  %2304 = vmatprep.subr.bf16.mxu0 %v1243
  %2305 = vmatpush1.bf16.msra.mxu0 %v1242
  %2306 = vmatprep.subr.bf16.mxu0 %v1227
  %2307 = vmatpush1.bf16.msra.mxu0 %v1226
  %2308 = vmatprep.subr.bf16.mxu0 %v1211
  %2309 = vmatpush1.bf16.msra.mxu0 %v1210
  %2310 = vmatprep.subr.bf16.mxu0 %v1451
  %2311 = vmatpush2.bf16.msra.mxu0 %v1450
  %2312 = vmatprep.subr.bf16.mxu0 %v1435
  %2313 = vmatpush2.bf16.msra.mxu0 %v1434
  %2314 = vmatprep.subr.bf16.mxu0 %v1419
  %2315 = vmatpush2.bf16.msra.mxu0 %v1418
  %2316 = vmatprep.subr.bf16.mxu0 %v1403
  %2317 = vmatpush2.bf16.msra.mxu0 %v1402
  %2318 = vmatprep.subr.bf16.mxu0 %v1387
  %2319 = vmatpush2.bf16.msra.mxu0 %v1386
  %2320 = vmatprep.subr.bf16.mxu0 %v1371
  %2321 = vmatpush2.bf16.msra.mxu0 %v1370
  %2322 = vmatprep.subr.bf16.mxu0 %v1355
  %2323 = vmatpush2.bf16.msra.mxu0 %v1354
  %2324 = vmatprep.subr.bf16.mxu0 %v1339
  %2325 = vmatpush2.bf16.msra.mxu0 %v1338
  %2326 = vmatprep.mubr.bf16.mxu0 %v330
  %2327 = vmatmul.mubr.bf16.gmra.mxu0 %v329
  %v2328 = vpop.f32.mrf.mxu0
  %v2329 = vadd.f32 %v312, %v2328
  %v2330 = vpop.f32.mrf.mxu0
  %v2331 = vadd.f32 %v312, %v2330
  %v2332 = vpop.f32.mrf.mxu0
  %v2333 = vadd.f32 %v317, %v2332
  %v2334 = vpop.f32.mrf.mxu0
  %v2335 = vadd.f32 %v317, %v2334
  %2336 = vdwg.mxu0
  %2337 = vmatprep.subr.bf16.mxu0 0
  %2338 = vmatpush1.bf16.msra.mxu0 0
  %2339 = vmatprep.subr.bf16.mxu0 0
  %2340 = vmatpush1.bf16.msra.mxu0 0
  %2341 = vmatprep.subr.bf16.mxu0 0
  %2342 = vmatpush1.bf16.msra.mxu0 0
  %2343 = vmatprep.subr.bf16.mxu0 0
  %2344 = vmatpush1.bf16.msra.mxu0 0
  %2345 = vmatprep.subr.bf16.mxu0 0
  %2346 = vmatpush1.bf16.msra.mxu0 0
  %2347 = vmatprep.subr.bf16.mxu0 0
  %2348 = vmatpush1.bf16.msra.mxu0 0
  %2349 = vmatprep.subr.bf16.mxu0 %v1483
  %2350 = vmatpush1.bf16.msra.mxu0 %v1482
  %2351 = vmatprep.subr.bf16.mxu0 %v1467
  %2352 = vmatpush1.bf16.msra.mxu0 %v1466
  %2353 = vmatprep.subr.bf16.mxu0 0
  %2354 = vmatpush2.bf16.msra.mxu0 0
  %2355 = vmatprep.subr.bf16.mxu0 0
  %2356 = vmatpush2.bf16.msra.mxu0 0
  %2357 = vmatprep.subr.bf16.mxu0 0
  %2358 = vmatpush2.bf16.msra.mxu0 0
  %2359 = vmatprep.subr.bf16.mxu0 0
  %2360 = vmatpush2.bf16.msra.mxu0 0
  %2361 = vmatprep.subr.bf16.mxu0 0
  %2362 = vmatpush2.bf16.msra.mxu0 0
  %2363 = vmatprep.subr.bf16.mxu0 0
  %2364 = vmatpush2.bf16.msra.mxu0 0
  %2365 = vmatprep.subr.bf16.mxu0 0
  %2366 = vmatpush2.bf16.msra.mxu0 0
  %2367 = vmatprep.subr.bf16.mxu0 0
  %2368 = vmatpush2.bf16.msra.mxu0 0
  %2369 = vmatprep.mubr.bf16.mxu0 0
  %2370 = vmatmul.mubr.bf16.gmra.mxu0 %v1776
  %v2371 = vpop.f32.mrf.mxu0
  %v2372 = vadd.f32 %v2329, %v2371
  %v2373 = vpop.f32.mrf.mxu0
  %v2374 = vadd.f32 %v2331, %v2373
  %v2375 = vpop.f32.mrf.mxu0
  %v2376 = vadd.f32 %v2333, %v2375
  %v2377 = vpop.f32.mrf.mxu0
  %v2378 = vadd.f32 %v2335, %v2377
  %2379 = vdwg.mxu0
  %2380 = vmatprep.subr.bf16.mxu0 %v1325
  %2381 = vmatpush1.bf16.msra.mxu0 %v1324
  %2382 = vmatprep.subr.bf16.mxu0 %v1309
  %2383 = vmatpush1.bf16.msra.mxu0 %v1308
  %2384 = vmatprep.subr.bf16.mxu0 %v1293
  %2385 = vmatpush1.bf16.msra.mxu0 %v1292
  %2386 = vmatprep.subr.bf16.mxu0 %v1277
  %2387 = vmatpush1.bf16.msra.mxu0 %v1276
  %2388 = vmatprep.subr.bf16.mxu0 %v1261
  %2389 = vmatpush1.bf16.msra.mxu0 %v1260
  %2390 = vmatprep.subr.bf16.mxu0 %v1245
  %2391 = vmatpush1.bf16.msra.mxu0 %v1244
  %2392 = vmatprep.subr.bf16.mxu0 %v1229
  %2393 = vmatpush1.bf16.msra.mxu0 %v1228
  %2394 = vmatprep.subr.bf16.mxu0 %v1213
  %2395 = vmatpush1.bf16.msra.mxu0 %v1212
  %2396 = vmatprep.subr.bf16.mxu0 %v1453
  %2397 = vmatpush2.bf16.msra.mxu0 %v1452
  %2398 = vmatprep.subr.bf16.mxu0 %v1437
  %2399 = vmatpush2.bf16.msra.mxu0 %v1436
  %2400 = vmatprep.subr.bf16.mxu0 %v1421
  %2401 = vmatpush2.bf16.msra.mxu0 %v1420
  %2402 = vmatprep.subr.bf16.mxu0 %v1405
  %2403 = vmatpush2.bf16.msra.mxu0 %v1404
  %2404 = vmatprep.subr.bf16.mxu0 %v1389
  %2405 = vmatpush2.bf16.msra.mxu0 %v1388
  %2406 = vmatprep.subr.bf16.mxu0 %v1373
  %2407 = vmatpush2.bf16.msra.mxu0 %v1372
  %2408 = vmatprep.subr.bf16.mxu0 %v1357
  %2409 = vmatpush2.bf16.msra.mxu0 %v1356
  %2410 = vmatprep.subr.bf16.mxu0 %v1341
  %2411 = vmatpush2.bf16.msra.mxu0 %v1340
  %2412 = vmatprep.mubr.bf16.mxu0 %v330
  %2413 = vmatmul.mubr.bf16.gmra.mxu0 %v329
  %v2414 = vpop.f32.mrf.mxu0
  %v2415 = vadd.f32 %v312, %v2414
  %v2416 = vpop.f32.mrf.mxu0
  %v2417 = vadd.f32 %v312, %v2416
  %v2418 = vpop.f32.mrf.mxu0
  %v2419 = vadd.f32 %v317, %v2418
  %v2420 = vpop.f32.mrf.mxu0
  %v2421 = vadd.f32 %v317, %v2420
  %2422 = vdwg.mxu0
  %2423 = vmatprep.subr.bf16.mxu0 0
  %2424 = vmatpush1.bf16.msra.mxu0 0
  %2425 = vmatprep.subr.bf16.mxu0 0
  %2426 = vmatpush1.bf16.msra.mxu0 0
  %2427 = vmatprep.subr.bf16.mxu0 0
  %2428 = vmatpush1.bf16.msra.mxu0 0
  %2429 = vmatprep.subr.bf16.mxu0 0
  %2430 = vmatpush1.bf16.msra.mxu0 0
  %2431 = vmatprep.subr.bf16.mxu0 0
  %2432 = vmatpush1.bf16.msra.mxu0 0
  %2433 = vmatprep.subr.bf16.mxu0 0
  %2434 = vmatpush1.bf16.msra.mxu0 0
  %2435 = vmatprep.subr.bf16.mxu0 %v1485
  %2436 = vmatpush1.bf16.msra.mxu0 %v1484
  %2437 = vmatprep.subr.bf16.mxu0 %v1469
  %2438 = vmatpush1.bf16.msra.mxu0 %v1468
  %2439 = vmatprep.subr.bf16.mxu0 0
  %2440 = vmatpush2.bf16.msra.mxu0 0
  %2441 = vmatprep.subr.bf16.mxu0 0
  %2442 = vmatpush2.bf16.msra.mxu0 0
  %2443 = vmatprep.subr.bf16.mxu0 0
  %2444 = vmatpush2.bf16.msra.mxu0 0
  %2445 = vmatprep.subr.bf16.mxu0 0
  %2446 = vmatpush2.bf16.msra.mxu0 0
  %2447 = vmatprep.subr.bf16.mxu0 0
  %2448 = vmatpush2.bf16.msra.mxu0 0
  %2449 = vmatprep.subr.bf16.mxu0 0
  %2450 = vmatpush2.bf16.msra.mxu0 0
  %2451 = vmatprep.subr.bf16.mxu0 0
  %2452 = vmatpush2.bf16.msra.mxu0 0
  %2453 = vmatprep.subr.bf16.mxu0 0
  %2454 = vmatpush2.bf16.msra.mxu0 0
  %2455 = vmatprep.mubr.bf16.mxu0 0
  %2456 = vmatmul.mubr.bf16.gmra.mxu0 %v1776
  %v2457 = vpop.f32.mrf.mxu0
  %v2458 = vadd.f32 %v2415, %v2457
  %v2459 = vpop.f32.mrf.mxu0
  %v2460 = vadd.f32 %v2417, %v2459
  %v2461 = vpop.f32.mrf.mxu0
  %v2462 = vadd.f32 %v2419, %v2461
  %v2463 = vpop.f32.mrf.mxu0
  %v2464 = vadd.f32 %v2421, %v2463
  %2465 = vdwg.mxu0
  %v2466 = vtanh.pop %v1856
  %v2467 = vtanh.pop %v1858
  %v2468 = vtanh.pop %v1942
  %v2469 = vtanh.pop %v1944
  %v2470 = vtanh.pop %v2028
  %v2471 = vtanh.pop %v2030
  %v2472 = vtanh.pop %v2114
  %v2473 = vtanh.pop %v2116
  %v2474 = vtanh.pop %v2200
  %v2475 = vtanh.pop %v2202
  %v2476 = vtanh.pop %v2286
  %v2477 = vtanh.pop %v2288
  %v2478 = vtanh.pop %v2372
  %v2479 = vtanh.pop %v2374
  %v2480 = vtanh.pop %v2458
  %v2481 = vtanh.pop %v2460
  %v2482 = vtanh.pop %v1860
  %v2483 = vtanh.pop %v1862
  %v2484 = vtanh.pop %v1946
  %v2485 = vtanh.pop %v1948
  %v2486 = vtanh.pop %v2032
  %v2487 = vtanh.pop %v2034
  %v2488 = vtanh.pop %v2118
  %v2489 = vtanh.pop %v2120
  %v2490 = vtanh.pop %v2204
  %v2491 = vtanh.pop %v2206
  %v2492 = vtanh.pop %v2290
  %v2493 = vtanh.pop %v2292
  %v2494 = vtanh.pop %v2376
  %v2495 = vtanh.pop %v2378
  %v2496 = vtanh.pop %v2462
  %v2497 = vtanh.pop %v2464
  %2498 = vst [vmem:[%s3] sm:$0xff] %v2466
  %2499 = vst [vmem:[%s3 + $0x8] sm:$0xff] %v2467
  %2500 = vst [vmem:[%s3 + $0x10] sm:$0xff] %v2468
  %2501 = vst [vmem:[%s3 + $0x18] sm:$0xff] %v2469
  %2502 = vst [vmem:[%s3 + $0x20] sm:$0xff] %v2470
  %2503 = vst [vmem:[%s3 + $0x28] sm:$0xff] %v2471
  %2504 = vst [vmem:[%s3 + $0x30] sm:$0xff] %v2472
  %2505 = vst [vmem:[%s3 + $0x38] sm:$0xff] %v2473
  %2506 = vst [vmem:[%s3 + $0x40] sm:$0xff] %v2474
  %2507 = vst [vmem:[%s3 + $0x48] sm:$0xff] %v2475
  %2508 = vst [vmem:[%s3 + $0x50] sm:$0xff] %v2476
  %2509 = vst [vmem:[%s3 + $0x58] sm:$0xff] %v2477
  %2510 = vst [vmem:[%s3 + $0x60] sm:$0xff] %v2478
  %2511 = vst [vmem:[%s3 + $0x68] sm:$0xff] %v2479
  %2512 = vst [vmem:[%s3 + $0x70] sm:$0xff] %v2480
  %2513 = vst [vmem:[%s3 + $0x78] sm:$0xff] %v2481
  %2514 = vst [vmem:[%s3 + $0x80] sm:$0xf] %v2482
  %2515 = vst [vmem:[%s3 + $0x88] sm:$0xf] %v2483
  %2516 = vst [vmem:[%s3 + $0x90] sm:$0xf] %v2484
  %2517 = vst [vmem:[%s3 + $0x98] sm:$0xf] %v2485
  %2518 = vst [vmem:[%s3 + $0xa0] sm:$0xf] %v2486
  %2519 = vst [vmem:[%s3 + $0xa8] sm:$0xf] %v2487
  %2520 = vst [vmem:[%s3 + $0xb0] sm:$0xf] %v2488
  %2521 = vst [vmem:[%s3 + $0xb8] sm:$0xf] %v2489
  %2522 = vst [vmem:[%s3 + $0xc0] sm:$0xf] %v2490
  %2523 = vst [vmem:[%s3 + $0xc8] sm:$0xf] %v2491
  %2524 = vst [vmem:[%s3 + $0xd0] sm:$0xf] %v2492
  %2525 = vst [vmem:[%s3 + $0xd8] sm:$0xf] %v2493
  %2526 = vst [vmem:[%s3 + $0xe0] sm:$0xf] %v2494
  %2527 = vst [vmem:[%s3 + $0xe8] sm:$0xf] %v2495
  %2528 = vst [vmem:[%s3 + $0xf0] sm:$0xf] %v2496
  %2529 = vst [vmem:[%s3 + $0xf8] sm:$0xf] %v2497
  // Predicated region
  $region14: #{_lambda_.9} parent=0 // pred_check
    _
  $region15: #{_lambda_.9} parent=0 // pred_check_branch
    %2531 = sbr.rel (0) target = $region17
  $region16: #{_lambda_.9} parent=0 // pred_region
    _
  $region17: #{_lambda_.9} parent=0 // pred_fallthru
    _
  // Predicated region
  $region18: #{_lambda_.9} parent=0 // pred_check
    _
  $region19: #{_lambda_.9} parent=0 // pred_check_branch
    %2533 = sbr.rel (0) target = $region21
  $region20: #{_lambda_.9} parent=0 // pred_region
    _
  $region21: #{_lambda_.9} parent=0 // pred_fallthru
    _

</llo_original>
